<compile_context>
chip_gen: v6e
topology: v6e:2x2x1
jax: 0.10.0
libtpu: 0.0.40
codegen_flags: <defaults>
</compile_context>

<pallas_src>
import functools
import math

import jax
import jax.numpy as jnp
from jax.experimental import pallas as pl
from jax.experimental.pallas import tpu as pltpu

NEG_INF = -1e9
LN_EPS = 1e-5
_N_VEC = 15  # rows in the packed f32 bias/LN blob (see pack_params)


# ----------------------------------------------------------------------------
# Fused whole-encoder kernel: grid=(num_layers,), one step = one layer,
# whole batch resident in VMEM.
# ----------------------------------------------------------------------------
def _encoder_kernel(src_ref, pos_ref, prm_ref, ppos_ref, ibias_ref, pbias_ref,
                    attn_w_ref, vec_ref, w1_ref, b1_ref, w2_ref,
                    out_ref, x_scr,
                    *, n_heads, batch, s_src, s_prm):
    layer = pl.program_id(0)

    @pl.when(layer == 0)
    def _():
        x_scr[...] = src_ref[...]          # initialize the residual stream

    x = x_scr[...]                         # (B*Ss, D) f32 residual stream
    pos = pos_ref[...]                     # (B*Ss, D)
    prm = prm_ref[...]                     # (B*Sp, D)
    ppos = ppos_ref[...]                   # (B*Sp, D)
    vecs = vec_ref[...]                    # (15, D) f32: biases + LN params

    d_model = x.shape[-1]
    dh = d_model // n_heads
    scale = 1.0 / math.sqrt(dh)

    def vrow(i):                            # (1, D) f32 row of the bias/LN blob
        return vecs[i:i + 1, :]

    def layernorm(y, g, b):
        mu = jnp.mean(y, axis=-1, keepdims=True)
        var = jnp.mean(jnp.square(y - mu), axis=-1, keepdims=True)
        return (y - mu) * jax.lax.rsqrt(var + LN_EPS) * g + b

    def mha(q_in, k_in, v_in, bias_ref, w_off, b_off, sq, sk):
        """Multi-head attention over the whole folded batch.

        q_in: (B*sq, D), k_in/v_in: (B*sk, D) f32.  bias_ref[b] is a (1, sk)
        additive key-padding bias.  Weight rows w_off..w_off+3 of attn_w_ref are
        (in, out) bf16 Wq/Wk/Wv/Wo; bias rows b_off..b_off+3 of the vec blob.
        """
        wq, wk, wv, wo = (attn_w_ref[w_off + j] for j in range(4))   # (D, D) bf16
        bq, bk, bv, bo = (vrow(b_off + j) for j in range(4))         # (1, D) f32

        # projections over the whole batch at once: bf16 operands, f32 MXU acc
        q = jnp.dot(q_in.astype(jnp.bfloat16), wq,
                    preferred_element_type=jnp.float32) + bq
        k = jnp.dot(k_in.astype(jnp.bfloat16), wk,
                    preferred_element_type=jnp.float32) + bk
        v = jnp.dot(v_in.astype(jnp.bfloat16), wv,
                    preferred_element_type=jnp.float32) + bv
        qh = (q * scale).astype(jnp.bfloat16)
        kh = k.astype(jnp.bfloat16)
        vh = v.astype(jnp.bfloat16)

        ctx_parts = []
        for b in range(batch):                    # static unroll (B is tiny)
            qb = qh[b * sq:(b + 1) * sq, :]       # 8-aligned sublane slices
            kb = kh[b * sk:(b + 1) * sk, :]
            vb = vh[b * sk:(b + 1) * sk, :]
            bias = bias_ref[b]                    # (1, sk) key-padding bias
            heads = []
            for h in range(n_heads):              # static unroll
                sl = slice(h * dh, (h + 1) * dh)
                s = jax.lax.dot_general(           # q_h @ k_h^T  (sq, sk)
                    qb[:, sl], kb[:, sl], (((1,), (1,)), ((), ())),
                    preferred_element_type=jnp.float32)
                s = s + bias
                s = s - jnp.max(s, axis=-1, keepdims=True)
                e = jnp.exp(s)
                p = e / jnp.sum(e, axis=-1, keepdims=True)   # exact softmax
                heads.append(jnp.dot(p.astype(jnp.bfloat16), vb[:, sl],
                                     preferred_element_type=jnp.float32))
            ctx_parts.append(jnp.concatenate(heads, axis=-1))   # (sq, D)
        ctx = jnp.concatenate(ctx_parts, axis=0)                # (B*sq, D)
        # single full-width output projection (no per-head wo slices)
        return jnp.dot(ctx.astype(jnp.bfloat16), wo,
                       preferred_element_type=jnp.float32) + bo

    # ---- self-attention (q = k = x + pos, v = x) + residual + LayerNorm ----
    qk = x + pos
    sa = mha(qk, qk, x, ibias_ref, 0, 0, s_src, s_src)
    x = layernorm(x + sa, vrow(8), vrow(9))

    # ---- cross-attention to prompt tokens + residual + LayerNorm ----
    ca = mha(x + pos, prm + ppos, prm, pbias_ref, 4, 4, s_src, s_prm)
    x = layernorm(x + ca, vrow(10), vrow(11))

    # ---- FFN (Linear -> ReLU -> Linear) + residual + LayerNorm ----
    h = jnp.dot(x.astype(jnp.bfloat16), w1_ref[...],
                preferred_element_type=jnp.float32) + b1_ref[...]
    h = jnp.maximum(h, 0.0)
    ff = jnp.dot(h.astype(jnp.bfloat16), w2_ref[...],
                 preferred_element_type=jnp.float32) + vrow(14)
    x = layernorm(x + ff, vrow(12), vrow(13))

    x_scr[...] = x        # carry residual stream to the next layer (VMEM)
    out_ref[...] = x      # final grid step's value is what lands in HBM


# ----------------------------------------------------------------------------
# Wrapper: one pallas_call for the whole encoder
# ----------------------------------------------------------------------------
def global_encoder_forward(src, src_pos_embed, prompt, prompt_mask, prompt_pos,
                           packed, n_heads, img_mask=None):
    B, Ss, D = src.shape
    Sp = prompt.shape[1]
    L = packed['attn_w'].shape[0]
    Dff = packed['w1'].shape[-1]
    n_tok, n_prm = B * Ss, B * Sp

    # fold batch into the sublane axis: (B, S, D) -> (B*S, D)
    src_f = src.reshape(n_tok, D).astype(jnp.float32)
    pos_f = src_pos_embed.reshape(n_tok, D).astype(jnp.float32)
    prm_f = prompt.reshape(n_prm, D).astype(jnp.float32)
    ppos_f = prompt_pos.reshape(n_prm, D).astype(jnp.float32)

    if img_mask is None:
        ibias = jnp.zeros((B, 1, Ss), jnp.float32)
    else:
        ibias = img_mask.astype(jnp.float32).reshape(B, 1, Ss) * NEG_INF
    pbias = prompt_mask.astype(jnp.float32).reshape(B, 1, Sp) * NEG_INF

    def tok_spec(n):
        return pl.BlockSpec((n, D), lambda l: (0, 0))       # fetched once

    out = pl.pallas_call(
        functools.partial(_encoder_kernel, n_heads=n_heads, batch=B,
                          s_src=Ss, s_prm=Sp),
        out_shape=jax.ShapeDtypeStruct((n_tok, D), jnp.float32),
        grid=(L,),
        in_specs=[
            tok_spec(n_tok), tok_spec(n_tok), tok_spec(n_prm), tok_spec(n_prm),
            pl.BlockSpec((B, 1, Ss), lambda l: (0, 0, 0)),
            pl.BlockSpec((B, 1, Sp), lambda l: (0, 0, 0)),
            # per-layer weight blobs, streamed / prefetched along the layer axis
            pl.BlockSpec((None, 8, D, D), lambda l: (l, 0, 0, 0)),
            pl.BlockSpec((None, _N_VEC, D), lambda l: (l, 0, 0)),
            pl.BlockSpec((None, D, Dff), lambda l: (l, 0, 0)),
            pl.BlockSpec((None, 1, Dff), lambda l: (l, 0, 0)),
            pl.BlockSpec((None, Dff, D), lambda l: (l, 0, 0)),
        ],
        out_specs=pl.BlockSpec((n_tok, D), lambda l: (0, 0)),
        scratch_shapes=[pltpu.VMEM((n_tok, D), jnp.float32)],   # residual stream
        compiler_params=pltpu.CompilerParams(
            dimension_semantics=("arbitrary",),                 # layers are sequential
            vmem_limit_bytes=32 * 1024 * 1024),
    )(src_f, pos_f, prm_f, ppos_f, ibias, pbias,
      packed['attn_w'], packed['vec'], packed['w1'], packed['b1'], packed['w2'])

    return out.reshape(B, Ss, D)


# ----------------------------------------------------------------------------
# Deterministic parameter init (PyTorch layout) + one-time packing
# ----------------------------------------------------------------------------
def _trunc_normal(key, shape, std=0.02):
    return (std * jax.random.truncated_normal(key, -2.0, 2.0, shape)).astype(jnp.float32)


def init_layer_params(key, d_model, dim_ff):
    """PyTorch-layout params: Linear weight (out, in) f32, bias 0, LN w=1 / b=0."""
    k_sa, k_ca, k_f1, k_f2 = jax.random.split(key, 4)

    def attn(k):
        kq, kk, kv, ko = jax.random.split(k, 4)
        z = jnp.zeros((d_model,), jnp.float32)
        return {'wq': _trunc_normal(kq, (d_model, d_model)), 'bq': z,
                'wk': _trunc_normal(kk, (d_model, d_model)), 'bk': z,
                'wv': _trunc_normal(kv, (d_model, d_model)), 'bv': z,
                'wo': _trunc_normal(ko, (d_model, d_model)), 'bo': z}

    def ln():
        return {'g': jnp.ones((d_model,), jnp.float32),
                'b': jnp.zeros((d_model,), jnp.float32)}

    return {'sa': attn(k_sa), 'ca': attn(k_ca),
            'ln1': ln(), 'ln2': ln(), 'ln3': ln(),
            'ffn': {'w1': _trunc_normal(k_f1, (dim_ff, d_model)),
                    'b1': jnp.zeros((dim_ff,), jnp.float32),
                    'w2': _trunc_normal(k_f2, (d_model, dim_ff)),
                    'b2': jnp.zeros((d_model,), jnp.float32)}}


def pack_params(raw_layers):
    """Stack per-layer weights with a leading layer axis, packed into 5 blobs.

    attn_w (L,8,D,D) bf16: [sa_wq,sa_wk,sa_wv,sa_wo, ca_wq,ca_wk,ca_wv,ca_wo],
        each pre-transposed once to (in, out).
    vec (L,15,D) f32 rows: sa b_{q,k,v,o}(0-3), ca b_{q,k,v,o}(4-7),
        ln1_g/b(8,9), ln2_g/b(10,11), ln3_g/b(12,13), ffn_b2(14).
    w1 (L,D,Dff) bf16; b1 (L,1,Dff) f32; w2 (L,Dff,D) bf16.
    """
    attn_w, vec, w1, b1, w2 = [], [], [], [], []
    for raw in raw_layers:
        sa, ca, f = raw['sa'], raw['ca'], raw['ffn']
        attn_w.append(jnp.stack(
            [sa['wq'].T, sa['wk'].T, sa['wv'].T, sa['wo'].T,
             ca['wq'].T, ca['wk'].T, ca['wv'].T, ca['wo'].T], 0).astype(jnp.bfloat16))
        vec.append(jnp.stack(
            [sa['bq'], sa['bk'], sa['bv'], sa['bo'],
             ca['bq'], ca['bk'], ca['bv'], ca['bo'],
             raw['ln1']['g'], raw['ln1']['b'],
             raw['ln2']['g'], raw['ln2']['b'],
             raw['ln3']['g'], raw['ln3']['b'],
             f['b2']], 0).astype(jnp.float32))
        w1.append(f['w1'].T.astype(jnp.bfloat16))
        b1.append(f['b1'].reshape(1, -1).astype(jnp.float32))
        w2.append(f['w2'].T.astype(jnp.bfloat16))
    return {'attn_w': jnp.stack(attn_w), 'vec': jnp.stack(vec),
            'w1': jnp.stack(w1), 'b1': jnp.stack(b1), 'w2': jnp.stack(w2)}


# ----------------------------------------------------------------------------
# Pure-JAX reference (mirrors the kernel math) for a correctness check
# ----------------------------------------------------------------------------
def reference_forward(src, pos, prompt, prompt_mask, prompt_pos, packed, n_heads,
                      img_mask=None):
    B, Ss, D = src.shape
    Sp = prompt.shape[1]
    L = packed['attn_w'].shape[0]
    dh = D // n_heads
    scale = 1.0 / math.sqrt(dh)

    if img_mask is None:
        ibias = jnp.zeros((B, 1, 1, Ss), jnp.float32)
    else:
        ibias = img_mask.astype(jnp.float32).reshape(B, 1, 1, Ss) * NEG_INF
    pbias = prompt_mask.astype(jnp.float32).reshape(B, 1, 1, Sp) * NEG_INF

    def dot(a, w):
        return jnp.dot(a.astype(jnp.bfloat16), w, preferred_element_type=jnp.float32)

    def ln(y, g, b):
        mu = jnp.mean(y, axis=-1, keepdims=True)
        var = jnp.mean(jnp.square(y - mu), axis=-1, keepdims=True)
        return (y - mu) * jax.lax.rsqrt(var + LN_EPS) * g + b

    def split_heads(t):
        b, s, _ = t.shape
        return t.reshape(b, s, n_heads, dh).transpose(0, 2, 1, 3)

    def mha(q_in, k_in, v_in, bias, wq, bq, wk, bk, wv, bv, wo, bo):
        q = dot(q_in, wq) + bq
        k = dot(k_in, wk) + bk
        v = dot(v_in, wv) + bv
        qh = split_heads(q * scale).astype(jnp.bfloat16)
        kh = split_heads(k).astype(jnp.bfloat16)
        vh = split_heads(v).astype(jnp.bfloat16)
        s = jnp.einsum('bhqd,bhkd->bhqk', qh, kh, preferred_element_type=jnp.float32)
        s = s + bias
        s = s - jnp.max(s, axis=-1, keepdims=True)
        e = jnp.exp(s)
        p = e / jnp.sum(e, axis=-1, keepdims=True)
        ctx = jnp.einsum('bhqk,bhkd->bhqd', p.astype(jnp.bfloat16), vh,
                         preferred_element_type=jnp.float32)
        ctx = ctx.transpose(0, 2, 1, 3).reshape(q_in.shape[0], q_in.shape[1], D)
        return dot(ctx, wo) + bo

    x = src.astype(jnp.float32)
    for l in range(L):
        W = packed['attn_w'][l]
        V = packed['vec'][l]
        vrow = lambda i: V[i].reshape(1, 1, D)
        qk = x + pos
        sa = mha(qk, qk, x, ibias,
                 W[0], vrow(0), W[1], vrow(1), W[2], vrow(2), W[3], vrow(3))
        x = ln(x + sa, vrow(8), vrow(9))
        ca = mha(x + pos, prompt + prompt_pos, prompt, pbias,
                 W[4], vrow(4), W[5], vrow(5), W[6], vrow(6), W[7], vrow(7))
        x = ln(x + ca, vrow(10), vrow(11))
        h = jnp.maximum(dot(x, packed['w1'][l]) + packed['b1'][l], 0.0)
        ff = dot(h, packed['w2'][l]) + vrow(14)
        x = ln(x + ff, vrow(12), vrow(13))
    return x


# ----------------------------------------------------------------------------
if __name__ == "__main__":
    B, Ss, Sp = 2, 16, 8          # batch, src tokens (e.g. 4x4 feature map), prompt tokens
    D, H, Dff, L = 32, 4, 64, 2   # d_model, n_heads, ffn dim, num_layers

    key = jax.random.PRNGKey(0)
    k_in, k_par = jax.random.split(key)
    ks = jax.random.split(k_in, 4)
    src = jax.random.normal(ks[0], (B, Ss, D), jnp.float32)
    src_pos_embed = jax.random.normal(ks[1], (B, Ss, D), jnp.float32)
    prompt = jax.random.normal(ks[2], (B, Sp, D), jnp.float32)
    prompt_pos = jax.random.normal(ks[3], (B, Sp, D), jnp.float32)
    # key padding mask: True = ignore that prompt token (last 2 tokens of batch 1)
    prompt_mask = jnp.zeros((B, Sp), jnp.bool_).at[1, -2:].set(True)

    raw_layers = [init_layer_params(k, D, Dff) for k in jax.random.split(k_par, L)]
    packed = pack_params(raw_layers)

    fwd = jax.jit(functools.partial(global_encoder_forward, n_heads=H))
    out = jax.block_until_ready(fwd(src, src_pos_embed, prompt, prompt_mask,
                                    prompt_pos, packed))

    ref = reference_forward(src, src_pos_embed, prompt, prompt_mask, prompt_pos,
                            packed, H)
    assert out.shape == (B, Ss, D)
    assert bool(jnp.all(jnp.isfinite(out)))
    max_err = float(jnp.max(jnp.abs(out - ref)))
    assert max_err < 2e-2, f"mismatch vs reference: {max_err}"
    print("KERNEL_OK")
</pallas_src>

<mosaic_0001>
module attributes {stable_mosaic.version = 11 : i64} {
  func.func @_encoder_kernel(%arg0: i32, %arg1: memref<32x32xf32, #tpu.memory_space<vmem>>, %arg2: memref<32x32xf32, #tpu.memory_space<vmem>>, %arg3: memref<16x32xf32, #tpu.memory_space<vmem>>, %arg4: memref<16x32xf32, #tpu.memory_space<vmem>>, %arg5: memref<2x1x16xf32, #tpu.memory_space<vmem>>, %arg6: memref<2x1x8xf32, #tpu.memory_space<vmem>>, %arg7: memref<1x8x32x32xbf16, #tpu.memory_space<vmem>>, %arg8: memref<1x15x32xf32, #tpu.memory_space<vmem>>, %arg9: memref<1x32x64xbf16, #tpu.memory_space<vmem>>, %arg10: memref<1x1x64xf32, #tpu.memory_space<vmem>>, %arg11: memref<1x64x32xbf16, #tpu.memory_space<vmem>>, %arg12: memref<32x32xf32, #tpu.memory_space<vmem>>, %arg13: memref<32x32xf32, #tpu.memory_space<vmem>>) attributes {dimension_semantics = [#tpu.dimension_semantics<arbitrary>], iteration_bounds = array<i64: 2>, scalar_prefetch = 0 : i64, scratch_operands = 1 : i64, tpu.core_type = #tpu.core_type<tc>, window_params = [{pipeline_mode = #tpu.pipeline_mode<synchronous>, transform_indices = @transform_0, window_bounds = array<i64: 32, 32>}, {pipeline_mode = #tpu.pipeline_mode<synchronous>, transform_indices = @transform_1, window_bounds = array<i64: 32, 32>}, {pipeline_mode = #tpu.pipeline_mode<synchronous>, transform_indices = @transform_2, window_bounds = array<i64: 16, 32>}, {pipeline_mode = #tpu.pipeline_mode<synchronous>, transform_indices = @transform_3, window_bounds = array<i64: 16, 32>}, {pipeline_mode = #tpu.pipeline_mode<synchronous>, transform_indices = @transform_4, window_bounds = array<i64: 2, 1, 16>}, {pipeline_mode = #tpu.pipeline_mode<synchronous>, transform_indices = @transform_5, window_bounds = array<i64: 2, 1, 8>}, {transform_indices = @transform_6, window_bounds = array<i64: 1, 8, 32, 32>}, {transform_indices = @transform_7, window_bounds = array<i64: 1, 15, 32>}, {transform_indices = @transform_8, window_bounds = array<i64: 1, 32, 64>}, {transform_indices = @transform_9, window_bounds = array<i64: 1, 1, 64>}, {transform_indices = @transform_10, window_bounds = array<i64: 1, 64, 32>}, {pipeline_mode = #tpu.pipeline_mode<synchronous>, transform_indices = @transform_11, window_bounds = array<i64: 32, 32>}]} {
    %c0_i32 = arith.constant 0 : i32
    %0 = arith.cmpi eq, %arg0, %c0_i32 : i32
    %1 = arith.extui %0 : i1 to i32
    %c0_i32_0 = arith.constant 0 : i32
    %2 = arith.cmpi ne, %1, %c0_i32_0 : i32
    scf.if %2 {
      %c0_152 = arith.constant 0 : index
      %c0_153 = arith.constant 0 : index
      %470 = vector.load %arg1[%c0_152, %c0_153] : memref<32x32xf32, #tpu.memory_space<vmem>>, vector<32x32xf32>
      %c0_154 = arith.constant 0 : index
      %c0_155 = arith.constant 0 : index
      %471 = vector.load %arg13[%c0_154, %c0_155] : memref<32x32xf32, #tpu.memory_space<vmem>>, vector<32x32xf32>
      tpu.vector_store %arg13[%c0_154, %c0_155], %470 {strides = array<i32>} : memref<32x32xf32, #tpu.memory_space<vmem>>, vector<32x32xf32>,
    } else {
    }
    %c0 = arith.constant 0 : index
    %c0_1 = arith.constant 0 : index
    %3 = vector.load %arg13[%c0, %c0_1] : memref<32x32xf32, #tpu.memory_space<vmem>>, vector<32x32xf32>
    %c0_2 = arith.constant 0 : index
    %c0_3 = arith.constant 0 : index
    %4 = vector.load %arg2[%c0_2, %c0_3] : memref<32x32xf32, #tpu.memory_space<vmem>>, vector<32x32xf32>
    %c0_4 = arith.constant 0 : index
    %c0_5 = arith.constant 0 : index
    %5 = vector.load %arg3[%c0_4, %c0_5] : memref<16x32xf32, #tpu.memory_space<vmem>>, vector<16x32xf32>
    %c0_6 = arith.constant 0 : index
    %c0_7 = arith.constant 0 : index
    %6 = vector.load %arg4[%c0_6, %c0_7] : memref<16x32xf32, #tpu.memory_space<vmem>>, vector<16x32xf32>
    %c0_8 = arith.constant 0 : index
    %c0_9 = arith.constant 0 : index
    %c0_10 = arith.constant 0 : index
    %7 = vector.load %arg8[%c0_8, %c0_9, %c0_10] : memref<1x15x32xf32, #tpu.memory_space<vmem>>, vector<1x15x32xf32>
    %8 = vector.shape_cast %7 : vector<1x15x32xf32> to vector<15x32xf32>
    %9 = arith.addf %3, %4 : vector<32x32xf32>
    %c0_11 = arith.constant 0 : index
    %c0_12 = arith.constant 0 : index
    %c0_13 = arith.constant 0 : index
    %c0_14 = arith.constant 0 : index
    %10 = vector.load %arg7[%c0_11, %c0_12, %c0_13, %c0_14] : memref<1x8x32x32xbf16, #tpu.memory_space<vmem>>, vector<1x1x32x32xbf16>
    %11 = vector.shape_cast %10 : vector<1x1x32x32xbf16> to vector<32x32xbf16>
    %c0_15 = arith.constant 0 : index
    %c1 = arith.constant 1 : index
    %c0_16 = arith.constant 0 : index
    %c0_17 = arith.constant 0 : index
    %12 = vector.load %arg7[%c0_15, %c1, %c0_16, %c0_17] : memref<1x8x32x32xbf16, #tpu.memory_space<vmem>>, vector<1x1x32x32xbf16>
    %13 = vector.shape_cast %12 : vector<1x1x32x32xbf16> to vector<32x32xbf16>
    %c0_18 = arith.constant 0 : index
    %c2 = arith.constant 2 : index
    %c0_19 = arith.constant 0 : index
    %c0_20 = arith.constant 0 : index
    %14 = vector.load %arg7[%c0_18, %c2, %c0_19, %c0_20] : memref<1x8x32x32xbf16, #tpu.memory_space<vmem>>, vector<1x1x32x32xbf16>
    %15 = vector.shape_cast %14 : vector<1x1x32x32xbf16> to vector<32x32xbf16>
    %c0_21 = arith.constant 0 : index
    %c3 = arith.constant 3 : index
    %c0_22 = arith.constant 0 : index
    %c0_23 = arith.constant 0 : index
    %16 = vector.load %arg7[%c0_21, %c3, %c0_22, %c0_23] : memref<1x8x32x32xbf16, #tpu.memory_space<vmem>>, vector<1x1x32x32xbf16>
    %17 = vector.shape_cast %16 : vector<1x1x32x32xbf16> to vector<32x32xbf16>
    %18 = vector.extract_strided_slice %8 {offsets = [0, 0], sizes = [1, 32], strides = [1, 1]} : vector<15x32xf32> to vector<1x32xf32>
    %19 = vector.extract_strided_slice %8 {offsets = [1, 0], sizes = [1, 32], strides = [1, 1]} : vector<15x32xf32> to vector<1x32xf32>
    %20 = vector.extract_strided_slice %8 {offsets = [2, 0], sizes = [1, 32], strides = [1, 1]} : vector<15x32xf32> to vector<1x32xf32>
    %21 = vector.extract_strided_slice %8 {offsets = [3, 0], sizes = [1, 32], strides = [1, 1]} : vector<15x32xf32> to vector<1x32xf32>
    %22 = arith.truncf %9 : vector<32x32xf32> to vector<32x32xbf16>
    %cst = arith.constant dense<0.000000e+00> : vector<32x32xf32>
    %23 = tpu.matmul %22, %11, %cst {dimension_numbers = #tpu.dot_dimension_numbers<[1], [0], [0], [1], [0, 0, 1, 1], [], []>} : vector<32x32xbf16>, vector<32x32xbf16>, vector<32x32xf32> -> vector<32x32xf32>
    %24 = vector.broadcast %18 : vector<1x32xf32> to vector<32x32xf32>
    %25 = arith.addf %23, %24 : vector<32x32xf32>
    %26 = arith.truncf %9 : vector<32x32xf32> to vector<32x32xbf16>
    %cst_24 = arith.constant dense<0.000000e+00> : vector<32x32xf32>
    %27 = tpu.matmul %26, %13, %cst_24 {dimension_numbers = #tpu.dot_dimension_numbers<[1], [0], [0], [1], [0, 0, 1, 1], [], []>} : vector<32x32xbf16>, vector<32x32xbf16>, vector<32x32xf32> -> vector<32x32xf32>
    %28 = vector.broadcast %19 : vector<1x32xf32> to vector<32x32xf32>
    %29 = arith.addf %27, %28 : vector<32x32xf32>
    %30 = arith.truncf %3 : vector<32x32xf32> to vector<32x32xbf16>
    %cst_25 = arith.constant dense<0.000000e+00> : vector<32x32xf32>
    %31 = tpu.matmul %30, %15, %cst_25 {dimension_numbers = #tpu.dot_dimension_numbers<[1], [0], [0], [1], [0, 0, 1, 1], [], []>} : vector<32x32xbf16>, vector<32x32xbf16>, vector<32x32xf32> -> vector<32x32xf32>
    %32 = vector.broadcast %20 : vector<1x32xf32> to vector<32x32xf32>
    %33 = arith.addf %31, %32 : vector<32x32xf32>
    %cst_26 = arith.constant 0.353553385 : f32
    %34 = vector.broadcast %cst_26 : f32 to vector<32x32xf32>
    %35 = arith.mulf %25, %34 : vector<32x32xf32>
    %36 = arith.truncf %35 : vector<32x32xf32> to vector<32x32xbf16>
    %37 = arith.truncf %29 : vector<32x32xf32> to vector<32x32xbf16>
    %38 = arith.truncf %33 : vector<32x32xf32> to vector<32x32xbf16>
    %39 = vector.extract_strided_slice %36 {offsets = [0, 0], sizes = [16, 32], strides = [1, 1]} : vector<32x32xbf16> to vector<16x32xbf16>
    %40 = vector.extract_strided_slice %37 {offsets = [0, 0], sizes = [16, 32], strides = [1, 1]} : vector<32x32xbf16> to vector<16x32xbf16>
    %41 = vector.extract_strided_slice %38 {offsets = [0, 0], sizes = [16, 32], strides = [1, 1]} : vector<32x32xbf16> to vector<16x32xbf16>
    %c0_27 = arith.constant 0 : index
    %c0_28 = arith.constant 0 : index
    %c0_29 = arith.constant 0 : index
    %42 = vector.load %arg5[%c0_27, %c0_28, %c0_29] : memref<2x1x16xf32, #tpu.memory_space<vmem>>, vector<1x1x16xf32>
    %43 = vector.shape_cast %42 : vector<1x1x16xf32> to vector<1x16xf32>
    %44 = vector.extract_strided_slice %39 {offsets = [0, 0], sizes = [16, 8], strides = [1, 1]} : vector<16x32xbf16> to vector<16x8xbf16>
    %45 = vector.extract_strided_slice %40 {offsets = [0, 0], sizes = [16, 8], strides = [1, 1]} : vector<16x32xbf16> to vector<16x8xbf16>
    %cst_30 = arith.constant dense<0.000000e+00> : vector<16x16xf32>
    %46 = tpu.matmul %44, %45, %cst_30 {dimension_numbers = #tpu.dot_dimension_numbers<[1], [1], [0], [0], [0, 0, 1, 0], [], []>} : vector<16x8xbf16>, vector<16x8xbf16>, vector<16x16xf32> -> vector<16x16xf32>
    %47 = vector.broadcast %43 : vector<1x16xf32> to vector<16x16xf32>
    %48 = arith.addf %46, %47 : vector<16x16xf32>
    %cst_31 = arith.constant dense<0xFF800000> : vector<16xf32>
    %49 = vector.multi_reduction <maximumf>, %48, %cst_31 [1] : vector<16x16xf32> to vector<16xf32>
    %50 = vector.shape_cast %49 : vector<16xf32> to vector<16x1xf32>
    %51 = vector.broadcast %50 : vector<16x1xf32> to vector<16x16xf32>
    %52 = arith.subf %48, %51 : vector<16x16xf32>
    %53 = math.exp %52 : vector<16x16xf32>
    %cst_32 = arith.constant dense<0.000000e+00> : vector<16xf32>
    %54 = vector.multi_reduction <add>, %53, %cst_32 [1] : vector<16x16xf32> to vector<16xf32>
    %55 = vector.shape_cast %54 : vector<16xf32> to vector<16x1xf32>
    %56 = vector.broadcast %55 : vector<16x1xf32> to vector<16x16xf32>
    %57 = arith.divf %53, %56 : vector<16x16xf32>
    %58 = arith.truncf %57 : vector<16x16xf32> to vector<16x16xbf16>
    %59 = vector.extract_strided_slice %41 {offsets = [0, 0], sizes = [16, 8], strides = [1, 1]} : vector<16x32xbf16> to vector<16x8xbf16>
    %cst_33 = arith.constant dense<0.000000e+00> : vector<16x8xf32>
    %60 = tpu.matmul %58, %59, %cst_33 {dimension_numbers = #tpu.dot_dimension_numbers<[1], [0], [0], [1], [0, 0, 1, 1], [], []>} : vector<16x16xbf16>, vector<16x8xbf16>, vector<16x8xf32> -> vector<16x8xf32>
    %61 = vector.extract_strided_slice %39 {offsets = [0, 8], sizes = [16, 8], strides = [1, 1]} : vector<16x32xbf16> to vector<16x8xbf16>
    %62 = vector.extract_strided_slice %40 {offsets = [0, 8], sizes = [16, 8], strides = [1, 1]} : vector<16x32xbf16> to vector<16x8xbf16>
    %cst_34 = arith.constant dense<0.000000e+00> : vector<16x16xf32>
    %63 = tpu.matmul %61, %62, %cst_34 {dimension_numbers = #tpu.dot_dimension_numbers<[1], [1], [0], [0], [0, 0, 1, 0], [], []>} : vector<16x8xbf16>, vector<16x8xbf16>, vector<16x16xf32> -> vector<16x16xf32>
    %64 = vector.broadcast %43 : vector<1x16xf32> to vector<16x16xf32>
    %65 = arith.addf %63, %64 : vector<16x16xf32>
    %cst_35 = arith.constant dense<0xFF800000> : vector<16xf32>
    %66 = vector.multi_reduction <maximumf>, %65, %cst_35 [1] : vector<16x16xf32> to vector<16xf32>
    %67 = vector.shape_cast %66 : vector<16xf32> to vector<16x1xf32>
    %68 = vector.broadcast %67 : vector<16x1xf32> to vector<16x16xf32>
    %69 = arith.subf %65, %68 : vector<16x16xf32>
    %70 = math.exp %69 : vector<16x16xf32>
    %cst_36 = arith.constant dense<0.000000e+00> : vector<16xf32>
    %71 = vector.multi_reduction <add>, %70, %cst_36 [1] : vector<16x16xf32> to vector<16xf32>
    %72 = vector.shape_cast %71 : vector<16xf32> to vector<16x1xf32>
    %73 = vector.broadcast %72 : vector<16x1xf32> to vector<16x16xf32>
    %74 = arith.divf %70, %73 : vector<16x16xf32>
    %75 = arith.truncf %74 : vector<16x16xf32> to vector<16x16xbf16>
    %76 = vector.extract_strided_slice %41 {offsets = [0, 8], sizes = [16, 8], strides = [1, 1]} : vector<16x32xbf16> to vector<16x8xbf16>
    %cst_37 = arith.constant dense<0.000000e+00> : vector<16x8xf32>
    %77 = tpu.matmul %75, %76, %cst_37 {dimension_numbers = #tpu.dot_dimension_numbers<[1], [0], [0], [1], [0, 0, 1, 1], [], []>} : vector<16x16xbf16>, vector<16x8xbf16>, vector<16x8xf32> -> vector<16x8xf32>
    %78 = vector.extract_strided_slice %39 {offsets = [0, 16], sizes = [16, 8], strides = [1, 1]} : vector<16x32xbf16> to vector<16x8xbf16>
    %79 = vector.extract_strided_slice %40 {offsets = [0, 16], sizes = [16, 8], strides = [1, 1]} : vector<16x32xbf16> to vector<16x8xbf16>
    %cst_38 = arith.constant dense<0.000000e+00> : vector<16x16xf32>
    %80 = tpu.matmul %78, %79, %cst_38 {dimension_numbers = #tpu.dot_dimension_numbers<[1], [1], [0], [0], [0, 0, 1, 0], [], []>} : vector<16x8xbf16>, vector<16x8xbf16>, vector<16x16xf32> -> vector<16x16xf32>
    %81 = vector.broadcast %43 : vector<1x16xf32> to vector<16x16xf32>
    %82 = arith.addf %80, %81 : vector<16x16xf32>
    %cst_39 = arith.constant dense<0xFF800000> : vector<16xf32>
    %83 = vector.multi_reduction <maximumf>, %82, %cst_39 [1] : vector<16x16xf32> to vector<16xf32>
    %84 = vector.shape_cast %83 : vector<16xf32> to vector<16x1xf32>
    %85 = vector.broadcast %84 : vector<16x1xf32> to vector<16x16xf32>
    %86 = arith.subf %82, %85 : vector<16x16xf32>
    %87 = math.exp %86 : vector<16x16xf32>
    %cst_40 = arith.constant dense<0.000000e+00> : vector<16xf32>
    %88 = vector.multi_reduction <add>, %87, %cst_40 [1] : vector<16x16xf32> to vector<16xf32>
    %89 = vector.shape_cast %88 : vector<16xf32> to vector<16x1xf32>
    %90 = vector.broadcast %89 : vector<16x1xf32> to vector<16x16xf32>
    %91 = arith.divf %87, %90 : vector<16x16xf32>
    %92 = arith.truncf %91 : vector<16x16xf32> to vector<16x16xbf16>
    %93 = vector.extract_strided_slice %41 {offsets = [0, 16], sizes = [16, 8], strides = [1, 1]} : vector<16x32xbf16> to vector<16x8xbf16>
    %cst_41 = arith.constant dense<0.000000e+00> : vector<16x8xf32>
    %94 = tpu.matmul %92, %93, %cst_41 {dimension_numbers = #tpu.dot_dimension_numbers<[1], [0], [0], [1], [0, 0, 1, 1], [], []>} : vector<16x16xbf16>, vector<16x8xbf16>, vector<16x8xf32> -> vector<16x8xf32>
    %95 = vector.extract_strided_slice %39 {offsets = [0, 24], sizes = [16, 8], strides = [1, 1]} : vector<16x32xbf16> to vector<16x8xbf16>
    %96 = vector.extract_strided_slice %40 {offsets = [0, 24], sizes = [16, 8], strides = [1, 1]} : vector<16x32xbf16> to vector<16x8xbf16>
    %cst_42 = arith.constant dense<0.000000e+00> : vector<16x16xf32>
    %97 = tpu.matmul %95, %96, %cst_42 {dimension_numbers = #tpu.dot_dimension_numbers<[1], [1], [0], [0], [0, 0, 1, 0], [], []>} : vector<16x8xbf16>, vector<16x8xbf16>, vector<16x16xf32> -> vector<16x16xf32>
    %98 = vector.broadcast %43 : vector<1x16xf32> to vector<16x16xf32>
    %99 = arith.addf %97, %98 : vector<16x16xf32>
    %cst_43 = arith.constant dense<0xFF800000> : vector<16xf32>
    %100 = vector.multi_reduction <maximumf>, %99, %cst_43 [1] : vector<16x16xf32> to vector<16xf32>
    %101 = vector.shape_cast %100 : vector<16xf32> to vector<16x1xf32>
    %102 = vector.broadcast %101 : vector<16x1xf32> to vector<16x16xf32>
    %103 = arith.subf %99, %102 : vector<16x16xf32>
    %104 = math.exp %103 : vector<16x16xf32>
    %cst_44 = arith.constant dense<0.000000e+00> : vector<16xf32>
    %105 = vector.multi_reduction <add>, %104, %cst_44 [1] : vector<16x16xf32> to vector<16xf32>
    %106 = vector.shape_cast %105 : vector<16xf32> to vector<16x1xf32>
    %107 = vector.broadcast %106 : vector<16x1xf32> to vector<16x16xf32>
    %108 = arith.divf %104, %107 : vector<16x16xf32>
    %109 = arith.truncf %108 : vector<16x16xf32> to vector<16x16xbf16>
    %110 = vector.extract_strided_slice %41 {offsets = [0, 24], sizes = [16, 8], strides = [1, 1]} : vector<16x32xbf16> to vector<16x8xbf16>
    %cst_45 = arith.constant dense<0.000000e+00> : vector<16x8xf32>
    %111 = tpu.matmul %109, %110, %cst_45 {dimension_numbers = #tpu.dot_dimension_numbers<[1], [0], [0], [1], [0, 0, 1, 1], [], []>} : vector<16x16xbf16>, vector<16x8xbf16>, vector<16x8xf32> -> vector<16x8xf32>
    %112 = tpu.concatenate %60, %77, %94, %111 in 1 : vector<16x8xf32>, vector<16x8xf32>, vector<16x8xf32>, vector<16x8xf32> -> vector<16x32xf32>
    %113 = vector.extract_strided_slice %36 {offsets = [16, 0], sizes = [16, 32], strides = [1, 1]} : vector<32x32xbf16> to vector<16x32xbf16>
    %114 = vector.extract_strided_slice %37 {offsets = [16, 0], sizes = [16, 32], strides = [1, 1]} : vector<32x32xbf16> to vector<16x32xbf16>
    %115 = vector.extract_strided_slice %38 {offsets = [16, 0], sizes = [16, 32], strides = [1, 1]} : vector<32x32xbf16> to vector<16x32xbf16>
    %c1_46 = arith.constant 1 : index
    %c0_47 = arith.constant 0 : index
    %c0_48 = arith.constant 0 : index
    %116 = vector.load %arg5[%c1_46, %c0_47, %c0_48] : memref<2x1x16xf32, #tpu.memory_space<vmem>>, vector<1x1x16xf32>
    %117 = vector.shape_cast %116 : vector<1x1x16xf32> to vector<1x16xf32>
    %118 = vector.extract_strided_slice %113 {offsets = [0, 0], sizes = [16, 8], strides = [1, 1]} : vector<16x32xbf16> to vector<16x8xbf16>
    %119 = vector.extract_strided_slice %114 {offsets = [0, 0], sizes = [16, 8], strides = [1, 1]} : vector<16x32xbf16> to vector<16x8xbf16>
    %cst_49 = arith.constant dense<0.000000e+00> : vector<16x16xf32>
    %120 = tpu.matmul %118, %119, %cst_49 {dimension_numbers = #tpu.dot_dimension_numbers<[1], [1], [0], [0], [0, 0, 1, 0], [], []>} : vector<16x8xbf16>, vector<16x8xbf16>, vector<16x16xf32> -> vector<16x16xf32>
    %121 = vector.broadcast %117 : vector<1x16xf32> to vector<16x16xf32>
    %122 = arith.addf %120, %121 : vector<16x16xf32>
    %cst_50 = arith.constant dense<0xFF800000> : vector<16xf32>
    %123 = vector.multi_reduction <maximumf>, %122, %cst_50 [1] : vector<16x16xf32> to vector<16xf32>
    %124 = vector.shape_cast %123 : vector<16xf32> to vector<16x1xf32>
    %125 = vector.broadcast %124 : vector<16x1xf32> to vector<16x16xf32>
    %126 = arith.subf %122, %125 : vector<16x16xf32>
    %127 = math.exp %126 : vector<16x16xf32>
    %cst_51 = arith.constant dense<0.000000e+00> : vector<16xf32>
    %128 = vector.multi_reduction <add>, %127, %cst_51 [1] : vector<16x16xf32> to vector<16xf32>
    %129 = vector.shape_cast %128 : vector<16xf32> to vector<16x1xf32>
    %130 = vector.broadcast %129 : vector<16x1xf32> to vector<16x16xf32>
    %131 = arith.divf %127, %130 : vector<16x16xf32>
    %132 = arith.truncf %131 : vector<16x16xf32> to vector<16x16xbf16>
    %133 = vector.extract_strided_slice %115 {offsets = [0, 0], sizes = [16, 8], strides = [1, 1]} : vector<16x32xbf16> to vector<16x8xbf16>
    %cst_52 = arith.constant dense<0.000000e+00> : vector<16x8xf32>
    %134 = tpu.matmul %132, %133, %cst_52 {dimension_numbers = #tpu.dot_dimension_numbers<[1], [0], [0], [1], [0, 0, 1, 1], [], []>} : vector<16x16xbf16>, vector<16x8xbf16>, vector<16x8xf32> -> vector<16x8xf32>
    %135 = vector.extract_strided_slice %113 {offsets = [0, 8], sizes = [16, 8], strides = [1, 1]} : vector<16x32xbf16> to vector<16x8xbf16>
    %136 = vector.extract_strided_slice %114 {offsets = [0, 8], sizes = [16, 8], strides = [1, 1]} : vector<16x32xbf16> to vector<16x8xbf16>
    %cst_53 = arith.constant dense<0.000000e+00> : vector<16x16xf32>
    %137 = tpu.matmul %135, %136, %cst_53 {dimension_numbers = #tpu.dot_dimension_numbers<[1], [1], [0], [0], [0, 0, 1, 0], [], []>} : vector<16x8xbf16>, vector<16x8xbf16>, vector<16x16xf32> -> vector<16x16xf32>
    %138 = vector.broadcast %117 : vector<1x16xf32> to vector<16x16xf32>
    %139 = arith.addf %137, %138 : vector<16x16xf32>
    %cst_54 = arith.constant dense<0xFF800000> : vector<16xf32>
    %140 = vector.multi_reduction <maximumf>, %139, %cst_54 [1] : vector<16x16xf32> to vector<16xf32>
    %141 = vector.shape_cast %140 : vector<16xf32> to vector<16x1xf32>
    %142 = vector.broadcast %141 : vector<16x1xf32> to vector<16x16xf32>
    %143 = arith.subf %139, %142 : vector<16x16xf32>
    %144 = math.exp %143 : vector<16x16xf32>
    %cst_55 = arith.constant dense<0.000000e+00> : vector<16xf32>
    %145 = vector.multi_reduction <add>, %144, %cst_55 [1] : vector<16x16xf32> to vector<16xf32>
    %146 = vector.shape_cast %145 : vector<16xf32> to vector<16x1xf32>
    %147 = vector.broadcast %146 : vector<16x1xf32> to vector<16x16xf32>
    %148 = arith.divf %144, %147 : vector<16x16xf32>
    %149 = arith.truncf %148 : vector<16x16xf32> to vector<16x16xbf16>
    %150 = vector.extract_strided_slice %115 {offsets = [0, 8], sizes = [16, 8], strides = [1, 1]} : vector<16x32xbf16> to vector<16x8xbf16>
    %cst_56 = arith.constant dense<0.000000e+00> : vector<16x8xf32>
    %151 = tpu.matmul %149, %150, %cst_56 {dimension_numbers = #tpu.dot_dimension_numbers<[1], [0], [0], [1], [0, 0, 1, 1], [], []>} : vector<16x16xbf16>, vector<16x8xbf16>, vector<16x8xf32> -> vector<16x8xf32>
    %152 = vector.extract_strided_slice %113 {offsets = [0, 16], sizes = [16, 8], strides = [1, 1]} : vector<16x32xbf16> to vector<16x8xbf16>
    %153 = vector.extract_strided_slice %114 {offsets = [0, 16], sizes = [16, 8], strides = [1, 1]} : vector<16x32xbf16> to vector<16x8xbf16>
    %cst_57 = arith.constant dense<0.000000e+00> : vector<16x16xf32>
    %154 = tpu.matmul %152, %153, %cst_57 {dimension_numbers = #tpu.dot_dimension_numbers<[1], [1], [0], [0], [0, 0, 1, 0], [], []>} : vector<16x8xbf16>, vector<16x8xbf16>, vector<16x16xf32> -> vector<16x16xf32>
    %155 = vector.broadcast %117 : vector<1x16xf32> to vector<16x16xf32>
    %156 = arith.addf %154, %155 : vector<16x16xf32>
    %cst_58 = arith.constant dense<0xFF800000> : vector<16xf32>
    %157 = vector.multi_reduction <maximumf>, %156, %cst_58 [1] : vector<16x16xf32> to vector<16xf32>
    %158 = vector.shape_cast %157 : vector<16xf32> to vector<16x1xf32>
    %159 = vector.broadcast %158 : vector<16x1xf32> to vector<16x16xf32>
    %160 = arith.subf %156, %159 : vector<16x16xf32>
    %161 = math.exp %160 : vector<16x16xf32>
    %cst_59 = arith.constant dense<0.000000e+00> : vector<16xf32>
    %162 = vector.multi_reduction <add>, %161, %cst_59 [1] : vector<16x16xf32> to vector<16xf32>
    %163 = vector.shape_cast %162 : vector<16xf32> to vector<16x1xf32>
    %164 = vector.broadcast %163 : vector<16x1xf32> to vector<16x16xf32>
    %165 = arith.divf %161, %164 : vector<16x16xf32>
    %166 = arith.truncf %165 : vector<16x16xf32> to vector<16x16xbf16>
    %167 = vector.extract_strided_slice %115 {offsets = [0, 16], sizes = [16, 8], strides = [1, 1]} : vector<16x32xbf16> to vector<16x8xbf16>
    %cst_60 = arith.constant dense<0.000000e+00> : vector<16x8xf32>
    %168 = tpu.matmul %166, %167, %cst_60 {dimension_numbers = #tpu.dot_dimension_numbers<[1], [0], [0], [1], [0, 0, 1, 1], [], []>} : vector<16x16xbf16>, vector<16x8xbf16>, vector<16x8xf32> -> vector<16x8xf32>
    %169 = vector.extract_strided_slice %113 {offsets = [0, 24], sizes = [16, 8], strides = [1, 1]} : vector<16x32xbf16> to vector<16x8xbf16>
    %170 = vector.extract_strided_slice %114 {offsets = [0, 24], sizes = [16, 8], strides = [1, 1]} : vector<16x32xbf16> to vector<16x8xbf16>
    %cst_61 = arith.constant dense<0.000000e+00> : vector<16x16xf32>
    %171 = tpu.matmul %169, %170, %cst_61 {dimension_numbers = #tpu.dot_dimension_numbers<[1], [1], [0], [0], [0, 0, 1, 0], [], []>} : vector<16x8xbf16>, vector<16x8xbf16>, vector<16x16xf32> -> vector<16x16xf32>
    %172 = vector.broadcast %117 : vector<1x16xf32> to vector<16x16xf32>
    %173 = arith.addf %171, %172 : vector<16x16xf32>
    %cst_62 = arith.constant dense<0xFF800000> : vector<16xf32>
    %174 = vector.multi_reduction <maximumf>, %173, %cst_62 [1] : vector<16x16xf32> to vector<16xf32>
    %175 = vector.shape_cast %174 : vector<16xf32> to vector<16x1xf32>
    %176 = vector.broadcast %175 : vector<16x1xf32> to vector<16x16xf32>
    %177 = arith.subf %173, %176 : vector<16x16xf32>
    %178 = math.exp %177 : vector<16x16xf32>
    %cst_63 = arith.constant dense<0.000000e+00> : vector<16xf32>
    %179 = vector.multi_reduction <add>, %178, %cst_63 [1] : vector<16x16xf32> to vector<16xf32>
    %180 = vector.shape_cast %179 : vector<16xf32> to vector<16x1xf32>
    %181 = vector.broadcast %180 : vector<16x1xf32> to vector<16x16xf32>
    %182 = arith.divf %178, %181 : vector<16x16xf32>
    %183 = arith.truncf %182 : vector<16x16xf32> to vector<16x16xbf16>
    %184 = vector.extract_strided_slice %115 {offsets = [0, 24], sizes = [16, 8], strides = [1, 1]} : vector<16x32xbf16> to vector<16x8xbf16>
    %cst_64 = arith.constant dense<0.000000e+00> : vector<16x8xf32>
    %185 = tpu.matmul %183, %184, %cst_64 {dimension_numbers = #tpu.dot_dimension_numbers<[1], [0], [0], [1], [0, 0, 1, 1], [], []>} : vector<16x16xbf16>, vector<16x8xbf16>, vector<16x8xf32> -> vector<16x8xf32>
    %186 = tpu.concatenate %134, %151, %168, %185 in 1 : vector<16x8xf32>, vector<16x8xf32>, vector<16x8xf32>, vector<16x8xf32> -> vector<16x32xf32>
    %187 = tpu.concatenate %112, %186 in 0 : vector<16x32xf32>, vector<16x32xf32> -> vector<32x32xf32>
    %188 = arith.truncf %187 : vector<32x32xf32> to vector<32x32xbf16>
    %cst_65 = arith.constant dense<0.000000e+00> : vector<32x32xf32>
    %189 = tpu.matmul %188, %17, %cst_65 {dimension_numbers = #tpu.dot_dimension_numbers<[1], [0], [0], [1], [0, 0, 1, 1], [], []>} : vector<32x32xbf16>, vector<32x32xbf16>, vector<32x32xf32> -> vector<32x32xf32>
    %190 = vector.broadcast %21 : vector<1x32xf32> to vector<32x32xf32>
    %191 = arith.addf %189, %190 : vector<32x32xf32>
    %192 = arith.addf %3, %191 : vector<32x32xf32>
    %193 = vector.extract_strided_slice %8 {offsets = [8, 0], sizes = [1, 32], strides = [1, 1]} : vector<15x32xf32> to vector<1x32xf32>
    %194 = vector.extract_strided_slice %8 {offsets = [9, 0], sizes = [1, 32], strides = [1, 1]} : vector<15x32xf32> to vector<1x32xf32>
    %cst_66 = arith.constant dense<0.000000e+00> : vector<32xf32>
    %195 = vector.multi_reduction <add>, %192, %cst_66 [1] : vector<32x32xf32> to vector<32xf32>
    %196 = vector.shape_cast %195 : vector<32xf32> to vector<32x1xf32>
    %cst_67 = arith.constant 3.200000e+01 : f32
    %197 = vector.broadcast %cst_67 : f32 to vector<32x1xf32>
    %198 = arith.divf %196, %197 : vector<32x1xf32>
    %199 = vector.broadcast %198 : vector<32x1xf32> to vector<32x32xf32>
    %200 = arith.subf %192, %199 : vector<32x32xf32>
    %201 = arith.mulf %200, %200 : vector<32x32xf32>
    %cst_68 = arith.constant dense<0.000000e+00> : vector<32xf32>
    %202 = vector.multi_reduction <add>, %201, %cst_68 [1] : vector<32x32xf32> to vector<32xf32>
    %203 = vector.shape_cast %202 : vector<32xf32> to vector<32x1xf32>
    %cst_69 = arith.constant 3.200000e+01 : f32
    %204 = vector.broadcast %cst_69 : f32 to vector<32x1xf32>
    %205 = arith.divf %203, %204 : vector<32x1xf32>
    %206 = vector.broadcast %198 : vector<32x1xf32> to vector<32x32xf32>
    %207 = arith.subf %192, %206 : vector<32x32xf32>
    %cst_70 = arith.constant 9.99999974E-6 : f32
    %208 = vector.broadcast %cst_70 : f32 to vector<32x1xf32>
    %209 = arith.addf %205, %208 : vector<32x1xf32>
    %210 = math.rsqrt %209 : vector<32x1xf32>
    %211 = vector.broadcast %210 : vector<32x1xf32> to vector<32x32xf32>
    %212 = arith.mulf %207, %211 : vector<32x32xf32>
    %213 = vector.broadcast %193 : vector<1x32xf32> to vector<32x32xf32>
    %214 = arith.mulf %212, %213 : vector<32x32xf32>
    %215 = vector.broadcast %194 : vector<1x32xf32> to vector<32x32xf32>
    %216 = arith.addf %214, %215 : vector<32x32xf32>
    %217 = arith.addf %216, %4 : vector<32x32xf32>
    %218 = arith.addf %5, %6 : vector<16x32xf32>
    %c0_71 = arith.constant 0 : index
    %c4 = arith.constant 4 : index
    %c0_72 = arith.constant 0 : index
    %c0_73 = arith.constant 0 : index
    %219 = vector.load %arg7[%c0_71, %c4, %c0_72, %c0_73] : memref<1x8x32x32xbf16, #tpu.memory_space<vmem>>, vector<1x1x32x32xbf16>
    %220 = vector.shape_cast %219 : vector<1x1x32x32xbf16> to vector<32x32xbf16>
    %c0_74 = arith.constant 0 : index
    %c5 = arith.constant 5 : index
    %c0_75 = arith.constant 0 : index
    %c0_76 = arith.constant 0 : index
    %221 = vector.load %arg7[%c0_74, %c5, %c0_75, %c0_76] : memref<1x8x32x32xbf16, #tpu.memory_space<vmem>>, vector<1x1x32x32xbf16>
    %222 = vector.shape_cast %221 : vector<1x1x32x32xbf16> to vector<32x32xbf16>
    %c0_77 = arith.constant 0 : index
    %c6 = arith.constant 6 : index
    %c0_78 = arith.constant 0 : index
    %c0_79 = arith.constant 0 : index
    %223 = vector.load %arg7[%c0_77, %c6, %c0_78, %c0_79] : memref<1x8x32x32xbf16, #tpu.memory_space<vmem>>, vector<1x1x32x32xbf16>
    %224 = vector.shape_cast %223 : vector<1x1x32x32xbf16> to vector<32x32xbf16>
    %c0_80 = arith.constant 0 : index
    %c7 = arith.constant 7 : index
    %c0_81 = arith.constant 0 : index
    %c0_82 = arith.constant 0 : index
    %225 = vector.load %arg7[%c0_80, %c7, %c0_81, %c0_82] : memref<1x8x32x32xbf16, #tpu.memory_space<vmem>>, vector<1x1x32x32xbf16>
    %226 = vector.shape_cast %225 : vector<1x1x32x32xbf16> to vector<32x32xbf16>
    %227 = vector.extract_strided_slice %8 {offsets = [4, 0], sizes = [1, 32], strides = [1, 1]} : vector<15x32xf32> to vector<1x32xf32>
    %228 = vector.extract_strided_slice %8 {offsets = [5, 0], sizes = [1, 32], strides = [1, 1]} : vector<15x32xf32> to vector<1x32xf32>
    %229 = vector.extract_strided_slice %8 {offsets = [6, 0], sizes = [1, 32], strides = [1, 1]} : vector<15x32xf32> to vector<1x32xf32>
    %230 = vector.extract_strided_slice %8 {offsets = [7, 0], sizes = [1, 32], strides = [1, 1]} : vector<15x32xf32> to vector<1x32xf32>
    %231 = arith.truncf %217 : vector<32x32xf32> to vector<32x32xbf16>
    %cst_83 = arith.constant dense<0.000000e+00> : vector<32x32xf32>
    %232 = tpu.matmul %231, %220, %cst_83 {dimension_numbers = #tpu.dot_dimension_numbers<[1], [0], [0], [1], [0, 0, 1, 1], [], []>} : vector<32x32xbf16>, vector<32x32xbf16>, vector<32x32xf32> -> vector<32x32xf32>
    %233 = vector.broadcast %227 : vector<1x32xf32> to vector<32x32xf32>
    %234 = arith.addf %232, %233 : vector<32x32xf32>
    %235 = arith.truncf %218 : vector<16x32xf32> to vector<16x32xbf16>
    %cst_84 = arith.constant dense<0.000000e+00> : vector<16x32xf32>
    %236 = tpu.matmul %235, %222, %cst_84 {dimension_numbers = #tpu.dot_dimension_numbers<[1], [0], [0], [1], [0, 0, 1, 1], [], []>} : vector<16x32xbf16>, vector<32x32xbf16>, vector<16x32xf32> -> vector<16x32xf32>
    %237 = vector.broadcast %228 : vector<1x32xf32> to vector<16x32xf32>
    %238 = arith.addf %236, %237 : vector<16x32xf32>
    %239 = arith.truncf %5 : vector<16x32xf32> to vector<16x32xbf16>
    %cst_85 = arith.constant dense<0.000000e+00> : vector<16x32xf32>
    %240 = tpu.matmul %239, %224, %cst_85 {dimension_numbers = #tpu.dot_dimension_numbers<[1], [0], [0], [1], [0, 0, 1, 1], [], []>} : vector<16x32xbf16>, vector<32x32xbf16>, vector<16x32xf32> -> vector<16x32xf32>
    %241 = vector.broadcast %229 : vector<1x32xf32> to vector<16x32xf32>
    %242 = arith.addf %240, %241 : vector<16x32xf32>
    %cst_86 = arith.constant 0.353553385 : f32
    %243 = vector.broadcast %cst_86 : f32 to vector<32x32xf32>
    %244 = arith.mulf %234, %243 : vector<32x32xf32>
    %245 = arith.truncf %244 : vector<32x32xf32> to vector<32x32xbf16>
    %246 = arith.truncf %238 : vector<16x32xf32> to vector<16x32xbf16>
    %247 = arith.truncf %242 : vector<16x32xf32> to vector<16x32xbf16>
    %248 = vector.extract_strided_slice %245 {offsets = [0, 0], sizes = [16, 32], strides = [1, 1]} : vector<32x32xbf16> to vector<16x32xbf16>
    %249 = vector.extract_strided_slice %246 {offsets = [0, 0], sizes = [8, 32], strides = [1, 1]} : vector<16x32xbf16> to vector<8x32xbf16>
    %250 = vector.extract_strided_slice %247 {offsets = [0, 0], sizes = [8, 32], strides = [1, 1]} : vector<16x32xbf16> to vector<8x32xbf16>
    %c0_87 = arith.constant 0 : index
    %c0_88 = arith.constant 0 : index
    %c0_89 = arith.constant 0 : index
    %251 = vector.load %arg6[%c0_87, %c0_88, %c0_89] : memref<2x1x8xf32, #tpu.memory_space<vmem>>, vector<1x1x8xf32>
    %252 = vector.shape_cast %251 : vector<1x1x8xf32> to vector<1x8xf32>
    %253 = vector.extract_strided_slice %248 {offsets = [0, 0], sizes = [16, 8], strides = [1, 1]} : vector<16x32xbf16> to vector<16x8xbf16>
    %254 = vector.extract_strided_slice %249 {offsets = [0, 0], sizes = [8, 8], strides = [1, 1]} : vector<8x32xbf16> to vector<8x8xbf16>
    %cst_90 = arith.constant dense<0.000000e+00> : vector<16x8xf32>
    %255 = tpu.matmul %253, %254, %cst_90 {dimension_numbers = #tpu.dot_dimension_numbers<[1], [1], [0], [0], [0, 0, 1, 0], [], []>} : vector<16x8xbf16>, vector<8x8xbf16>, vector<16x8xf32> -> vector<16x8xf32>
    %256 = vector.broadcast %252 : vector<1x8xf32> to vector<16x8xf32>
    %257 = arith.addf %255, %256 : vector<16x8xf32>
    %cst_91 = arith.constant dense<0xFF800000> : vector<16xf32>
    %258 = vector.multi_reduction <maximumf>, %257, %cst_91 [1] : vector<16x8xf32> to vector<16xf32>
    %259 = vector.shape_cast %258 : vector<16xf32> to vector<16x1xf32>
    %260 = vector.broadcast %259 : vector<16x1xf32> to vector<16x8xf32>
    %261 = arith.subf %257, %260 : vector<16x8xf32>
    %262 = math.exp %261 : vector<16x8xf32>
    %cst_92 = arith.constant dense<0.000000e+00> : vector<16xf32>
    %263 = vector.multi_reduction <add>, %262, %cst_92 [1] : vector<16x8xf32> to vector<16xf32>
    %264 = vector.shape_cast %263 : vector<16xf32> to vector<16x1xf32>
    %265 = vector.broadcast %264 : vector<16x1xf32> to vector<16x8xf32>
    %266 = arith.divf %262, %265 : vector<16x8xf32>
    %267 = arith.truncf %266 : vector<16x8xf32> to vector<16x8xbf16>
    %268 = vector.extract_strided_slice %250 {offsets = [0, 0], sizes = [8, 8], strides = [1, 1]} : vector<8x32xbf16> to vector<8x8xbf16>
    %cst_93 = arith.constant dense<0.000000e+00> : vector<16x8xf32>
    %269 = tpu.matmul %267, %268, %cst_93 {dimension_numbers = #tpu.dot_dimension_numbers<[1], [0], [0], [1], [0, 0, 1, 1], [], []>} : vector<16x8xbf16>, vector<8x8xbf16>, vector<16x8xf32> -> vector<16x8xf32>
    %270 = vector.extract_strided_slice %248 {offsets = [0, 8], sizes = [16, 8], strides = [1, 1]} : vector<16x32xbf16> to vector<16x8xbf16>
    %271 = vector.extract_strided_slice %249 {offsets = [0, 8], sizes = [8, 8], strides = [1, 1]} : vector<8x32xbf16> to vector<8x8xbf16>
    %cst_94 = arith.constant dense<0.000000e+00> : vector<16x8xf32>
    %272 = tpu.matmul %270, %271, %cst_94 {dimension_numbers = #tpu.dot_dimension_numbers<[1], [1], [0], [0], [0, 0, 1, 0], [], []>} : vector<16x8xbf16>, vector<8x8xbf16>, vector<16x8xf32> -> vector<16x8xf32>
    %273 = vector.broadcast %252 : vector<1x8xf32> to vector<16x8xf32>
    %274 = arith.addf %272, %273 : vector<16x8xf32>
    %cst_95 = arith.constant dense<0xFF800000> : vector<16xf32>
    %275 = vector.multi_reduction <maximumf>, %274, %cst_95 [1] : vector<16x8xf32> to vector<16xf32>
    %276 = vector.shape_cast %275 : vector<16xf32> to vector<16x1xf32>
    %277 = vector.broadcast %276 : vector<16x1xf32> to vector<16x8xf32>
    %278 = arith.subf %274, %277 : vector<16x8xf32>
    %279 = math.exp %278 : vector<16x8xf32>
    %cst_96 = arith.constant dense<0.000000e+00> : vector<16xf32>
    %280 = vector.multi_reduction <add>, %279, %cst_96 [1] : vector<16x8xf32> to vector<16xf32>
    %281 = vector.shape_cast %280 : vector<16xf32> to vector<16x1xf32>
    %282 = vector.broadcast %281 : vector<16x1xf32> to vector<16x8xf32>
    %283 = arith.divf %279, %282 : vector<16x8xf32>
    %284 = arith.truncf %283 : vector<16x8xf32> to vector<16x8xbf16>
    %285 = vector.extract_strided_slice %250 {offsets = [0, 8], sizes = [8, 8], strides = [1, 1]} : vector<8x32xbf16> to vector<8x8xbf16>
    %cst_97 = arith.constant dense<0.000000e+00> : vector<16x8xf32>
    %286 = tpu.matmul %284, %285, %cst_97 {dimension_numbers = #tpu.dot_dimension_numbers<[1], [0], [0], [1], [0, 0, 1, 1], [], []>} : vector<16x8xbf16>, vector<8x8xbf16>, vector<16x8xf32> -> vector<16x8xf32>
    %287 = vector.extract_strided_slice %248 {offsets = [0, 16], sizes = [16, 8], strides = [1, 1]} : vector<16x32xbf16> to vector<16x8xbf16>
    %288 = vector.extract_strided_slice %249 {offsets = [0, 16], sizes = [8, 8], strides = [1, 1]} : vector<8x32xbf16> to vector<8x8xbf16>
    %cst_98 = arith.constant dense<0.000000e+00> : vector<16x8xf32>
    %289 = tpu.matmul %287, %288, %cst_98 {dimension_numbers = #tpu.dot_dimension_numbers<[1], [1], [0], [0], [0, 0, 1, 0], [], []>} : vector<16x8xbf16>, vector<8x8xbf16>, vector<16x8xf32> -> vector<16x8xf32>
    %290 = vector.broadcast %252 : vector<1x8xf32> to vector<16x8xf32>
    %291 = arith.addf %289, %290 : vector<16x8xf32>
    %cst_99 = arith.constant dense<0xFF800000> : vector<16xf32>
    %292 = vector.multi_reduction <maximumf>, %291, %cst_99 [1] : vector<16x8xf32> to vector<16xf32>
    %293 = vector.shape_cast %292 : vector<16xf32> to vector<16x1xf32>
    %294 = vector.broadcast %293 : vector<16x1xf32> to vector<16x8xf32>
    %295 = arith.subf %291, %294 : vector<16x8xf32>
    %296 = math.exp %295 : vector<16x8xf32>
    %cst_100 = arith.constant dense<0.000000e+00> : vector<16xf32>
    %297 = vector.multi_reduction <add>, %296, %cst_100 [1] : vector<16x8xf32> to vector<16xf32>
    %298 = vector.shape_cast %297 : vector<16xf32> to vector<16x1xf32>
    %299 = vector.broadcast %298 : vector<16x1xf32> to vector<16x8xf32>
    %300 = arith.divf %296, %299 : vector<16x8xf32>
    %301 = arith.truncf %300 : vector<16x8xf32> to vector<16x8xbf16>
    %302 = vector.extract_strided_slice %250 {offsets = [0, 16], sizes = [8, 8], strides = [1, 1]} : vector<8x32xbf16> to vector<8x8xbf16>
    %cst_101 = arith.constant dense<0.000000e+00> : vector<16x8xf32>
    %303 = tpu.matmul %301, %302, %cst_101 {dimension_numbers = #tpu.dot_dimension_numbers<[1], [0], [0], [1], [0, 0, 1, 1], [], []>} : vector<16x8xbf16>, vector<8x8xbf16>, vector<16x8xf32> -> vector<16x8xf32>
    %304 = vector.extract_strided_slice %248 {offsets = [0, 24], sizes = [16, 8], strides = [1, 1]} : vector<16x32xbf16> to vector<16x8xbf16>
    %305 = vector.extract_strided_slice %249 {offsets = [0, 24], sizes = [8, 8], strides = [1, 1]} : vector<8x32xbf16> to vector<8x8xbf16>
    %cst_102 = arith.constant dense<0.000000e+00> : vector<16x8xf32>
    %306 = tpu.matmul %304, %305, %cst_102 {dimension_numbers = #tpu.dot_dimension_numbers<[1], [1], [0], [0], [0, 0, 1, 0], [], []>} : vector<16x8xbf16>, vector<8x8xbf16>, vector<16x8xf32> -> vector<16x8xf32>
    %307 = vector.broadcast %252 : vector<1x8xf32> to vector<16x8xf32>
    %308 = arith.addf %306, %307 : vector<16x8xf32>
    %cst_103 = arith.constant dense<0xFF800000> : vector<16xf32>
    %309 = vector.multi_reduction <maximumf>, %308, %cst_103 [1] : vector<16x8xf32> to vector<16xf32>
    %310 = vector.shape_cast %309 : vector<16xf32> to vector<16x1xf32>
    %311 = vector.broadcast %310 : vector<16x1xf32> to vector<16x8xf32>
    %312 = arith.subf %308, %311 : vector<16x8xf32>
    %313 = math.exp %312 : vector<16x8xf32>
    %cst_104 = arith.constant dense<0.000000e+00> : vector<16xf32>
    %314 = vector.multi_reduction <add>, %313, %cst_104 [1] : vector<16x8xf32> to vector<16xf32>
    %315 = vector.shape_cast %314 : vector<16xf32> to vector<16x1xf32>
    %316 = vector.broadcast %315 : vector<16x1xf32> to vector<16x8xf32>
    %317 = arith.divf %313, %316 : vector<16x8xf32>
    %318 = arith.truncf %317 : vector<16x8xf32> to vector<16x8xbf16>
    %319 = vector.extract_strided_slice %250 {offsets = [0, 24], sizes = [8, 8], strides = [1, 1]} : vector<8x32xbf16> to vector<8x8xbf16>
    %cst_105 = arith.constant dense<0.000000e+00> : vector<16x8xf32>
    %320 = tpu.matmul %318, %319, %cst_105 {dimension_numbers = #tpu.dot_dimension_numbers<[1], [0], [0], [1], [0, 0, 1, 1], [], []>} : vector<16x8xbf16>, vector<8x8xbf16>, vector<16x8xf32> -> vector<16x8xf32>
    %321 = tpu.concatenate %269, %286, %303, %320 in 1 : vector<16x8xf32>, vector<16x8xf32>, vector<16x8xf32>, vector<16x8xf32> -> vector<16x32xf32>
    %322 = vector.extract_strided_slice %245 {offsets = [16, 0], sizes = [16, 32], strides = [1, 1]} : vector<32x32xbf16> to vector<16x32xbf16>
    %323 = vector.extract_strided_slice %246 {offsets = [8, 0], sizes = [8, 32], strides = [1, 1]} : vector<16x32xbf16> to vector<8x32xbf16>
    %324 = vector.extract_strided_slice %247 {offsets = [8, 0], sizes = [8, 32], strides = [1, 1]} : vector<16x32xbf16> to vector<8x32xbf16>
    %c1_106 = arith.constant 1 : index
    %c0_107 = arith.constant 0 : index
    %c0_108 = arith.constant 0 : index
    %325 = vector.load %arg6[%c1_106, %c0_107, %c0_108] : memref<2x1x8xf32, #tpu.memory_space<vmem>>, vector<1x1x8xf32>
    %326 = vector.shape_cast %325 : vector<1x1x8xf32> to vector<1x8xf32>
    %327 = vector.extract_strided_slice %322 {offsets = [0, 0], sizes = [16, 8], strides = [1, 1]} : vector<16x32xbf16> to vector<16x8xbf16>
    %328 = vector.extract_strided_slice %323 {offsets = [0, 0], sizes = [8, 8], strides = [1, 1]} : vector<8x32xbf16> to vector<8x8xbf16>
    %cst_109 = arith.constant dense<0.000000e+00> : vector<16x8xf32>
    %329 = tpu.matmul %327, %328, %cst_109 {dimension_numbers = #tpu.dot_dimension_numbers<[1], [1], [0], [0], [0, 0, 1, 0], [], []>} : vector<16x8xbf16>, vector<8x8xbf16>, vector<16x8xf32> -> vector<16x8xf32>
    %330 = vector.broadcast %326 : vector<1x8xf32> to vector<16x8xf32>
    %331 = arith.addf %329, %330 : vector<16x8xf32>
    %cst_110 = arith.constant dense<0xFF800000> : vector<16xf32>
    %332 = vector.multi_reduction <maximumf>, %331, %cst_110 [1] : vector<16x8xf32> to vector<16xf32>
    %333 = vector.shape_cast %332 : vector<16xf32> to vector<16x1xf32>
    %334 = vector.broadcast %333 : vector<16x1xf32> to vector<16x8xf32>
    %335 = arith.subf %331, %334 : vector<16x8xf32>
    %336 = math.exp %335 : vector<16x8xf32>
    %cst_111 = arith.constant dense<0.000000e+00> : vector<16xf32>
    %337 = vector.multi_reduction <add>, %336, %cst_111 [1] : vector<16x8xf32> to vector<16xf32>
    %338 = vector.shape_cast %337 : vector<16xf32> to vector<16x1xf32>
    %339 = vector.broadcast %338 : vector<16x1xf32> to vector<16x8xf32>
    %340 = arith.divf %336, %339 : vector<16x8xf32>
    %341 = arith.truncf %340 : vector<16x8xf32> to vector<16x8xbf16>
    %342 = vector.extract_strided_slice %324 {offsets = [0, 0], sizes = [8, 8], strides = [1, 1]} : vector<8x32xbf16> to vector<8x8xbf16>
    %cst_112 = arith.constant dense<0.000000e+00> : vector<16x8xf32>
    %343 = tpu.matmul %341, %342, %cst_112 {dimension_numbers = #tpu.dot_dimension_numbers<[1], [0], [0], [1], [0, 0, 1, 1], [], []>} : vector<16x8xbf16>, vector<8x8xbf16>, vector<16x8xf32> -> vector<16x8xf32>
    %344 = vector.extract_strided_slice %322 {offsets = [0, 8], sizes = [16, 8], strides = [1, 1]} : vector<16x32xbf16> to vector<16x8xbf16>
    %345 = vector.extract_strided_slice %323 {offsets = [0, 8], sizes = [8, 8], strides = [1, 1]} : vector<8x32xbf16> to vector<8x8xbf16>
    %cst_113 = arith.constant dense<0.000000e+00> : vector<16x8xf32>
    %346 = tpu.matmul %344, %345, %cst_113 {dimension_numbers = #tpu.dot_dimension_numbers<[1], [1], [0], [0], [0, 0, 1, 0], [], []>} : vector<16x8xbf16>, vector<8x8xbf16>, vector<16x8xf32> -> vector<16x8xf32>
    %347 = vector.broadcast %326 : vector<1x8xf32> to vector<16x8xf32>
    %348 = arith.addf %346, %347 : vector<16x8xf32>
    %cst_114 = arith.constant dense<0xFF800000> : vector<16xf32>
    %349 = vector.multi_reduction <maximumf>, %348, %cst_114 [1] : vector<16x8xf32> to vector<16xf32>
    %350 = vector.shape_cast %349 : vector<16xf32> to vector<16x1xf32>
    %351 = vector.broadcast %350 : vector<16x1xf32> to vector<16x8xf32>
    %352 = arith.subf %348, %351 : vector<16x8xf32>
    %353 = math.exp %352 : vector<16x8xf32>
    %cst_115 = arith.constant dense<0.000000e+00> : vector<16xf32>
    %354 = vector.multi_reduction <add>, %353, %cst_115 [1] : vector<16x8xf32> to vector<16xf32>
    %355 = vector.shape_cast %354 : vector<16xf32> to vector<16x1xf32>
    %356 = vector.broadcast %355 : vector<16x1xf32> to vector<16x8xf32>
    %357 = arith.divf %353, %356 : vector<16x8xf32>
    %358 = arith.truncf %357 : vector<16x8xf32> to vector<16x8xbf16>
    %359 = vector.extract_strided_slice %324 {offsets = [0, 8], sizes = [8, 8], strides = [1, 1]} : vector<8x32xbf16> to vector<8x8xbf16>
    %cst_116 = arith.constant dense<0.000000e+00> : vector<16x8xf32>
    %360 = tpu.matmul %358, %359, %cst_116 {dimension_numbers = #tpu.dot_dimension_numbers<[1], [0], [0], [1], [0, 0, 1, 1], [], []>} : vector<16x8xbf16>, vector<8x8xbf16>, vector<16x8xf32> -> vector<16x8xf32>
    %361 = vector.extract_strided_slice %322 {offsets = [0, 16], sizes = [16, 8], strides = [1, 1]} : vector<16x32xbf16> to vector<16x8xbf16>
    %362 = vector.extract_strided_slice %323 {offsets = [0, 16], sizes = [8, 8], strides = [1, 1]} : vector<8x32xbf16> to vector<8x8xbf16>
    %cst_117 = arith.constant dense<0.000000e+00> : vector<16x8xf32>
    %363 = tpu.matmul %361, %362, %cst_117 {dimension_numbers = #tpu.dot_dimension_numbers<[1], [1], [0], [0], [0, 0, 1, 0], [], []>} : vector<16x8xbf16>, vector<8x8xbf16>, vector<16x8xf32> -> vector<16x8xf32>
    %364 = vector.broadcast %326 : vector<1x8xf32> to vector<16x8xf32>
    %365 = arith.addf %363, %364 : vector<16x8xf32>
    %cst_118 = arith.constant dense<0xFF800000> : vector<16xf32>
    %366 = vector.multi_reduction <maximumf>, %365, %cst_118 [1] : vector<16x8xf32> to vector<16xf32>
    %367 = vector.shape_cast %366 : vector<16xf32> to vector<16x1xf32>
    %368 = vector.broadcast %367 : vector<16x1xf32> to vector<16x8xf32>
    %369 = arith.subf %365, %368 : vector<16x8xf32>
    %370 = math.exp %369 : vector<16x8xf32>
    %cst_119 = arith.constant dense<0.000000e+00> : vector<16xf32>
    %371 = vector.multi_reduction <add>, %370, %cst_119 [1] : vector<16x8xf32> to vector<16xf32>
    %372 = vector.shape_cast %371 : vector<16xf32> to vector<16x1xf32>
    %373 = vector.broadcast %372 : vector<16x1xf32> to vector<16x8xf32>
    %374 = arith.divf %370, %373 : vector<16x8xf32>
    %375 = arith.truncf %374 : vector<16x8xf32> to vector<16x8xbf16>
    %376 = vector.extract_strided_slice %324 {offsets = [0, 16], sizes = [8, 8], strides = [1, 1]} : vector<8x32xbf16> to vector<8x8xbf16>
    %cst_120 = arith.constant dense<0.000000e+00> : vector<16x8xf32>
    %377 = tpu.matmul %375, %376, %cst_120 {dimension_numbers = #tpu.dot_dimension_numbers<[1], [0], [0], [1], [0, 0, 1, 1], [], []>} : vector<16x8xbf16>, vector<8x8xbf16>, vector<16x8xf32> -> vector<16x8xf32>
    %378 = vector.extract_strided_slice %322 {offsets = [0, 24], sizes = [16, 8], strides = [1, 1]} : vector<16x32xbf16> to vector<16x8xbf16>
    %379 = vector.extract_strided_slice %323 {offsets = [0, 24], sizes = [8, 8], strides = [1, 1]} : vector<8x32xbf16> to vector<8x8xbf16>
    %cst_121 = arith.constant dense<0.000000e+00> : vector<16x8xf32>
    %380 = tpu.matmul %378, %379, %cst_121 {dimension_numbers = #tpu.dot_dimension_numbers<[1], [1], [0], [0], [0, 0, 1, 0], [], []>} : vector<16x8xbf16>, vector<8x8xbf16>, vector<16x8xf32> -> vector<16x8xf32>
    %381 = vector.broadcast %326 : vector<1x8xf32> to vector<16x8xf32>
    %382 = arith.addf %380, %381 : vector<16x8xf32>
    %cst_122 = arith.constant dense<0xFF800000> : vector<16xf32>
    %383 = vector.multi_reduction <maximumf>, %382, %cst_122 [1] : vector<16x8xf32> to vector<16xf32>
    %384 = vector.shape_cast %383 : vector<16xf32> to vector<16x1xf32>
    %385 = vector.broadcast %384 : vector<16x1xf32> to vector<16x8xf32>
    %386 = arith.subf %382, %385 : vector<16x8xf32>
    %387 = math.exp %386 : vector<16x8xf32>
    %cst_123 = arith.constant dense<0.000000e+00> : vector<16xf32>
    %388 = vector.multi_reduction <add>, %387, %cst_123 [1] : vector<16x8xf32> to vector<16xf32>
    %389 = vector.shape_cast %388 : vector<16xf32> to vector<16x1xf32>
    %390 = vector.broadcast %389 : vector<16x1xf32> to vector<16x8xf32>
    %391 = arith.divf %387, %390 : vector<16x8xf32>
    %392 = arith.truncf %391 : vector<16x8xf32> to vector<16x8xbf16>
    %393 = vector.extract_strided_slice %324 {offsets = [0, 24], sizes = [8, 8], strides = [1, 1]} : vector<8x32xbf16> to vector<8x8xbf16>
    %cst_124 = arith.constant dense<0.000000e+00> : vector<16x8xf32>
    %394 = tpu.matmul %392, %393, %cst_124 {dimension_numbers = #tpu.dot_dimension_numbers<[1], [0], [0], [1], [0, 0, 1, 1], [], []>} : vector<16x8xbf16>, vector<8x8xbf16>, vector<16x8xf32> -> vector<16x8xf32>
    %395 = tpu.concatenate %343, %360, %377, %394 in 1 : vector<16x8xf32>, vector<16x8xf32>, vector<16x8xf32>, vector<16x8xf32> -> vector<16x32xf32>
    %396 = tpu.concatenate %321, %395 in 0 : vector<16x32xf32>, vector<16x32xf32> -> vector<32x32xf32>
    %397 = arith.truncf %396 : vector<32x32xf32> to vector<32x32xbf16>
    %cst_125 = arith.constant dense<0.000000e+00> : vector<32x32xf32>
    %398 = tpu.matmul %397, %226, %cst_125 {dimension_numbers = #tpu.dot_dimension_numbers<[1], [0], [0], [1], [0, 0, 1, 1], [], []>} : vector<32x32xbf16>, vector<32x32xbf16>, vector<32x32xf32> -> vector<32x32xf32>
    %399 = vector.broadcast %230 : vector<1x32xf32> to vector<32x32xf32>
    %400 = arith.addf %398, %399 : vector<32x32xf32>
    %401 = arith.addf %216, %400 : vector<32x32xf32>
    %402 = vector.extract_strided_slice %8 {offsets = [10, 0], sizes = [1, 32], strides = [1, 1]} : vector<15x32xf32> to vector<1x32xf32>
    %403 = vector.extract_strided_slice %8 {offsets = [11, 0], sizes = [1, 32], strides = [1, 1]} : vector<15x32xf32> to vector<1x32xf32>
    %cst_126 = arith.constant dense<0.000000e+00> : vector<32xf32>
    %404 = vector.multi_reduction <add>, %401, %cst_126 [1] : vector<32x32xf32> to vector<32xf32>
    %405 = vector.shape_cast %404 : vector<32xf32> to vector<32x1xf32>
    %cst_127 = arith.constant 3.200000e+01 : f32
    %406 = vector.broadcast %cst_127 : f32 to vector<32x1xf32>
    %407 = arith.divf %405, %406 : vector<32x1xf32>
    %408 = vector.broadcast %407 : vector<32x1xf32> to vector<32x32xf32>
    %409 = arith.subf %401, %408 : vector<32x32xf32>
    %410 = arith.mulf %409, %409 : vector<32x32xf32>
    %cst_128 = arith.constant dense<0.000000e+00> : vector<32xf32>
    %411 = vector.multi_reduction <add>, %410, %cst_128 [1] : vector<32x32xf32> to vector<32xf32>
    %412 = vector.shape_cast %411 : vector<32xf32> to vector<32x1xf32>
    %cst_129 = arith.constant 3.200000e+01 : f32
    %413 = vector.broadcast %cst_129 : f32 to vector<32x1xf32>
    %414 = arith.divf %412, %413 : vector<32x1xf32>
    %415 = vector.broadcast %407 : vector<32x1xf32> to vector<32x32xf32>
    %416 = arith.subf %401, %415 : vector<32x32xf32>
    %cst_130 = arith.constant 9.99999974E-6 : f32
    %417 = vector.broadcast %cst_130 : f32 to vector<32x1xf32>
    %418 = arith.addf %414, %417 : vector<32x1xf32>
    %419 = math.rsqrt %418 : vector<32x1xf32>
    %420 = vector.broadcast %419 : vector<32x1xf32> to vector<32x32xf32>
    %421 = arith.mulf %416, %420 : vector<32x32xf32>
    %422 = vector.broadcast %402 : vector<1x32xf32> to vector<32x32xf32>
    %423 = arith.mulf %421, %422 : vector<32x32xf32>
    %424 = vector.broadcast %403 : vector<1x32xf32> to vector<32x32xf32>
    %425 = arith.addf %423, %424 : vector<32x32xf32>
    %426 = arith.truncf %425 : vector<32x32xf32> to vector<32x32xbf16>
    %c0_131 = arith.constant 0 : index
    %c0_132 = arith.constant 0 : index
    %c0_133 = arith.constant 0 : index
    %427 = vector.load %arg9[%c0_131, %c0_132, %c0_133] : memref<1x32x64xbf16, #tpu.memory_space<vmem>>, vector<1x32x64xbf16>
    %428 = vector.shape_cast %427 : vector<1x32x64xbf16> to vector<32x64xbf16>
    %cst_134 = arith.constant dense<0.000000e+00> : vector<32x64xf32>
    %429 = tpu.matmul %426, %428, %cst_134 {dimension_numbers = #tpu.dot_dimension_numbers<[1], [0], [0], [1], [0, 0, 1, 1], [], []>} : vector<32x32xbf16>, vector<32x64xbf16>, vector<32x64xf32> -> vector<32x64xf32>
    %c0_135 = arith.constant 0 : index
    %c0_136 = arith.constant 0 : index
    %c0_137 = arith.constant 0 : index
    %430 = vector.load %arg10[%c0_135, %c0_136, %c0_137] : memref<1x1x64xf32, #tpu.memory_space<vmem>>, vector<1x1x64xf32>
    %431 = vector.shape_cast %430 : vector<1x1x64xf32> to vector<1x64xf32>
    %432 = vector.broadcast %431 : vector<1x64xf32> to vector<32x64xf32>
    %433 = arith.addf %429, %432 : vector<32x64xf32>
    %cst_138 = arith.constant 0.000000e+00 : f32
    %434 = vector.broadcast %cst_138 : f32 to vector<32x64xf32>
    %435 = arith.maximumf %433, %434 : vector<32x64xf32>
    %436 = arith.truncf %435 : vector<32x64xf32> to vector<32x64xbf16>
    %c0_139 = arith.constant 0 : index
    %c0_140 = arith.constant 0 : index
    %c0_141 = arith.constant 0 : index
    %437 = vector.load %arg11[%c0_139, %c0_140, %c0_141] : memref<1x64x32xbf16, #tpu.memory_space<vmem>>, vector<1x64x32xbf16>
    %438 = vector.shape_cast %437 : vector<1x64x32xbf16> to vector<64x32xbf16>
    %cst_142 = arith.constant dense<0.000000e+00> : vector<32x32xf32>
    %439 = tpu.matmul %436, %438, %cst_142 {dimension_numbers = #tpu.dot_dimension_numbers<[1], [0], [0], [1], [0, 0, 1, 1], [], []>} : vector<32x64xbf16>, vector<64x32xbf16>, vector<32x32xf32> -> vector<32x32xf32>
    %440 = vector.extract_strided_slice %8 {offsets = [14, 0], sizes = [1, 32], strides = [1, 1]} : vector<15x32xf32> to vector<1x32xf32>
    %441 = vector.broadcast %440 : vector<1x32xf32> to vector<32x32xf32>
    %442 = arith.addf %439, %441 : vector<32x32xf32>
    %443 = arith.addf %425, %442 : vector<32x32xf32>
    %444 = vector.extract_strided_slice %8 {offsets = [12, 0], sizes = [1, 32], strides = [1, 1]} : vector<15x32xf32> to vector<1x32xf32>
    %445 = vector.extract_strided_slice %8 {offsets = [13, 0], sizes = [1, 32], strides = [1, 1]} : vector<15x32xf32> to vector<1x32xf32>
    %cst_143 = arith.constant dense<0.000000e+00> : vector<32xf32>
    %446 = vector.multi_reduction <add>, %443, %cst_143 [1] : vector<32x32xf32> to vector<32xf32>
    %447 = vector.shape_cast %446 : vector<32xf32> to vector<32x1xf32>
    %cst_144 = arith.constant 3.200000e+01 : f32
    %448 = vector.broadcast %cst_144 : f32 to vector<32x1xf32>
    %449 = arith.divf %447, %448 : vector<32x1xf32>
    %450 = vector.broadcast %449 : vector<32x1xf32> to vector<32x32xf32>
    %451 = arith.subf %443, %450 : vector<32x32xf32>
    %452 = arith.mulf %451, %451 : vector<32x32xf32>
    %cst_145 = arith.constant dense<0.000000e+00> : vector<32xf32>
    %453 = vector.multi_reduction <add>, %452, %cst_145 [1] : vector<32x32xf32> to vector<32xf32>
    %454 = vector.shape_cast %453 : vector<32xf32> to vector<32x1xf32>
    %cst_146 = arith.constant 3.200000e+01 : f32
    %455 = vector.broadcast %cst_146 : f32 to vector<32x1xf32>
    %456 = arith.divf %454, %455 : vector<32x1xf32>
    %457 = vector.broadcast %449 : vector<32x1xf32> to vector<32x32xf32>
    %458 = arith.subf %443, %457 : vector<32x32xf32>
    %cst_147 = arith.constant 9.99999974E-6 : f32
    %459 = vector.broadcast %cst_147 : f32 to vector<32x1xf32>
    %460 = arith.addf %456, %459 : vector<32x1xf32>
    %461 = math.rsqrt %460 : vector<32x1xf32>
    %462 = vector.broadcast %461 : vector<32x1xf32> to vector<32x32xf32>
    %463 = arith.mulf %458, %462 : vector<32x32xf32>
    %464 = vector.broadcast %444 : vector<1x32xf32> to vector<32x32xf32>
    %465 = arith.mulf %463, %464 : vector<32x32xf32>
    %466 = vector.broadcast %445 : vector<1x32xf32> to vector<32x32xf32>
    %467 = arith.addf %465, %466 : vector<32x32xf32>
    %c0_148 = arith.constant 0 : index
    %c0_149 = arith.constant 0 : index
    %468 = vector.load %arg13[%c0_148, %c0_149] : memref<32x32xf32, #tpu.memory_space<vmem>>, vector<32x32xf32>
    tpu.vector_store %arg13[%c0_148, %c0_149], %467 {strides = array<i32>} : memref<32x32xf32, #tpu.memory_space<vmem>>, vector<32x32xf32>,
    %c0_150 = arith.constant 0 : index
    %c0_151 = arith.constant 0 : index
    %469 = vector.load %arg12[%c0_150, %c0_151] : memref<32x32xf32, #tpu.memory_space<vmem>>, vector<32x32xf32>
    tpu.vector_store %arg12[%c0_150, %c0_151], %467 {strides = array<i32>} : memref<32x32xf32, #tpu.memory_space<vmem>>, vector<32x32xf32>,
    return
  }
  func.func @transform_0(%arg0: i32) -> (i32, i32) {
    %c0_i32 = arith.constant 0 : i32
    %c0_i32_0 = arith.constant 0 : i32
    %c0_i32_1 = arith.constant 0 : i32
    return %c0_i32, %c0_i32_0 : i32, i32
  }
  func.func @transform_1(%arg0: i32) -> (i32, i32) {
    %c0_i32 = arith.constant 0 : i32
    %c0_i32_0 = arith.constant 0 : i32
    %c0_i32_1 = arith.constant 0 : i32
    return %c0_i32, %c0_i32_0 : i32, i32
  }
  func.func @transform_2(%arg0: i32) -> (i32, i32) {
    %c0_i32 = arith.constant 0 : i32
    %c0_i32_0 = arith.constant 0 : i32
    %c0_i32_1 = arith.constant 0 : i32
    return %c0_i32, %c0_i32_0 : i32, i32
  }
  func.func @transform_3(%arg0: i32) -> (i32, i32) {
    %c0_i32 = arith.constant 0 : i32
    %c0_i32_0 = arith.constant 0 : i32
    %c0_i32_1 = arith.constant 0 : i32
    return %c0_i32, %c0_i32_0 : i32, i32
  }
  func.func @transform_4(%arg0: i32) -> (i32, i32, i32) {
    %c0_i32 = arith.constant 0 : i32
    %c0_i32_0 = arith.constant 0 : i32
    %c0_i32_1 = arith.constant 0 : i32
    %c0_i32_2 = arith.constant 0 : i32
    return %c0_i32, %c0_i32_0, %c0_i32_1 : i32, i32, i32
  }
  func.func @transform_5(%arg0: i32) -> (i32, i32, i32) {
    %c0_i32 = arith.constant 0 : i32
    %c0_i32_0 = arith.constant 0 : i32
    %c0_i32_1 = arith.constant 0 : i32
    %c0_i32_2 = arith.constant 0 : i32
    return %c0_i32, %c0_i32_0, %c0_i32_1 : i32, i32, i32
  }
  func.func @transform_6(%arg0: i32) -> (i32, i32, i32, i32) {
    %c0_i32 = arith.constant 0 : i32
    %c0_i32_0 = arith.constant 0 : i32
    %c0_i32_1 = arith.constant 0 : i32
    %c0_i32_2 = arith.constant 0 : i32
    return %arg0, %c0_i32, %c0_i32_0, %c0_i32_1 : i32, i32, i32, i32
  }
  func.func @transform_7(%arg0: i32) -> (i32, i32, i32) {
    %c0_i32 = arith.constant 0 : i32
    %c0_i32_0 = arith.constant 0 : i32
    %c0_i32_1 = arith.constant 0 : i32
    return %arg0, %c0_i32, %c0_i32_0 : i32, i32, i32
  }
  func.func @transform_8(%arg0: i32) -> (i32, i32, i32) {
    %c0_i32 = arith.constant 0 : i32
    %c0_i32_0 = arith.constant 0 : i32
    %c0_i32_1 = arith.constant 0 : i32
    return %arg0, %c0_i32, %c0_i32_0 : i32, i32, i32
  }
  func.func @transform_9(%arg0: i32) -> (i32, i32, i32) {
    %c0_i32 = arith.constant 0 : i32
    %c0_i32_0 = arith.constant 0 : i32
    %c0_i32_1 = arith.constant 0 : i32
    return %arg0, %c0_i32, %c0_i32_0 : i32, i32, i32
  }
  func.func @transform_10(%arg0: i32) -> (i32, i32, i32) {
    %c0_i32 = arith.constant 0 : i32
    %c0_i32_0 = arith.constant 0 : i32
    %c0_i32_1 = arith.constant 0 : i32
    return %arg0, %c0_i32, %c0_i32_0 : i32, i32, i32
  }
  func.func @transform_11(%arg0: i32) -> (i32, i32) {
    %c0_i32 = arith.constant 0 : i32
    %c0_i32_0 = arith.constant 0 : i32
    %c0_i32_1 = arith.constant 0 : i32
    return %c0_i32, %c0_i32_0 : i32, i32
  }
}

</mosaic_0001>

<llo_original>
// kernel: global_encoder_forward.1
$region0: #{global_encoder_forward.1}
  #allocation0 [shape = 'u32[]', space=smem, size = 0x4, offset = 0x4, fixed_abs, tag = 'smem constant byte address 0x4 - core index']
  #allocation1 [shape = 'u32[144,128]{1,0:T(1,128)}', space=vmem, size = 0x12000, scoped, tag = 'internal scratch']
  #allocation2 [shape = 'f32[32,32]{1,0:T(8,128)}', space=vmem, size = 0x4000, scoped, tag = 'scratch operand']
  %s0 = inlined_call_operand.vmem [shape: f32[32,32], index: 0, kind: input, shape index: {}]
  %s1 = inlined_call_operand.vmem [shape: f32[32,32], index: 1, kind: input, shape index: {}]
  %s2 = inlined_call_operand.vmem [shape: f32[16,32], index: 2, kind: input, shape index: {}]
  %s3 = inlined_call_operand.vmem [shape: f32[16,32], index: 3, kind: input, shape index: {}]
  %s4 = inlined_call_operand.vmem [shape: f32[2,1,16], index: 4, kind: input, shape index: {}]
  %s5 = inlined_call_operand.vmem [shape: f32[2,1,8], index: 5, kind: input, shape index: {}]
  %s6 = inlined_call_operand.hbm [shape: bf16[2,8,32,32], index: 6, kind: input, shape index: {}]
  %s7 = inlined_call_operand.vmem [shape: f32[2,15,32], index: 7, kind: input, shape index: {}]
  %s8 = inlined_call_operand.vmem [shape: bf16[2,32,64], index: 8, kind: input, shape index: {}]
  %s9 = inlined_call_operand.vmem [shape: f32[2,1,64], index: 9, kind: input, shape index: {}]
  %s10 = inlined_call_operand.vmem [shape: bf16[2,64,32], index: 10, kind: input, shape index: {}]
  %s11 = inlined_call_operand.hbm [shape: f32[32,32], index: 11, kind: output, shape index: {}]
  %s12 = sld [smem:[#allocation0]]
  $region85: #{global_encoder_forward.1} parent=0
    _
  %s14 = ssub.s32 1, %s12
  %s15 = scalar_select 0, %s14, %s12
  $region1: #{global_encoder_forward.1} parent=0
    #allocation3 [shape = 'u8[131072]{0}', space=vmem, size = 0x20000, scoped, tag = 'input window, operand 6']
    #allocation4 [shape = 's32[2]{0}', space=sflag, size = 0x8, scoped, tag = 'scoped memory for global_encoder_forward.1']
    #allocation5 [shape = 's32[2]{0}', space=sflag, size = 0x8, scoped, tag = 'scoped memory for global_encoder_forward.1']
    #allocation6 [shape = 'u8[16384]{0}', space=vmem, size = 0x4000, scoped, tag = 'output window, operand 0, single buffered']
    %16 = vsyncpa [#allocation4], 0
    %s17 = scalar_lea.sflag [#allocation4], 1
    %18 = vsyncpa %s17, 0
    %19 = vsyncpa [#allocation5], 0
    loop: start=0, step=1, limit=4
    $region2: #{global_encoder_forward.1} parent=1 // loop_pre_header
      _
    $region3: #{global_encoder_forward.1} parent=1 // loop_header
      %s21 = sphi 0, %s25
      %p22 = scmp.ge.s32.totalorder %s21, 4
      %s29 = sphi 0, %s29
      %s31 = sphi 0, %s29
      %s32 = sphi 0, %s31
      %s46 = sphi 0, %s32
      %s50 = sphi 0, %s50
      %s52 = sphi 0, %s50
      %s53 = sphi 0, %s52
      %s67 = sphi 0, %s53
      %s71 = sphi 0, %s71
      %s73 = sphi 0, %s71
      %s74 = sphi 0, %s73
      %s88 = sphi 0, %s74
      %s92 = sphi 0, %s92
      %s94 = sphi 0, %s92
      %s95 = sphi 0, %s94
      %s109 = sphi 0, %s95
      %s113 = sphi 0, %s113
      %s115 = sphi 0, %s113
      %s116 = sphi 0, %s115
      %s130 = sphi 0, %s116
      %s134 = sphi 0, %s134
      %s136 = sphi 0, %s134
      %s137 = sphi 0, %s136
      %s151 = sphi 0, %s137
      %s157 = sphi 0, %s159
      %s160 = sphi 0, %s157
      %s161 = sphi 0, %s160
      %s177 = sphi 0, %s161
      %s183 = sphi 0, %s185
      %s186 = sphi 0, %s183
      %s187 = sphi 0, %s186
      %s203 = sphi 0, %s187
      %s209 = sphi 0, %s211
      %s212 = sphi 0, %s209
      %s213 = sphi 0, %s212
      %s229 = sphi 0, %s213
      %s235 = sphi 0, %s237
      %s238 = sphi 0, %s235
      %s239 = sphi 0, %s238
      %s255 = sphi 0, %s239
      %s261 = sphi 0, %s263
      %s264 = sphi 0, %s261
      %s265 = sphi 0, %s264
      %s281 = sphi 0, %s265
      %s285 = sphi 0, %s285
      %s287 = sphi 0, %s285
      %s288 = sphi 0, %s287
      %s302 = sphi 0, %s288
    $region4: #{global_encoder_forward.1} parent=1 // loop_header_branch
      %24 = sbr.rel (%p22) target = $region8
    $region5: #{global_encoder_forward.1} parent=1 // loop_body
      %s26 = ssub.s32 %s21, 1
      %s27 = ssub.s32 %s21, 2
      %s28 = sadd.s32 %s21, 1
      %s30 = sadd.s32 %s29, 1
      %p33 = scmp.eq.s32.totalorder %s21, 1
      %p34 = scmp.ne.s32.totalorder %s29, %s31
      %p35 = scmp.eq.s32.totalorder %s21, 0
      %p36 = por %p34, %p35
      %p37 = scmp.ne.s32.totalorder %s29, %s31
      %p38 = scmp.eq.s32.totalorder %s26, 1
      %p39 = por %p37, %p38
      %p40 = scmp.ne.s32.totalorder %s31, %s32
      %p41 = scmp.eq.s32.totalorder %s26, 0
      %p42 = por %p40, %p41
      %p43 = scmp.ne.s32.totalorder %s31, %s32
      %p44 = scmp.eq.s32.totalorder %s27, 1
      %p45 = por %p43, %p44
      %p47 = scmp.ne.s32.totalorder %s32, %s46
      %p48 = scmp.eq.s32.totalorder %s27, 0
      %p49 = por %p47, %p48
      %s51 = sadd.s32 %s50, 1
      %p54 = scmp.eq.s32.totalorder %s21, 1
      %p55 = scmp.ne.s32.totalorder %s50, %s52
      %p56 = scmp.eq.s32.totalorder %s21, 0
      %p57 = por %p55, %p56
      %p58 = scmp.ne.s32.totalorder %s50, %s52
      %p59 = scmp.eq.s32.totalorder %s26, 1
      %p60 = por %p58, %p59
      %p61 = scmp.ne.s32.totalorder %s52, %s53
      %p62 = scmp.eq.s32.totalorder %s26, 0
      %p63 = por %p61, %p62
      %p64 = scmp.ne.s32.totalorder %s52, %s53
      %p65 = scmp.eq.s32.totalorder %s27, 1
      %p66 = por %p64, %p65
      %p68 = scmp.ne.s32.totalorder %s53, %s67
      %p69 = scmp.eq.s32.totalorder %s27, 0
      %p70 = por %p68, %p69
      %s72 = sadd.s32 %s71, 1
      %p75 = scmp.eq.s32.totalorder %s21, 1
      %p76 = scmp.ne.s32.totalorder %s71, %s73
      %p77 = scmp.eq.s32.totalorder %s21, 0
      %p78 = por %p76, %p77
      %p79 = scmp.ne.s32.totalorder %s71, %s73
      %p80 = scmp.eq.s32.totalorder %s26, 1
      %p81 = por %p79, %p80
      %p82 = scmp.ne.s32.totalorder %s73, %s74
      %p83 = scmp.eq.s32.totalorder %s26, 0
      %p84 = por %p82, %p83
      %p85 = scmp.ne.s32.totalorder %s73, %s74
      %p86 = scmp.eq.s32.totalorder %s27, 1
      %p87 = por %p85, %p86
      %p89 = scmp.ne.s32.totalorder %s74, %s88
      %p90 = scmp.eq.s32.totalorder %s27, 0
      %p91 = por %p89, %p90
      %s93 = sadd.s32 %s92, 1
      %p96 = scmp.eq.s32.totalorder %s21, 1
      %p97 = scmp.ne.s32.totalorder %s92, %s94
      %p98 = scmp.eq.s32.totalorder %s21, 0
      %p99 = por %p97, %p98
      %p100 = scmp.ne.s32.totalorder %s92, %s94
      %p101 = scmp.eq.s32.totalorder %s26, 1
      %p102 = por %p100, %p101
      %p103 = scmp.ne.s32.totalorder %s94, %s95
      %p104 = scmp.eq.s32.totalorder %s26, 0
      %p105 = por %p103, %p104
      %p106 = scmp.ne.s32.totalorder %s94, %s95
      %p107 = scmp.eq.s32.totalorder %s27, 1
      %p108 = por %p106, %p107
      %p110 = scmp.ne.s32.totalorder %s95, %s109
      %p111 = scmp.eq.s32.totalorder %s27, 0
      %p112 = por %p110, %p111
      %s114 = sadd.s32 %s113, 1
      %p117 = scmp.eq.s32.totalorder %s21, 1
      %p118 = scmp.ne.s32.totalorder %s113, %s115
      %p119 = scmp.eq.s32.totalorder %s21, 0
      %p120 = por %p118, %p119
      %p121 = scmp.ne.s32.totalorder %s113, %s115
      %p122 = scmp.eq.s32.totalorder %s26, 1
      %p123 = por %p121, %p122
      %p124 = scmp.ne.s32.totalorder %s115, %s116
      %p125 = scmp.eq.s32.totalorder %s26, 0
      %p126 = por %p124, %p125
      %p127 = scmp.ne.s32.totalorder %s115, %s116
      %p128 = scmp.eq.s32.totalorder %s27, 1
      %p129 = por %p127, %p128
      %p131 = scmp.ne.s32.totalorder %s116, %s130
      %p132 = scmp.eq.s32.totalorder %s27, 0
      %p133 = por %p131, %p132
      %s135 = sadd.s32 %s134, 1
      %p138 = scmp.eq.s32.totalorder %s21, 1
      %p139 = scmp.ne.s32.totalorder %s134, %s136
      %p140 = scmp.eq.s32.totalorder %s21, 0
      %p141 = por %p139, %p140
      %p142 = scmp.ne.s32.totalorder %s134, %s136
      %p143 = scmp.eq.s32.totalorder %s26, 1
      %p144 = por %p142, %p143
      %p145 = scmp.ne.s32.totalorder %s136, %s137
      %p146 = scmp.eq.s32.totalorder %s26, 0
      %p147 = por %p145, %p146
      %p148 = scmp.ne.s32.totalorder %s136, %s137
      %p149 = scmp.eq.s32.totalorder %s27, 1
      %p150 = por %p148, %p149
      %p152 = scmp.ne.s32.totalorder %s137, %s151
      %p153 = scmp.eq.s32.totalorder %s27, 0
      %p154 = por %p152, %p153
      %s155 = ssub.s32 %s21, %s28
      %p156 = scmp.eq.s32.totalorder %s155, 0
      %s158 = sadd.s32 %s157, 1
      %s159 = scalar_select %p156, %s157, %s158
      %p162 = pneg %p156
      %p163 = scmp.eq.s32.totalorder %s21, 1
      %p164 = por %p162, %p163
      %p165 = scmp.ne.s32.totalorder %s157, %s160
      %p166 = scmp.eq.s32.totalorder %s21, 0
      %p167 = por %p165, %p166
      %p168 = scmp.ne.s32.totalorder %s157, %s160
      %p169 = scmp.eq.s32.totalorder %s26, 1
      %p170 = por %p168, %p169
      %p171 = scmp.ne.s32.totalorder %s160, %s161
      %p172 = scmp.eq.s32.totalorder %s26, 0
      %p173 = por %p171, %p172
      %p174 = scmp.ne.s32.totalorder %s160, %s161
      %p175 = scmp.eq.s32.totalorder %s27, 1
      %p176 = por %p174, %p175
      %p178 = scmp.ne.s32.totalorder %s161, %s177
      %p179 = scmp.eq.s32.totalorder %s27, 0
      %p180 = por %p178, %p179
      %s181 = ssub.s32 %s21, %s28
      %p182 = scmp.eq.s32.totalorder %s181, 0
      %s184 = sadd.s32 %s183, 1
      %s185 = scalar_select %p182, %s183, %s184
      %p188 = pneg %p182
      %p189 = scmp.eq.s32.totalorder %s21, 1
      %p190 = por %p188, %p189
      %p191 = scmp.ne.s32.totalorder %s183, %s186
      %p192 = scmp.eq.s32.totalorder %s21, 0
      %p193 = por %p191, %p192
      %p194 = scmp.ne.s32.totalorder %s183, %s186
      %p195 = scmp.eq.s32.totalorder %s26, 1
      %p196 = por %p194, %p195
      %p197 = scmp.ne.s32.totalorder %s186, %s187
      %p198 = scmp.eq.s32.totalorder %s26, 0
      %p199 = por %p197, %p198
      %p200 = scmp.ne.s32.totalorder %s186, %s187
      %p201 = scmp.eq.s32.totalorder %s27, 1
      %p202 = por %p200, %p201
      %p204 = scmp.ne.s32.totalorder %s187, %s203
      %p205 = scmp.eq.s32.totalorder %s27, 0
      %p206 = por %p204, %p205
      %s207 = ssub.s32 %s21, %s28
      %p208 = scmp.eq.s32.totalorder %s207, 0
      %s210 = sadd.s32 %s209, 1
      %s211 = scalar_select %p208, %s209, %s210
      %p214 = pneg %p208
      %p215 = scmp.eq.s32.totalorder %s21, 1
      %p216 = por %p214, %p215
      %p217 = scmp.ne.s32.totalorder %s209, %s212
      %p218 = scmp.eq.s32.totalorder %s21, 0
      %p219 = por %p217, %p218
      %p220 = scmp.ne.s32.totalorder %s209, %s212
      %p221 = scmp.eq.s32.totalorder %s26, 1
      %p222 = por %p220, %p221
      %p223 = scmp.ne.s32.totalorder %s212, %s213
      %p224 = scmp.eq.s32.totalorder %s26, 0
      %p225 = por %p223, %p224
      %p226 = scmp.ne.s32.totalorder %s212, %s213
      %p227 = scmp.eq.s32.totalorder %s27, 1
      %p228 = por %p226, %p227
      %p230 = scmp.ne.s32.totalorder %s213, %s229
      %p231 = scmp.eq.s32.totalorder %s27, 0
      %p232 = por %p230, %p231
      %s233 = ssub.s32 %s21, %s28
      %p234 = scmp.eq.s32.totalorder %s233, 0
      %s236 = sadd.s32 %s235, 1
      %s237 = scalar_select %p234, %s235, %s236
      %p240 = pneg %p234
      %p241 = scmp.eq.s32.totalorder %s21, 1
      %p242 = por %p240, %p241
      %p243 = scmp.ne.s32.totalorder %s235, %s238
      %p244 = scmp.eq.s32.totalorder %s21, 0
      %p245 = por %p243, %p244
      %p246 = scmp.ne.s32.totalorder %s235, %s238
      %p247 = scmp.eq.s32.totalorder %s26, 1
      %p248 = por %p246, %p247
      %p249 = scmp.ne.s32.totalorder %s238, %s239
      %p250 = scmp.eq.s32.totalorder %s26, 0
      %p251 = por %p249, %p250
      %p252 = scmp.ne.s32.totalorder %s238, %s239
      %p253 = scmp.eq.s32.totalorder %s27, 1
      %p254 = por %p252, %p253
      %p256 = scmp.ne.s32.totalorder %s239, %s255
      %p257 = scmp.eq.s32.totalorder %s27, 0
      %p258 = por %p256, %p257
      %s259 = ssub.s32 %s21, %s28
      %p260 = scmp.eq.s32.totalorder %s259, 0
      %s262 = sadd.s32 %s261, 1
      %s263 = scalar_select %p260, %s261, %s262
      %p266 = pneg %p260
      %p267 = scmp.eq.s32.totalorder %s21, 1
      %p268 = por %p266, %p267
      %p269 = scmp.ne.s32.totalorder %s261, %s264
      %p270 = scmp.eq.s32.totalorder %s21, 0
      %p271 = por %p269, %p270
      %p272 = scmp.ne.s32.totalorder %s261, %s264
      %p273 = scmp.eq.s32.totalorder %s26, 1
      %p274 = por %p272, %p273
      %p275 = scmp.ne.s32.totalorder %s264, %s265
      %p276 = scmp.eq.s32.totalorder %s26, 0
      %p277 = por %p275, %p276
      %p278 = scmp.ne.s32.totalorder %s264, %s265
      %p279 = scmp.eq.s32.totalorder %s27, 1
      %p280 = por %p278, %p279
      %p282 = scmp.ne.s32.totalorder %s265, %s281
      %p283 = scmp.eq.s32.totalorder %s27, 0
      %p284 = por %p282, %p283
      %s286 = sadd.s32 %s285, 1
      %p289 = scmp.eq.s32.totalorder %s21, 1
      %p290 = scmp.ne.s32.totalorder %s285, %s287
      %p291 = scmp.eq.s32.totalorder %s21, 0
      %p292 = por %p290, %p291
      %p293 = scmp.ne.s32.totalorder %s285, %s287
      %p294 = scmp.eq.s32.totalorder %s26, 1
      %p295 = por %p293, %p294
      %p296 = scmp.ne.s32.totalorder %s287, %s288
      %p297 = scmp.eq.s32.totalorder %s26, 0
      %p298 = por %p296, %p297
      %p299 = scmp.ne.s32.totalorder %s287, %s288
      %p300 = scmp.eq.s32.totalorder %s27, 1
      %p301 = por %p299, %p300
      %p303 = scmp.ne.s32.totalorder %s288, %s302
      %p304 = scmp.eq.s32.totalorder %s27, 0
      %p305 = por %p303, %p304
      %p306 = scmp.le.s32.totalorder 1, %s21
      %p307 = scmp.lt.s32.totalorder %s21, 3
      %p308 = pnand %p306, %p307
      %p309 = pneg %p308
      // Predicated region
      $region9: #{global_encoder_forward.1} parent=5 // pred_check
        _
      $region10: #{global_encoder_forward.1} parent=5 // pred_check_branch
        %311 = sbr.rel (%p308) target = $region12
      $region11: #{global_encoder_forward.1} parent=5 // pred_region
        %s312 = ssub.s32 %s21, 1
        // Predicated region
        $region13: #{global_encoder_forward.1} parent=11 // pred_check
          %p313 = pneg %p42
        $region14: #{global_encoder_forward.1} parent=11 // pred_check_branch
          %315 = sbr.rel (%p313) target = $region16
        $region15: #{global_encoder_forward.1} parent=11 // pred_region
          _
        $region16: #{global_encoder_forward.1} parent=11 // pred_fallthru
          _
        // Predicated region
        $region17: #{global_encoder_forward.1} parent=11 // pred_check
          %p316 = pneg %p63
        $region18: #{global_encoder_forward.1} parent=11 // pred_check_branch
          %318 = sbr.rel (%p316) target = $region20
        $region19: #{global_encoder_forward.1} parent=11 // pred_region
          _
        $region20: #{global_encoder_forward.1} parent=11 // pred_fallthru
          _
        // Predicated region
        $region21: #{global_encoder_forward.1} parent=11 // pred_check
          %p319 = pneg %p84
        $region22: #{global_encoder_forward.1} parent=11 // pred_check_branch
          %321 = sbr.rel (%p319) target = $region24
        $region23: #{global_encoder_forward.1} parent=11 // pred_region
          _
        $region24: #{global_encoder_forward.1} parent=11 // pred_fallthru
          _
        // Predicated region
        $region25: #{global_encoder_forward.1} parent=11 // pred_check
          %p322 = pneg %p105
        $region26: #{global_encoder_forward.1} parent=11 // pred_check_branch
          %324 = sbr.rel (%p322) target = $region28
        $region27: #{global_encoder_forward.1} parent=11 // pred_region
          _
        $region28: #{global_encoder_forward.1} parent=11 // pred_fallthru
          _
        // Predicated region
        $region29: #{global_encoder_forward.1} parent=11 // pred_check
          %p325 = pneg %p126
        $region30: #{global_encoder_forward.1} parent=11 // pred_check_branch
          %327 = sbr.rel (%p325) target = $region32
        $region31: #{global_encoder_forward.1} parent=11 // pred_region
          _
        $region32: #{global_encoder_forward.1} parent=11 // pred_fallthru
          _
        // Predicated region
        $region33: #{global_encoder_forward.1} parent=11 // pred_check
          %p328 = pneg %p147
        $region34: #{global_encoder_forward.1} parent=11 // pred_check_branch
          %330 = sbr.rel (%p328) target = $region36
        $region35: #{global_encoder_forward.1} parent=11 // pred_region
          _
        $region36: #{global_encoder_forward.1} parent=11 // pred_fallthru
          _
      $region12: #{global_encoder_forward.1} parent=5 // pred_fallthru
        _
      %p331 = scmp.lt.s32.totalorder %s21, 2
      // Predicated region
      $region37: #{global_encoder_forward.1} parent=5 // pred_check
        %p332 = pneg %p331
      $region38: #{global_encoder_forward.1} parent=5 // pred_check_branch
        %334 = sbr.rel (%p332) target = $region40
      $region39: #{global_encoder_forward.1} parent=5 // pred_region
        // Predicated region
        $region41: #{global_encoder_forward.1} parent=39 // pred_check
          %p335 = pneg %p167
        $region42: #{global_encoder_forward.1} parent=39 // pred_check_branch
          %337 = sbr.rel (%p335) target = $region44
        $region43: #{global_encoder_forward.1} parent=39 // pred_region
          %s338 = sand.u32 %s157, 1
          %s339 = scalar_lea.sflag [#allocation4], %s338
          %s340 = sand.u32 %s157, 1
          %s341 = smul.addr %s340, 128
          %s342 = scalar_lea.vmem [#allocation3], %s341
          %s344 = ssub.s32 2048, 2048
          %345 = vsyncadd %s339, %s344
          %s346 = smul.addr %s21, 32
          %s347 = smul.addr %s346, 64
          %s348 = scalar_lea.hbm %s6, %s347
          %s349 = sshll.u32 %s342, 4
          %s350 = int_to_ptr.vmem [resolvable:$true] %s349
          %355 = dma.hbm_to_vmem [thread:$0]  %s348, 2048, %s350, %s339, 64, 64, 4
        $region44: #{global_encoder_forward.1} parent=39 // pred_fallthru
          _
        // Predicated region
        $region45: #{global_encoder_forward.1} parent=39 // pred_check
          %p356 = pneg %p193
        $region46: #{global_encoder_forward.1} parent=39 // pred_check_branch
          %358 = sbr.rel (%p356) target = $region48
        $region47: #{global_encoder_forward.1} parent=39 // pred_region
          %p359 = scmp.lt.s32.totalorder %s21, 1
          %s360 = scalar_select %p359, %s21, 1
          %s361 = smul.addr %s360, 2
          %s362 = smul.addr %s361, 8
          %s363 = scalar_lea.vmem %s7, %s362
        $region48: #{global_encoder_forward.1} parent=39 // pred_fallthru
          _
        // Predicated region
        $region49: #{global_encoder_forward.1} parent=39 // pred_check
          %p364 = pneg %p219
        $region50: #{global_encoder_forward.1} parent=39 // pred_check_branch
          %366 = sbr.rel (%p364) target = $region52
        $region51: #{global_encoder_forward.1} parent=39 // pred_region
          %p367 = scmp.lt.s32.totalorder %s21, 1
          %s368 = scalar_select %p367, %s21, 1
          %s369 = smul.addr %s368, 4
          %s370 = smul.addr %s369, 4
          %s371 = scalar_lea.vmem %s8, %s370
        $region52: #{global_encoder_forward.1} parent=39 // pred_fallthru
          _
        // Predicated region
        $region53: #{global_encoder_forward.1} parent=39 // pred_check
          %p372 = pneg %p245
        $region54: #{global_encoder_forward.1} parent=39 // pred_check_branch
          %374 = sbr.rel (%p372) target = $region56
        $region55: #{global_encoder_forward.1} parent=39 // pred_region
          %p375 = scmp.lt.s32.totalorder %s21, 1
          %s376 = scalar_select %p375, %s21, 1
          %s377 = scalar_lea.vmem %s9, %s376
        $region56: #{global_encoder_forward.1} parent=39 // pred_fallthru
          _
        // Predicated region
        $region57: #{global_encoder_forward.1} parent=39 // pred_check
          %p378 = pneg %p271
        $region58: #{global_encoder_forward.1} parent=39 // pred_check_branch
          %380 = sbr.rel (%p378) target = $region60
        $region59: #{global_encoder_forward.1} parent=39 // pred_region
          %p381 = scmp.lt.s32.totalorder %s21, 1
          %s382 = scalar_select %p381, %s21, 1
          %s383 = smul.addr %s382, 8
          %s384 = smul.addr %s383, 4
          %s385 = scalar_lea.vmem %s10, %s384
        $region60: #{global_encoder_forward.1} parent=39 // pred_fallthru
          _
      $region40: #{global_encoder_forward.1} parent=5 // pred_fallthru
        _
      %p386 = scmp.le.s32.totalorder 1, %s21
      %p387 = scmp.lt.s32.totalorder %s21, 3
      %p388 = pnand %p386, %p387
      %p389 = pneg %p388
      // Predicated region
      $region61: #{global_encoder_forward.1} parent=5 // pred_check
        _
      $region62: #{global_encoder_forward.1} parent=5 // pred_check_branch
        %391 = sbr.rel (%p388) target = $region64
      $region63: #{global_encoder_forward.1} parent=5 // pred_region
        %s392 = ssub.s32 %s21, 1
        %s393 = sand.u32 %s160, 1
        %s394 = scalar_lea.sflag [#allocation4], %s393
        %s395 = sand.u32 %s160, 1
        %s396 = smul.addr %s395, 128
        %s397 = scalar_lea.vmem [#allocation3], %s396
        // Predicated region
        $region65: #{global_encoder_forward.1} parent=63 // pred_check
          %p398 = pneg %p173
        $region66: #{global_encoder_forward.1} parent=63 // pred_check_branch
          %400 = sbr.rel (%p398) target = $region68
        $region67: #{global_encoder_forward.1} parent=63 // pred_region
          %401 = dma.done %s394, 2048
        $region68: #{global_encoder_forward.1} parent=63 // pred_fallthru
          _
        %p402 = pneg %p42
        %p403 = pneg %p39
        %p404 = pneg %p63
        %p405 = pneg %p60
        %p406 = pneg %p84
        %p407 = pneg %p81
        %p408 = pneg %p105
        %p409 = pneg %p102
        %p410 = pneg %p126
        %p411 = pneg %p123
        %p412 = pneg %p147
        %p413 = pneg %p144
        %s414 = sand.u32 %s160, 1
        %s415 = scalar_lea.sflag [#allocation4], %s414
        %s416 = sand.u32 %s160, 1
        %s417 = smul.addr %s416, 128
        %s418 = scalar_lea.vmem [#allocation3], %s417
        %p419 = pneg %p173
        %p420 = pneg %p170
        %p421 = scmp.lt.s32.totalorder %s26, 1
        %s422 = scalar_select %p421, %s26, 1
        %s423 = smul.addr %s422, 2
        %s424 = smul.addr %s423, 8
        %s425 = scalar_lea.vmem %s7, %s424
        %p426 = pneg %p199
        %p427 = pneg %p196
        %p428 = scmp.lt.s32.totalorder %s26, 1
        %s429 = scalar_select %p428, %s26, 1
        %s430 = smul.addr %s429, 4
        %s431 = smul.addr %s430, 4
        %s432 = scalar_lea.vmem %s8, %s431
        %p433 = pneg %p225
        %p434 = pneg %p222
        %p435 = scmp.lt.s32.totalorder %s26, 1
        %s436 = scalar_select %p435, %s26, 1
        %s437 = scalar_lea.vmem %s9, %s436
        %p438 = pneg %p251
        %p439 = pneg %p248
        %p440 = scmp.lt.s32.totalorder %s26, 1
        %s441 = scalar_select %p440, %s26, 1
        %s442 = smul.addr %s441, 8
        %s443 = smul.addr %s442, 4
        %s444 = scalar_lea.vmem %s10, %s443
        %p445 = pneg %p277
        %p446 = pneg %p274
        %p447 = pneg %p298
        %p448 = pneg %p295
        %p449 = scmp.lt.s32.totalorder %s26, 1
        %s450 = scalar_select %p449, %s26, 1
        %s451 = smul.addr %s450, 2
        %s452 = smul.addr %s451, 8
        %s453 = scalar_lea.vmem %s7, %s452
        %p454 = scmp.lt.s32.totalorder %s26, 1
        %s455 = scalar_select %p454, %s26, 1
        %s456 = smul.addr %s455, 4
        %s457 = smul.addr %s456, 4
        %s458 = scalar_lea.vmem %s8, %s457
        %p459 = scmp.lt.s32.totalorder %s26, 1
        %s460 = scalar_select %p459, %s26, 1
        %s461 = scalar_lea.vmem %s9, %s460
        %p462 = scmp.lt.s32.totalorder %s26, 1
        %s463 = scalar_select %p462, %s26, 1
        %s464 = smul.addr %s463, 8
        %s465 = smul.addr %s464, 4
        %s466 = scalar_lea.vmem %s10, %s465
        %p468 = scmp.eq.s32.totalorder %s26, 0
        // Predicated region
        $region69: #{global_encoder_forward.1} parent=63 // pred_check
          %p469 = pneg %p468
        $region70: #{global_encoder_forward.1} parent=63 // pred_check_branch
          %471 = sbr.rel (%p469) target = $region72
        $region71: #{global_encoder_forward.1} parent=63 // pred_region
          %v472 = vld [vmem:[%s0] sm:$0xff]
          %v473 = vld [vmem:[%s0 + $0x8] sm:$0xff]
          %v474 = vld [vmem:[%s0 + $0x10] sm:$0xff]
          %v475 = vld [vmem:[%s0 + $0x18] sm:$0xff]
          %vm476 = vcmask 261120
          %477 = vst.msk [vmem:[#allocation2] sm:$0xff] %vm476, %v472
          %478 = vst.msk [vmem:[#allocation2 + $0x8] sm:$0xff] %vm476, %v473
          %479 = vst.msk [vmem:[#allocation2 + $0x10] sm:$0xff] %vm476, %v474
          %480 = vst.msk [vmem:[#allocation2 + $0x18] sm:$0xff] %vm476, %v475
        $region72: #{global_encoder_forward.1} parent=63 // pred_fallthru
          _
        %v481 = vld [vmem:[#allocation2] sm:$0xff]
        %v482 = vld [vmem:[#allocation2 + $0x8] sm:$0xff]
        %v483 = vld [vmem:[#allocation2 + $0x10] sm:$0xff]
        %v484 = vld [vmem:[#allocation2 + $0x18] sm:$0xff]
        %v485 = vld [vmem:[%s1] sm:$0xff]
        %v486 = vld [vmem:[%s1 + $0x8] sm:$0xff]
        %v487 = vld [vmem:[%s1 + $0x10] sm:$0xff]
        %v488 = vld [vmem:[%s1 + $0x18] sm:$0xff]
        %v489 = vld [vmem:[%s2] sm:$0xff]
        %v490 = vld [vmem:[%s2 + $0x8] sm:$0xff]
        %v491 = vld [vmem:[%s3] sm:$0xff]
        %v492 = vld [vmem:[%s3 + $0x8] sm:$0xff]
        %v493 = vld [vmem:[%s453] sm:$0xff]
        %v494 = vld [vmem:[%s453 + $0x8] sm:$0x7f]
        %v495 = vadd.f32 %v481, %v485
        %v496 = vadd.f32 %v482, %v486
        %v497 = vadd.f32 %v483, %v487
        %v498 = vadd.f32 %v484, %v488
        %v499 = vld [vmem:[%s397] sm:$0xf]
        %v500 = vld [vmem:[%s397 + $0x4] sm:$0xf]
        %v501 = vld [vmem:[%s397 + $0x8] sm:$0xf]
        %v502 = vld [vmem:[%s397 + $0xc] sm:$0xf]
        %s503 = scalar_lea.vmem %s397, 16 [#allocation3]
        %v504 = vld [vmem:[%s503] sm:$0xf]
        %v505 = vld [vmem:[%s503 + $0x4] sm:$0xf]
        %v506 = vld [vmem:[%s503 + $0x8] sm:$0xf]
        %v507 = vld [vmem:[%s503 + $0xc] sm:$0xf]
        %s508 = scalar_lea.vmem %s397, 32 [#allocation3]
        %v509 = vld [vmem:[%s508] sm:$0xf]
        %v510 = vld [vmem:[%s508 + $0x4] sm:$0xf]
        %v511 = vld [vmem:[%s508 + $0x8] sm:$0xf]
        %v512 = vld [vmem:[%s508 + $0xc] sm:$0xf]
        %s513 = scalar_lea.vmem %s397, 48 [#allocation3]
        %v514 = vld [vmem:[%s513] sm:$0xf]
        %v515 = vld [vmem:[%s513 + $0x4] sm:$0xf]
        %v516 = vld [vmem:[%s513 + $0x8] sm:$0xf]
        %v517 = vld [vmem:[%s513 + $0xc] sm:$0xf]
        %v518 = vpack.c.bf16 %v496, %v495
        %v519 = vpack.c.bf16 %v498, %v497
        %v520 = vlaneseq
        %v521 = vshrl.u32 %v520, 7
        %v522 = vsub.s32 0, %v521
        %v523 = vrot.slane %v493, %v522
        %v528 = vunpack.c.l.b16 %v499
        %v529 = vunpack.c.l.b16 %v500
        %v530 = vunpack.c.l.b16 %v501
        %v531 = vunpack.c.l.b16 %v502
        %v532 = vpack.c.b16 %v529, %v528
        %v533 = vpack.c.b16 %v531, %v530
        %vm536 = vcmask 261120
        %v538 = vsel %vm536, %v518, 0
        %v541 = vsel %vm536, %v519, 0
        %543 = vmatprep.subr.bf16.mxu0 0
        %544 = vmatpush1.bf16.msra.mxu0 0
        %545 = vmatprep.subr.bf16.mxu0 0
        %546 = vmatpush1.bf16.msra.mxu0 0
        %547 = vmatprep.subr.bf16.mxu0 0
        %548 = vmatpush1.bf16.msra.mxu0 0
        %549 = vmatprep.subr.bf16.mxu0 0
        %550 = vmatpush1.bf16.msra.mxu0 0
        %551 = vmatprep.subr.bf16.mxu0 0
        %552 = vmatpush1.bf16.msra.mxu0 0
        %553 = vmatprep.subr.bf16.mxu0 0
        %554 = vmatpush1.bf16.msra.mxu0 0
        %555 = vmatprep.subr.bf16.mxu0 0
        %556 = vmatpush1.bf16.msra.mxu0 %v533
        %557 = vmatprep.subr.bf16.mxu0 0
        %558 = vmatpush1.bf16.msra.mxu0 %v532
        %559 = vmatprep.subr.bf16.mxu0 0
        %560 = vmatpush2.bf16.msra.mxu0 0
        %561 = vmatprep.subr.bf16.mxu0 0
        %562 = vmatpush2.bf16.msra.mxu0 0
        %563 = vmatprep.subr.bf16.mxu0 0
        %564 = vmatpush2.bf16.msra.mxu0 0
        %565 = vmatprep.subr.bf16.mxu0 0
        %566 = vmatpush2.bf16.msra.mxu0 0
        %567 = vmatprep.subr.bf16.mxu0 0
        %568 = vmatpush2.bf16.msra.mxu0 0
        %569 = vmatprep.subr.bf16.mxu0 0
        %570 = vmatpush2.bf16.msra.mxu0 0
        %571 = vmatprep.subr.bf16.mxu0 0
        %572 = vmatpush2.bf16.msra.mxu0 0
        %573 = vmatprep.subr.bf16.mxu0 0
        %574 = vmatpush2.bf16.msra.mxu0 0
        %575 = vmatprep.mubr.bf16.mxu0 0
        %576 = vmatmul.mubr.bf16.gmra.mxu0 %v538
        %v577 = vpop.f32.mrf.mxu0
        %v578 = vadd.f32 %v523, %v577
        %v579 = vpop.f32.mrf.mxu0
        %v580 = vpop.f32.mrf.mxu0
        %v581 = vadd.f32 %v523, %v580
        %v582 = vpop.f32.mrf.mxu0
        %583 = vmatprep.mubr.bf16.mxu0 0
        %584 = vmatmul.mubr.bf16.gmra.mxu0 %v541
        %v585 = vpop.f32.mrf.mxu0
        %v586 = vadd.f32 %v523, %v585
        %v587 = vpop.f32.mrf.mxu0
        %v588 = vpop.f32.mrf.mxu0
        %v589 = vadd.f32 %v523, %v588
        %v590 = vpop.f32.mrf.mxu0
        %591 = vdwg.mxu0
        %v592 = vlaneseq
        %v593 = vshrl.u32 %v592, 7
        %v594 = vsub.s32 1, %v593
        %v595 = vrot.slane %v493, %v594
        %v600 = vunpack.c.l.b16 %v504
        %v601 = vunpack.c.l.b16 %v505
        %v602 = vunpack.c.l.b16 %v506
        %v603 = vunpack.c.l.b16 %v507
        %v604 = vpack.c.b16 %v601, %v600
        %v605 = vpack.c.b16 %v603, %v602
        %608 = vmatprep.subr.bf16.mxu0 0
        %609 = vmatpush1.bf16.msra.mxu0 0
        %610 = vmatprep.subr.bf16.mxu0 0
        %611 = vmatpush1.bf16.msra.mxu0 0
        %612 = vmatprep.subr.bf16.mxu0 0
        %613 = vmatpush1.bf16.msra.mxu0 0
        %614 = vmatprep.subr.bf16.mxu0 0
        %615 = vmatpush1.bf16.msra.mxu0 0
        %616 = vmatprep.subr.bf16.mxu0 0
        %617 = vmatpush1.bf16.msra.mxu0 0
        %618 = vmatprep.subr.bf16.mxu0 0
        %619 = vmatpush1.bf16.msra.mxu0 0
        %620 = vmatprep.subr.bf16.mxu0 0
        %621 = vmatpush1.bf16.msra.mxu0 %v605
        %622 = vmatprep.subr.bf16.mxu0 0
        %623 = vmatpush1.bf16.msra.mxu0 %v604
        %624 = vmatprep.subr.bf16.mxu0 0
        %625 = vmatpush2.bf16.msra.mxu0 0
        %626 = vmatprep.subr.bf16.mxu0 0
        %627 = vmatpush2.bf16.msra.mxu0 0
        %628 = vmatprep.subr.bf16.mxu0 0
        %629 = vmatpush2.bf16.msra.mxu0 0
        %630 = vmatprep.subr.bf16.mxu0 0
        %631 = vmatpush2.bf16.msra.mxu0 0
        %632 = vmatprep.subr.bf16.mxu0 0
        %633 = vmatpush2.bf16.msra.mxu0 0
        %634 = vmatprep.subr.bf16.mxu0 0
        %635 = vmatpush2.bf16.msra.mxu0 0
        %636 = vmatprep.subr.bf16.mxu0 0
        %637 = vmatpush2.bf16.msra.mxu0 0
        %638 = vmatprep.subr.bf16.mxu0 0
        %639 = vmatpush2.bf16.msra.mxu0 0
        %640 = vmatprep.mubr.bf16.mxu0 0
        %641 = vmatmul.mubr.bf16.gmra.mxu0 %v538
        %v642 = vpop.f32.mrf.mxu0
        %v643 = vadd.f32 %v595, %v642
        %v644 = vpop.f32.mrf.mxu0
        %v645 = vpop.f32.mrf.mxu0
        %v646 = vadd.f32 %v595, %v645
        %v647 = vpop.f32.mrf.mxu0
        %648 = vmatprep.mubr.bf16.mxu0 0
        %649 = vmatmul.mubr.bf16.gmra.mxu0 %v541
        %v650 = vpop.f32.mrf.mxu0
        %v651 = vadd.f32 %v595, %v650
        %v652 = vpop.f32.mrf.mxu0
        %v653 = vpop.f32.mrf.mxu0
        %v654 = vadd.f32 %v595, %v653
        %v655 = vpop.f32.mrf.mxu0
        %656 = vdwg.mxu0
        %v657 = vpack.c.bf16 %v482, %v481
        %v658 = vpack.c.bf16 %v484, %v483
        %v659 = vlaneseq
        %v660 = vshrl.u32 %v659, 7
        %v661 = vsub.s32 2, %v660
        %v662 = vrot.slane %v493, %v661
        %v667 = vunpack.c.l.b16 %v509
        %v668 = vunpack.c.l.b16 %v510
        %v669 = vunpack.c.l.b16 %v511
        %v670 = vunpack.c.l.b16 %v512
        %v671 = vpack.c.b16 %v668, %v667
        %v672 = vpack.c.b16 %v670, %v669
        %v676 = vsel %vm536, %v657, 0
        %v679 = vsel %vm536, %v658, 0
        %681 = vmatprep.subr.bf16.mxu0 0
        %682 = vmatpush1.bf16.msra.mxu0 0
        %683 = vmatprep.subr.bf16.mxu0 0
        %684 = vmatpush1.bf16.msra.mxu0 0
        %685 = vmatprep.subr.bf16.mxu0 0
        %686 = vmatpush1.bf16.msra.mxu0 0
        %687 = vmatprep.subr.bf16.mxu0 0
        %688 = vmatpush1.bf16.msra.mxu0 0
        %689 = vmatprep.subr.bf16.mxu0 0
        %690 = vmatpush1.bf16.msra.mxu0 0
        %691 = vmatprep.subr.bf16.mxu0 0
        %692 = vmatpush1.bf16.msra.mxu0 0
        %693 = vmatprep.subr.bf16.mxu0 0
        %694 = vmatpush1.bf16.msra.mxu0 %v672
        %695 = vmatprep.subr.bf16.mxu0 0
        %696 = vmatpush1.bf16.msra.mxu0 %v671
        %697 = vmatprep.subr.bf16.mxu0 0
        %698 = vmatpush2.bf16.msra.mxu0 0
        %699 = vmatprep.subr.bf16.mxu0 0
        %700 = vmatpush2.bf16.msra.mxu0 0
        %701 = vmatprep.subr.bf16.mxu0 0
        %702 = vmatpush2.bf16.msra.mxu0 0
        %703 = vmatprep.subr.bf16.mxu0 0
        %704 = vmatpush2.bf16.msra.mxu0 0
        %705 = vmatprep.subr.bf16.mxu0 0
        %706 = vmatpush2.bf16.msra.mxu0 0
        %707 = vmatprep.subr.bf16.mxu0 0
        %708 = vmatpush2.bf16.msra.mxu0 0
        %709 = vmatprep.subr.bf16.mxu0 0
        %710 = vmatpush2.bf16.msra.mxu0 0
        %711 = vmatprep.subr.bf16.mxu0 0
        %712 = vmatpush2.bf16.msra.mxu0 0
        %713 = vmatprep.mubr.bf16.mxu0 0
        %714 = vmatmul.mubr.bf16.gmra.mxu0 %v676
        %v715 = vpop.f32.mrf.mxu0
        %v716 = vadd.f32 %v662, %v715
        %v717 = vpop.f32.mrf.mxu0
        %v718 = vpop.f32.mrf.mxu0
        %v719 = vadd.f32 %v662, %v718
        %v720 = vpop.f32.mrf.mxu0
        %721 = vmatprep.mubr.bf16.mxu0 0
        %722 = vmatmul.mubr.bf16.gmra.mxu0 %v679
        %v723 = vpop.f32.mrf.mxu0
        %v724 = vadd.f32 %v662, %v723
        %v725 = vpop.f32.mrf.mxu0
        %v726 = vpop.f32.mrf.mxu0
        %v727 = vadd.f32 %v662, %v726
        %v728 = vpop.f32.mrf.mxu0
        %729 = vdwg.mxu0
        %v730 = vmul.f32 %v578, 0.35355338
        %v731 = vmul.f32 %v581, 0.35355338
        %v732 = vmul.f32 %v586, 0.35355338
        %v733 = vmul.f32 %v589, 0.35355338
        %v734 = vpack.c.bf16 %v731, %v730
        %v735 = vpack.c.bf16 %v733, %v732
        %v736 = vpack.c.bf16 %v646, %v643
        %v737 = vpack.c.bf16 %v654, %v651
        %v738 = vpack.c.bf16 %v719, %v716
        %v739 = vpack.c.bf16 %v727, %v724
        %v740 = vld [vmem:[%s4] sm:$0x1]
        %v742 = vlaneseq
        %v743 = vshrl.u32 %v742, 7
        %v744 = vsub.s32 0, %v743
        %v745 = vrot.slane %v740, %v744
        %vm747 = vcmask 64512
        %v749 = vsel %vm747, %v734, 0
        %v752 = vsel %vm747, %v736, 0
        %754 = vmatprep.subr.bf16.mxu0 0
        %755 = vmatpush1.bf16.xpose.msra.mxu0 0
        %756 = vmatprep.subr.bf16.mxu0 0
        %757 = vmatpush1.bf16.xpose.msra.mxu0 0
        %758 = vmatprep.subr.bf16.mxu0 0
        %759 = vmatpush1.bf16.xpose.msra.mxu0 0
        %760 = vmatprep.subr.bf16.mxu0 0
        %761 = vmatpush1.bf16.xpose.msra.mxu0 0
        %762 = vmatprep.subr.bf16.mxu0 0
        %763 = vmatpush1.bf16.xpose.msra.mxu0 0
        %764 = vmatprep.subr.bf16.mxu0 0
        %765 = vmatpush1.bf16.xpose.msra.mxu0 0
        %766 = vmatprep.subr.bf16.mxu0 0
        %767 = vmatpush1.bf16.xpose.msra.mxu0 0
        %768 = vmatprep.subr.bf16.mxu0 0
        %769 = vmatpush1.bf16.xpose.msra.mxu0 %v752
        %770 = vmatprep.subr.bf16.mxu0 0
        %771 = vmatpush2.bf16.xpose.msra.mxu0 0
        %772 = vmatprep.subr.bf16.mxu0 0
        %773 = vmatpush2.bf16.xpose.msra.mxu0 0
        %774 = vmatprep.subr.bf16.mxu0 0
        %775 = vmatpush2.bf16.xpose.msra.mxu0 0
        %776 = vmatprep.subr.bf16.mxu0 0
        %777 = vmatpush2.bf16.xpose.msra.mxu0 0
        %778 = vmatprep.subr.bf16.mxu0 0
        %779 = vmatpush2.bf16.xpose.msra.mxu0 0
        %780 = vmatprep.subr.bf16.mxu0 0
        %781 = vmatpush2.bf16.xpose.msra.mxu0 0
        %782 = vmatprep.subr.bf16.mxu0 0
        %783 = vmatpush2.bf16.xpose.msra.mxu0 0
        %784 = vmatprep.subr.bf16.mxu0 0
        %785 = vmatpush2.bf16.xpose.msra.mxu0 0
        %786 = vmatprep.mubr.bf16.mxu0 0
        %787 = vmatmul.mubr.bf16.gmra.mxu0 %v749
        %v788 = vpop.f32.mrf.mxu0
        %v789 = vadd.f32 %v745, %v788
        %v790 = vpop.f32.mrf.mxu0
        %v791 = vpop.f32.mrf.mxu0
        %v792 = vadd.f32 %v745, %v791
        %v793 = vpop.f32.mrf.mxu0
        %794 = vdwg.mxu0
        %vm795 = vcmask 130048
        %v796 = vsel %vm795, %v789, -inf
        %797 = vmax.xlane.f32.xlu0 %v796
        %v798 = vpop.xlane.xlu0 %797
        %v799 = vsel %vm795, %v792, -inf
        %800 = vmax.xlane.f32.xlu0 %v799
        %v801 = vpop.xlane.xlu0 %800
        %v802 = vsub.f32 %v789, %v798
        %v803 = vsub.f32 %v792, %v801
        %v804 = vmul.f32 %v802, 1.442695
        %v805 = vpow.pop %v804
        %v806 = vmul.f32 %v803, 1.442695
        %v807 = vpow.pop %v806
        %v808 = vsel %vm795, %v805, 0.0
        %809 = vadd.xlane.f32.xlu0 %v808
        %v810 = vpop.xlane.xlu0 %809
        %v811 = vsel %vm795, %v807, 0.0
        %812 = vadd.xlane.f32.xlu0 %v811
        %v813 = vpop.xlane.xlu0 %812
        %v814 = vrcp.pop %v810
        %v815 = vmul.f32 %v805, %v814
        %v816 = vrcp.pop %v813
        %v817 = vmul.f32 %v807, %v816
        %v818 = vpack.c.bf16 %v817, %v815
        %v820 = vsel %vm795, %v818, 0
        %822 = vmatprep.subr.bf16.mxu0 0
        %823 = vmatpush1.bf16.msra.mxu0 0
        %824 = vmatprep.subr.bf16.mxu0 0
        %825 = vmatpush1.bf16.msra.mxu0 0
        %826 = vmatprep.subr.bf16.mxu0 0
        %827 = vmatpush1.bf16.msra.mxu0 0
        %828 = vmatprep.subr.bf16.mxu0 0
        %829 = vmatpush1.bf16.msra.mxu0 0
        %830 = vmatprep.subr.bf16.mxu0 0
        %831 = vmatpush1.bf16.msra.mxu0 0
        %832 = vmatprep.subr.bf16.mxu0 0
        %833 = vmatpush1.bf16.msra.mxu0 0
        %834 = vmatprep.subr.bf16.mxu0 0
        %835 = vmatpush1.bf16.msra.mxu0 0
        %836 = vmatprep.subr.bf16.mxu0 0
        %837 = vmatpush1.bf16.msra.mxu0 %v738
        %838 = vmatprep.subr.bf16.mxu0 0
        %839 = vmatpush2.bf16.msra.mxu0 0
        %840 = vmatprep.subr.bf16.mxu0 0
        %841 = vmatpush2.bf16.msra.mxu0 0
        %842 = vmatprep.subr.bf16.mxu0 0
        %843 = vmatpush2.bf16.msra.mxu0 0
        %844 = vmatprep.subr.bf16.mxu0 0
        %845 = vmatpush2.bf16.msra.mxu0 0
        %846 = vmatprep.subr.bf16.mxu0 0
        %847 = vmatpush2.bf16.msra.mxu0 0
        %848 = vmatprep.subr.bf16.mxu0 0
        %849 = vmatpush2.bf16.msra.mxu0 0
        %850 = vmatprep.subr.bf16.mxu0 0
        %851 = vmatpush2.bf16.msra.mxu0 0
        %852 = vmatprep.subr.bf16.mxu0 0
        %853 = vmatpush2.bf16.msra.mxu0 0
        %854 = vmatprep.mubr.bf16.mxu0 0
        %855 = vmatmul.mubr.bf16.gmra.mxu0 %v820
        %v856 = vpop.f32.mrf.mxu0
        %v857 = vadd.f32 0.0, %v856
        %v858 = vpop.f32.mrf.mxu0
        %v859 = vpop.f32.mrf.mxu0
        %v860 = vadd.f32 0.0, %v859
        %v861 = vpop.f32.mrf.mxu0
        %862 = vdwg.mxu0
        %864 = vrot.lane.b32.xlu0 %v734, 120
        %v865 = vpop.permute.xlu0 %864
        %867 = vrot.lane.b32.xlu0 %v736, 120
        %v868 = vpop.permute.xlu0 %867
        %v870 = vsel %vm747, %v865, 0
        %v873 = vsel %vm747, %v868, 0
        %875 = vmatprep.subr.bf16.mxu0 0
        %876 = vmatpush1.bf16.xpose.msra.mxu0 0
        %877 = vmatprep.subr.bf16.mxu0 0
        %878 = vmatpush1.bf16.xpose.msra.mxu0 0
        %879 = vmatprep.subr.bf16.mxu0 0
        %880 = vmatpush1.bf16.xpose.msra.mxu0 0
        %881 = vmatprep.subr.bf16.mxu0 0
        %882 = vmatpush1.bf16.xpose.msra.mxu0 0
        %883 = vmatprep.subr.bf16.mxu0 0
        %884 = vmatpush1.bf16.xpose.msra.mxu0 0
        %885 = vmatprep.subr.bf16.mxu0 0
        %886 = vmatpush1.bf16.xpose.msra.mxu0 0
        %887 = vmatprep.subr.bf16.mxu0 0
        %888 = vmatpush1.bf16.xpose.msra.mxu0 0
        %889 = vmatprep.subr.bf16.mxu0 0
        %890 = vmatpush1.bf16.xpose.msra.mxu0 %v873
        %891 = vmatprep.subr.bf16.mxu0 0
        %892 = vmatpush2.bf16.xpose.msra.mxu0 0
        %893 = vmatprep.subr.bf16.mxu0 0
        %894 = vmatpush2.bf16.xpose.msra.mxu0 0
        %895 = vmatprep.subr.bf16.mxu0 0
        %896 = vmatpush2.bf16.xpose.msra.mxu0 0
        %897 = vmatprep.subr.bf16.mxu0 0
        %898 = vmatpush2.bf16.xpose.msra.mxu0 0
        %899 = vmatprep.subr.bf16.mxu0 0
        %900 = vmatpush2.bf16.xpose.msra.mxu0 0
        %901 = vmatprep.subr.bf16.mxu0 0
        %902 = vmatpush2.bf16.xpose.msra.mxu0 0
        %903 = vmatprep.subr.bf16.mxu0 0
        %904 = vmatpush2.bf16.xpose.msra.mxu0 0
        %905 = vmatprep.subr.bf16.mxu0 0
        %906 = vmatpush2.bf16.xpose.msra.mxu0 0
        %907 = vmatprep.mubr.bf16.mxu0 0
        %908 = vmatmul.mubr.bf16.gmra.mxu0 %v870
        %v909 = vpop.f32.mrf.mxu0
        %v910 = vadd.f32 %v745, %v909
        %v911 = vpop.f32.mrf.mxu0
        %v912 = vpop.f32.mrf.mxu0
        %v913 = vadd.f32 %v745, %v912
        %v914 = vpop.f32.mrf.mxu0
        %915 = vdwg.mxu0
        %v916 = vsel %vm795, %v910, -inf
        %917 = vmax.xlane.f32.xlu0 %v916
        %v918 = vpop.xlane.xlu0 %917
        %v919 = vsel %vm795, %v913, -inf
        %920 = vmax.xlane.f32.xlu0 %v919
        %v921 = vpop.xlane.xlu0 %920
        %v922 = vsub.f32 %v910, %v918
        %v923 = vsub.f32 %v913, %v921
        %v924 = vmul.f32 %v922, 1.442695
        %v925 = vpow.pop %v924
        %v926 = vmul.f32 %v923, 1.442695
        %v927 = vpow.pop %v926
        %v928 = vsel %vm795, %v925, 0.0
        %929 = vadd.xlane.f32.xlu0 %v928
        %v930 = vpop.xlane.xlu0 %929
        %v931 = vsel %vm795, %v927, 0.0
        %932 = vadd.xlane.f32.xlu0 %v931
        %v933 = vpop.xlane.xlu0 %932
        %v934 = vrcp.pop %v930
        %v935 = vmul.f32 %v925, %v934
        %v936 = vrcp.pop %v933
        %v937 = vmul.f32 %v927, %v936
        %v938 = vpack.c.bf16 %v937, %v935
        %940 = vrot.lane.b32.xlu0 %v738, 120
        %v941 = vpop.permute.xlu0 %940
        %v944 = vsel %vm795, %v938, 0
        %946 = vmatprep.subr.bf16.mxu0 0
        %947 = vmatpush1.bf16.msra.mxu0 0
        %948 = vmatprep.subr.bf16.mxu0 0
        %949 = vmatpush1.bf16.msra.mxu0 0
        %950 = vmatprep.subr.bf16.mxu0 0
        %951 = vmatpush1.bf16.msra.mxu0 0
        %952 = vmatprep.subr.bf16.mxu0 0
        %953 = vmatpush1.bf16.msra.mxu0 0
        %954 = vmatprep.subr.bf16.mxu0 0
        %955 = vmatpush1.bf16.msra.mxu0 0
        %956 = vmatprep.subr.bf16.mxu0 0
        %957 = vmatpush1.bf16.msra.mxu0 0
        %958 = vmatprep.subr.bf16.mxu0 0
        %959 = vmatpush1.bf16.msra.mxu0 0
        %960 = vmatprep.subr.bf16.mxu0 0
        %961 = vmatpush1.bf16.msra.mxu0 %v941
        %962 = vmatprep.subr.bf16.mxu0 0
        %963 = vmatpush2.bf16.msra.mxu0 0
        %964 = vmatprep.subr.bf16.mxu0 0
        %965 = vmatpush2.bf16.msra.mxu0 0
        %966 = vmatprep.subr.bf16.mxu0 0
        %967 = vmatpush2.bf16.msra.mxu0 0
        %968 = vmatprep.subr.bf16.mxu0 0
        %969 = vmatpush2.bf16.msra.mxu0 0
        %970 = vmatprep.subr.bf16.mxu0 0
        %971 = vmatpush2.bf16.msra.mxu0 0
        %972 = vmatprep.subr.bf16.mxu0 0
        %973 = vmatpush2.bf16.msra.mxu0 0
        %974 = vmatprep.subr.bf16.mxu0 0
        %975 = vmatpush2.bf16.msra.mxu0 0
        %976 = vmatprep.subr.bf16.mxu0 0
        %977 = vmatpush2.bf16.msra.mxu0 0
        %978 = vmatprep.mubr.bf16.mxu0 0
        %979 = vmatmul.mubr.bf16.gmra.mxu0 %v944
        %v980 = vpop.f32.mrf.mxu0
        %v981 = vadd.f32 0.0, %v980
        %v982 = vpop.f32.mrf.mxu0
        %v983 = vpop.f32.mrf.mxu0
        %v984 = vadd.f32 0.0, %v983
        %v985 = vpop.f32.mrf.mxu0
        %986 = vdwg.mxu0
        %987 = vrot.lane.b32.xlu0 %v734, 112
        %v988 = vpop.permute.xlu0 %987
        %989 = vrot.lane.b32.xlu0 %v736, 112
        %v990 = vpop.permute.xlu0 %989
        %v992 = vsel %vm747, %v988, 0
        %v995 = vsel %vm747, %v990, 0
        %997 = vmatprep.subr.bf16.mxu0 0
        %998 = vmatpush1.bf16.xpose.msra.mxu0 0
        %999 = vmatprep.subr.bf16.mxu0 0
        %1000 = vmatpush1.bf16.xpose.msra.mxu0 0
        %1001 = vmatprep.subr.bf16.mxu0 0
        %1002 = vmatpush1.bf16.xpose.msra.mxu0 0
        %1003 = vmatprep.subr.bf16.mxu0 0
        %1004 = vmatpush1.bf16.xpose.msra.mxu0 0
        %1005 = vmatprep.subr.bf16.mxu0 0
        %1006 = vmatpush1.bf16.xpose.msra.mxu0 0
        %1007 = vmatprep.subr.bf16.mxu0 0
        %1008 = vmatpush1.bf16.xpose.msra.mxu0 0
        %1009 = vmatprep.subr.bf16.mxu0 0
        %1010 = vmatpush1.bf16.xpose.msra.mxu0 0
        %1011 = vmatprep.subr.bf16.mxu0 0
        %1012 = vmatpush1.bf16.xpose.msra.mxu0 %v995
        %1013 = vmatprep.subr.bf16.mxu0 0
        %1014 = vmatpush2.bf16.xpose.msra.mxu0 0
        %1015 = vmatprep.subr.bf16.mxu0 0
        %1016 = vmatpush2.bf16.xpose.msra.mxu0 0
        %1017 = vmatprep.subr.bf16.mxu0 0
        %1018 = vmatpush2.bf16.xpose.msra.mxu0 0
        %1019 = vmatprep.subr.bf16.mxu0 0
        %1020 = vmatpush2.bf16.xpose.msra.mxu0 0
        %1021 = vmatprep.subr.bf16.mxu0 0
        %1022 = vmatpush2.bf16.xpose.msra.mxu0 0
        %1023 = vmatprep.subr.bf16.mxu0 0
        %1024 = vmatpush2.bf16.xpose.msra.mxu0 0
        %1025 = vmatprep.subr.bf16.mxu0 0
        %1026 = vmatpush2.bf16.xpose.msra.mxu0 0
        %1027 = vmatprep.subr.bf16.mxu0 0
        %1028 = vmatpush2.bf16.xpose.msra.mxu0 0
        %1029 = vmatprep.mubr.bf16.mxu0 0
        %1030 = vmatmul.mubr.bf16.gmra.mxu0 %v992
        %v1031 = vpop.f32.mrf.mxu0
        %v1032 = vadd.f32 %v745, %v1031
        %v1033 = vpop.f32.mrf.mxu0
        %v1034 = vpop.f32.mrf.mxu0
        %v1035 = vadd.f32 %v745, %v1034
        %v1036 = vpop.f32.mrf.mxu0
        %1037 = vdwg.mxu0
        %v1038 = vsel %vm795, %v1032, -inf
        %1039 = vmax.xlane.f32.xlu0 %v1038
        %v1040 = vpop.xlane.xlu0 %1039
        %v1041 = vsel %vm795, %v1035, -inf
        %1042 = vmax.xlane.f32.xlu0 %v1041
        %v1043 = vpop.xlane.xlu0 %1042
        %v1044 = vsub.f32 %v1032, %v1040
        %v1045 = vsub.f32 %v1035, %v1043
        %v1046 = vmul.f32 %v1044, 1.442695
        %v1047 = vpow.pop %v1046
        %v1048 = vmul.f32 %v1045, 1.442695
        %v1049 = vpow.pop %v1048
        %v1050 = vsel %vm795, %v1047, 0.0
        %1051 = vadd.xlane.f32.xlu0 %v1050
        %v1052 = vpop.xlane.xlu0 %1051
        %v1053 = vsel %vm795, %v1049, 0.0
        %1054 = vadd.xlane.f32.xlu0 %v1053
        %v1055 = vpop.xlane.xlu0 %1054
        %v1056 = vrcp.pop %v1052
        %v1057 = vmul.f32 %v1047, %v1056
        %v1058 = vrcp.pop %v1055
        %v1059 = vmul.f32 %v1049, %v1058
        %v1060 = vpack.c.bf16 %v1059, %v1057
        %1061 = vrot.lane.b32.xlu0 %v738, 112
        %v1062 = vpop.permute.xlu0 %1061
        %v1065 = vsel %vm795, %v1060, 0
        %1067 = vmatprep.subr.bf16.mxu0 0
        %1068 = vmatpush1.bf16.msra.mxu0 0
        %1069 = vmatprep.subr.bf16.mxu0 0
        %1070 = vmatpush1.bf16.msra.mxu0 0
        %1071 = vmatprep.subr.bf16.mxu0 0
        %1072 = vmatpush1.bf16.msra.mxu0 0
        %1073 = vmatprep.subr.bf16.mxu0 0
        %1074 = vmatpush1.bf16.msra.mxu0 0
        %1075 = vmatprep.subr.bf16.mxu0 0
        %1076 = vmatpush1.bf16.msra.mxu0 0
        %1077 = vmatprep.subr.bf16.mxu0 0
        %1078 = vmatpush1.bf16.msra.mxu0 0
        %1079 = vmatprep.subr.bf16.mxu0 0
        %1080 = vmatpush1.bf16.msra.mxu0 0
        %1081 = vmatprep.subr.bf16.mxu0 0
        %1082 = vmatpush1.bf16.msra.mxu0 %v1062
        %1083 = vmatprep.subr.bf16.mxu0 0
        %1084 = vmatpush2.bf16.msra.mxu0 0
        %1085 = vmatprep.subr.bf16.mxu0 0
        %1086 = vmatpush2.bf16.msra.mxu0 0
        %1087 = vmatprep.subr.bf16.mxu0 0
        %1088 = vmatpush2.bf16.msra.mxu0 0
        %1089 = vmatprep.subr.bf16.mxu0 0
        %1090 = vmatpush2.bf16.msra.mxu0 0
        %1091 = vmatprep.subr.bf16.mxu0 0
        %1092 = vmatpush2.bf16.msra.mxu0 0
        %1093 = vmatprep.subr.bf16.mxu0 0
        %1094 = vmatpush2.bf16.msra.mxu0 0
        %1095 = vmatprep.subr.bf16.mxu0 0
        %1096 = vmatpush2.bf16.msra.mxu0 0
        %1097 = vmatprep.subr.bf16.mxu0 0
        %1098 = vmatpush2.bf16.msra.mxu0 0
        %1099 = vmatprep.mubr.bf16.mxu0 0
        %1100 = vmatmul.mubr.bf16.gmra.mxu0 %v1065
        %v1101 = vpop.f32.mrf.mxu0
        %v1102 = vadd.f32 0.0, %v1101
        %v1103 = vpop.f32.mrf.mxu0
        %v1104 = vpop.f32.mrf.mxu0
        %v1105 = vadd.f32 0.0, %v1104
        %v1106 = vpop.f32.mrf.mxu0
        %1107 = vdwg.mxu0
        %1108 = vrot.lane.b32.xlu0 %v734, 104
        %v1109 = vpop.permute.xlu0 %1108
        %1110 = vrot.lane.b32.xlu0 %v736, 104
        %v1111 = vpop.permute.xlu0 %1110
        %v1113 = vsel %vm747, %v1109, 0
        %v1116 = vsel %vm747, %v1111, 0
        %1118 = vmatprep.subr.bf16.mxu0 0
        %1119 = vmatpush1.bf16.xpose.msra.mxu0 0
        %1120 = vmatprep.subr.bf16.mxu0 0
        %1121 = vmatpush1.bf16.xpose.msra.mxu0 0
        %1122 = vmatprep.subr.bf16.mxu0 0
        %1123 = vmatpush1.bf16.xpose.msra.mxu0 0
        %1124 = vmatprep.subr.bf16.mxu0 0
        %1125 = vmatpush1.bf16.xpose.msra.mxu0 0
        %1126 = vmatprep.subr.bf16.mxu0 0
        %1127 = vmatpush1.bf16.xpose.msra.mxu0 0
        %1128 = vmatprep.subr.bf16.mxu0 0
        %1129 = vmatpush1.bf16.xpose.msra.mxu0 0
        %1130 = vmatprep.subr.bf16.mxu0 0
        %1131 = vmatpush1.bf16.xpose.msra.mxu0 0
        %1132 = vmatprep.subr.bf16.mxu0 0
        %1133 = vmatpush1.bf16.xpose.msra.mxu0 %v1116
        %1134 = vmatprep.subr.bf16.mxu0 0
        %1135 = vmatpush2.bf16.xpose.msra.mxu0 0
        %1136 = vmatprep.subr.bf16.mxu0 0
        %1137 = vmatpush2.bf16.xpose.msra.mxu0 0
        %1138 = vmatprep.subr.bf16.mxu0 0
        %1139 = vmatpush2.bf16.xpose.msra.mxu0 0
        %1140 = vmatprep.subr.bf16.mxu0 0
        %1141 = vmatpush2.bf16.xpose.msra.mxu0 0
        %1142 = vmatprep.subr.bf16.mxu0 0
        %1143 = vmatpush2.bf16.xpose.msra.mxu0 0
        %1144 = vmatprep.subr.bf16.mxu0 0
        %1145 = vmatpush2.bf16.xpose.msra.mxu0 0
        %1146 = vmatprep.subr.bf16.mxu0 0
        %1147 = vmatpush2.bf16.xpose.msra.mxu0 0
        %1148 = vmatprep.subr.bf16.mxu0 0
        %1149 = vmatpush2.bf16.xpose.msra.mxu0 0
        %1150 = vmatprep.mubr.bf16.mxu0 0
        %1151 = vmatmul.mubr.bf16.gmra.mxu0 %v1113
        %v1152 = vpop.f32.mrf.mxu0
        %v1153 = vadd.f32 %v745, %v1152
        %v1154 = vpop.f32.mrf.mxu0
        %v1155 = vpop.f32.mrf.mxu0
        %v1156 = vadd.f32 %v745, %v1155
        %v1157 = vpop.f32.mrf.mxu0
        %1158 = vdwg.mxu0
        %v1159 = vsel %vm795, %v1153, -inf
        %1160 = vmax.xlane.f32.xlu0 %v1159
        %v1161 = vpop.xlane.xlu0 %1160
        %v1162 = vsel %vm795, %v1156, -inf
        %1163 = vmax.xlane.f32.xlu0 %v1162
        %v1164 = vpop.xlane.xlu0 %1163
        %v1165 = vsub.f32 %v1153, %v1161
        %v1166 = vsub.f32 %v1156, %v1164
        %v1167 = vmul.f32 %v1165, 1.442695
        %v1168 = vpow.pop %v1167
        %v1169 = vmul.f32 %v1166, 1.442695
        %v1170 = vpow.pop %v1169
        %v1171 = vsel %vm795, %v1168, 0.0
        %1172 = vadd.xlane.f32.xlu0 %v1171
        %v1173 = vpop.xlane.xlu0 %1172
        %v1174 = vsel %vm795, %v1170, 0.0
        %1175 = vadd.xlane.f32.xlu0 %v1174
        %v1176 = vpop.xlane.xlu0 %1175
        %v1177 = vrcp.pop %v1173
        %v1178 = vmul.f32 %v1168, %v1177
        %v1179 = vrcp.pop %v1176
        %v1180 = vmul.f32 %v1170, %v1179
        %v1181 = vpack.c.bf16 %v1180, %v1178
        %1182 = vrot.lane.b32.xlu0 %v738, 104
        %v1183 = vpop.permute.xlu0 %1182
        %v1186 = vsel %vm795, %v1181, 0
        %1188 = vmatprep.subr.bf16.mxu0 0
        %1189 = vmatpush1.bf16.msra.mxu0 0
        %1190 = vmatprep.subr.bf16.mxu0 0
        %1191 = vmatpush1.bf16.msra.mxu0 0
        %1192 = vmatprep.subr.bf16.mxu0 0
        %1193 = vmatpush1.bf16.msra.mxu0 0
        %1194 = vmatprep.subr.bf16.mxu0 0
        %1195 = vmatpush1.bf16.msra.mxu0 0
        %1196 = vmatprep.subr.bf16.mxu0 0
        %1197 = vmatpush1.bf16.msra.mxu0 0
        %1198 = vmatprep.subr.bf16.mxu0 0
        %1199 = vmatpush1.bf16.msra.mxu0 0
        %1200 = vmatprep.subr.bf16.mxu0 0
        %1201 = vmatpush1.bf16.msra.mxu0 0
        %1202 = vmatprep.subr.bf16.mxu0 0
        %1203 = vmatpush1.bf16.msra.mxu0 %v1183
        %1204 = vmatprep.subr.bf16.mxu0 0
        %1205 = vmatpush2.bf16.msra.mxu0 0
        %1206 = vmatprep.subr.bf16.mxu0 0
        %1207 = vmatpush2.bf16.msra.mxu0 0
        %1208 = vmatprep.subr.bf16.mxu0 0
        %1209 = vmatpush2.bf16.msra.mxu0 0
        %1210 = vmatprep.subr.bf16.mxu0 0
        %1211 = vmatpush2.bf16.msra.mxu0 0
        %1212 = vmatprep.subr.bf16.mxu0 0
        %1213 = vmatpush2.bf16.msra.mxu0 0
        %1214 = vmatprep.subr.bf16.mxu0 0
        %1215 = vmatpush2.bf16.msra.mxu0 0
        %1216 = vmatprep.subr.bf16.mxu0 0
        %1217 = vmatpush2.bf16.msra.mxu0 0
        %1218 = vmatprep.subr.bf16.mxu0 0
        %1219 = vmatpush2.bf16.msra.mxu0 0
        %1220 = vmatprep.mubr.bf16.mxu0 0
        %1221 = vmatmul.mubr.bf16.gmra.mxu0 %v1186
        %v1222 = vpop.f32.mrf.mxu0
        %v1223 = vadd.f32 0.0, %v1222
        %v1224 = vpop.f32.mrf.mxu0
        %v1225 = vpop.f32.mrf.mxu0
        %v1226 = vadd.f32 0.0, %v1225
        %v1227 = vpop.f32.mrf.mxu0
        %1228 = vdwg.mxu0
        %1231 = vrot.lane.b32.xlu0 %v981, 8
        %v1232 = vpop.permute.xlu0 %1231
        %1233 = vrot.lane.b32.xlu0 %v984, 8
        %v1234 = vpop.permute.xlu0 %1233
        %1239 = vrot.lane.b32.xlu0 %v1102, 16
        %v1240 = vpop.permute.xlu0 %1239
        %1241 = vrot.lane.b32.xlu0 %v1105, 16
        %v1242 = vpop.permute.xlu0 %1241
        %1247 = vrot.lane.b32.xlu0 %v1223, 24
        %v1248 = vpop.permute.xlu0 %1247
        %1249 = vrot.lane.b32.xlu0 %v1226, 24
        %v1250 = vpop.permute.xlu0 %1249
        %v1253 = vsel %vm747, %v857, %v1232
        %v1254 = vsel %vm747, %v860, %v1234
        %v1255 = vsel %vm795, %v1253, %v1240
        %v1256 = vsel %vm795, %v1254, %v1242
        %vm1257 = vcmask 195584
        %v1258 = vsel %vm1257, %v1255, %v1248
        %v1259 = vsel %vm1257, %v1256, %v1250
        %s1260 = scalar_lea.vmem %s4, 1
        %v1261 = vld [vmem:[%s1260] sm:$0x1]
        %v1263 = vlaneseq
        %v1264 = vshrl.u32 %v1263, 7
        %v1265 = vsub.s32 0, %v1264
        %v1266 = vrot.slane %v1261, %v1265
        %v1269 = vsel %vm747, %v735, 0
        %v1272 = vsel %vm747, %v737, 0
        %1274 = vmatprep.subr.bf16.mxu0 0
        %1275 = vmatpush1.bf16.xpose.msra.mxu0 0
        %1276 = vmatprep.subr.bf16.mxu0 0
        %1277 = vmatpush1.bf16.xpose.msra.mxu0 0
        %1278 = vmatprep.subr.bf16.mxu0 0
        %1279 = vmatpush1.bf16.xpose.msra.mxu0 0
        %1280 = vmatprep.subr.bf16.mxu0 0
        %1281 = vmatpush1.bf16.xpose.msra.mxu0 0
        %1282 = vmatprep.subr.bf16.mxu0 0
        %1283 = vmatpush1.bf16.xpose.msra.mxu0 0
        %1284 = vmatprep.subr.bf16.mxu0 0
        %1285 = vmatpush1.bf16.xpose.msra.mxu0 0
        %1286 = vmatprep.subr.bf16.mxu0 0
        %1287 = vmatpush1.bf16.xpose.msra.mxu0 0
        %1288 = vmatprep.subr.bf16.mxu0 0
        %1289 = vmatpush1.bf16.xpose.msra.mxu0 %v1272
        %1290 = vmatprep.subr.bf16.mxu0 0
        %1291 = vmatpush2.bf16.xpose.msra.mxu0 0
        %1292 = vmatprep.subr.bf16.mxu0 0
        %1293 = vmatpush2.bf16.xpose.msra.mxu0 0
        %1294 = vmatprep.subr.bf16.mxu0 0
        %1295 = vmatpush2.bf16.xpose.msra.mxu0 0
        %1296 = vmatprep.subr.bf16.mxu0 0
        %1297 = vmatpush2.bf16.xpose.msra.mxu0 0
        %1298 = vmatprep.subr.bf16.mxu0 0
        %1299 = vmatpush2.bf16.xpose.msra.mxu0 0
        %1300 = vmatprep.subr.bf16.mxu0 0
        %1301 = vmatpush2.bf16.xpose.msra.mxu0 0
        %1302 = vmatprep.subr.bf16.mxu0 0
        %1303 = vmatpush2.bf16.xpose.msra.mxu0 0
        %1304 = vmatprep.subr.bf16.mxu0 0
        %1305 = vmatpush2.bf16.xpose.msra.mxu0 0
        %1306 = vmatprep.mubr.bf16.mxu0 0
        %1307 = vmatmul.mubr.bf16.gmra.mxu0 %v1269
        %v1308 = vpop.f32.mrf.mxu0
        %v1309 = vadd.f32 %v1266, %v1308
        %v1310 = vpop.f32.mrf.mxu0
        %v1311 = vpop.f32.mrf.mxu0
        %v1312 = vadd.f32 %v1266, %v1311
        %v1313 = vpop.f32.mrf.mxu0
        %1314 = vdwg.mxu0
        %v1315 = vsel %vm795, %v1309, -inf
        %1316 = vmax.xlane.f32.xlu0 %v1315
        %v1317 = vpop.xlane.xlu0 %1316
        %v1318 = vsel %vm795, %v1312, -inf
        %1319 = vmax.xlane.f32.xlu0 %v1318
        %v1320 = vpop.xlane.xlu0 %1319
        %v1321 = vsub.f32 %v1309, %v1317
        %v1322 = vsub.f32 %v1312, %v1320
        %v1323 = vmul.f32 %v1321, 1.442695
        %v1324 = vpow.pop %v1323
        %v1325 = vmul.f32 %v1322, 1.442695
        %v1326 = vpow.pop %v1325
        %v1327 = vsel %vm795, %v1324, 0.0
        %1328 = vadd.xlane.f32.xlu0 %v1327
        %v1329 = vpop.xlane.xlu0 %1328
        %v1330 = vsel %vm795, %v1326, 0.0
        %1331 = vadd.xlane.f32.xlu0 %v1330
        %v1332 = vpop.xlane.xlu0 %1331
        %v1333 = vrcp.pop %v1329
        %v1334 = vmul.f32 %v1324, %v1333
        %v1335 = vrcp.pop %v1332
        %v1336 = vmul.f32 %v1326, %v1335
        %v1337 = vpack.c.bf16 %v1336, %v1334
        %v1339 = vsel %vm795, %v1337, 0
        %1341 = vmatprep.subr.bf16.mxu0 0
        %1342 = vmatpush1.bf16.msra.mxu0 0
        %1343 = vmatprep.subr.bf16.mxu0 0
        %1344 = vmatpush1.bf16.msra.mxu0 0
        %1345 = vmatprep.subr.bf16.mxu0 0
        %1346 = vmatpush1.bf16.msra.mxu0 0
        %1347 = vmatprep.subr.bf16.mxu0 0
        %1348 = vmatpush1.bf16.msra.mxu0 0
        %1349 = vmatprep.subr.bf16.mxu0 0
        %1350 = vmatpush1.bf16.msra.mxu0 0
        %1351 = vmatprep.subr.bf16.mxu0 0
        %1352 = vmatpush1.bf16.msra.mxu0 0
        %1353 = vmatprep.subr.bf16.mxu0 0
        %1354 = vmatpush1.bf16.msra.mxu0 0
        %1355 = vmatprep.subr.bf16.mxu0 0
        %1356 = vmatpush1.bf16.msra.mxu0 %v739
        %1357 = vmatprep.subr.bf16.mxu0 0
        %1358 = vmatpush2.bf16.msra.mxu0 0
        %1359 = vmatprep.subr.bf16.mxu0 0
        %1360 = vmatpush2.bf16.msra.mxu0 0
        %1361 = vmatprep.subr.bf16.mxu0 0
        %1362 = vmatpush2.bf16.msra.mxu0 0
        %1363 = vmatprep.subr.bf16.mxu0 0
        %1364 = vmatpush2.bf16.msra.mxu0 0
        %1365 = vmatprep.subr.bf16.mxu0 0
        %1366 = vmatpush2.bf16.msra.mxu0 0
        %1367 = vmatprep.subr.bf16.mxu0 0
        %1368 = vmatpush2.bf16.msra.mxu0 0
        %1369 = vmatprep.subr.bf16.mxu0 0
        %1370 = vmatpush2.bf16.msra.mxu0 0
        %1371 = vmatprep.subr.bf16.mxu0 0
        %1372 = vmatpush2.bf16.msra.mxu0 0
        %1373 = vmatprep.mubr.bf16.mxu0 0
        %1374 = vmatmul.mubr.bf16.gmra.mxu0 %v1339
        %v1375 = vpop.f32.mrf.mxu0
        %v1376 = vadd.f32 0.0, %v1375
        %v1377 = vpop.f32.mrf.mxu0
        %v1378 = vpop.f32.mrf.mxu0
        %v1379 = vadd.f32 0.0, %v1378
        %v1380 = vpop.f32.mrf.mxu0
        %1381 = vdwg.mxu0
        %1383 = vrot.lane.b32.xlu0 %v735, 120
        %v1384 = vpop.permute.xlu0 %1383
        %1386 = vrot.lane.b32.xlu0 %v737, 120
        %v1387 = vpop.permute.xlu0 %1386
        %v1389 = vsel %vm747, %v1384, 0
        %v1392 = vsel %vm747, %v1387, 0
        %1394 = vmatprep.subr.bf16.mxu0 0
        %1395 = vmatpush1.bf16.xpose.msra.mxu0 0
        %1396 = vmatprep.subr.bf16.mxu0 0
        %1397 = vmatpush1.bf16.xpose.msra.mxu0 0
        %1398 = vmatprep.subr.bf16.mxu0 0
        %1399 = vmatpush1.bf16.xpose.msra.mxu0 0
        %1400 = vmatprep.subr.bf16.mxu0 0
        %1401 = vmatpush1.bf16.xpose.msra.mxu0 0
        %1402 = vmatprep.subr.bf16.mxu0 0
        %1403 = vmatpush1.bf16.xpose.msra.mxu0 0
        %1404 = vmatprep.subr.bf16.mxu0 0
        %1405 = vmatpush1.bf16.xpose.msra.mxu0 0
        %1406 = vmatprep.subr.bf16.mxu0 0
        %1407 = vmatpush1.bf16.xpose.msra.mxu0 0
        %1408 = vmatprep.subr.bf16.mxu0 0
        %1409 = vmatpush1.bf16.xpose.msra.mxu0 %v1392
        %1410 = vmatprep.subr.bf16.mxu0 0
        %1411 = vmatpush2.bf16.xpose.msra.mxu0 0
        %1412 = vmatprep.subr.bf16.mxu0 0
        %1413 = vmatpush2.bf16.xpose.msra.mxu0 0
        %1414 = vmatprep.subr.bf16.mxu0 0
        %1415 = vmatpush2.bf16.xpose.msra.mxu0 0
        %1416 = vmatprep.subr.bf16.mxu0 0
        %1417 = vmatpush2.bf16.xpose.msra.mxu0 0
        %1418 = vmatprep.subr.bf16.mxu0 0
        %1419 = vmatpush2.bf16.xpose.msra.mxu0 0
        %1420 = vmatprep.subr.bf16.mxu0 0
        %1421 = vmatpush2.bf16.xpose.msra.mxu0 0
        %1422 = vmatprep.subr.bf16.mxu0 0
        %1423 = vmatpush2.bf16.xpose.msra.mxu0 0
        %1424 = vmatprep.subr.bf16.mxu0 0
        %1425 = vmatpush2.bf16.xpose.msra.mxu0 0
        %1426 = vmatprep.mubr.bf16.mxu0 0
        %1427 = vmatmul.mubr.bf16.gmra.mxu0 %v1389
        %v1428 = vpop.f32.mrf.mxu0
        %v1429 = vadd.f32 %v1266, %v1428
        %v1430 = vpop.f32.mrf.mxu0
        %v1431 = vpop.f32.mrf.mxu0
        %v1432 = vadd.f32 %v1266, %v1431
        %v1433 = vpop.f32.mrf.mxu0
        %1434 = vdwg.mxu0
        %v1435 = vsel %vm795, %v1429, -inf
        %1436 = vmax.xlane.f32.xlu0 %v1435
        %v1437 = vpop.xlane.xlu0 %1436
        %v1438 = vsel %vm795, %v1432, -inf
        %1439 = vmax.xlane.f32.xlu0 %v1438
        %v1440 = vpop.xlane.xlu0 %1439
        %v1441 = vsub.f32 %v1429, %v1437
        %v1442 = vsub.f32 %v1432, %v1440
        %v1443 = vmul.f32 %v1441, 1.442695
        %v1444 = vpow.pop %v1443
        %v1445 = vmul.f32 %v1442, 1.442695
        %v1446 = vpow.pop %v1445
        %v1447 = vsel %vm795, %v1444, 0.0
        %1448 = vadd.xlane.f32.xlu0 %v1447
        %v1449 = vpop.xlane.xlu0 %1448
        %v1450 = vsel %vm795, %v1446, 0.0
        %1451 = vadd.xlane.f32.xlu0 %v1450
        %v1452 = vpop.xlane.xlu0 %1451
        %v1453 = vrcp.pop %v1449
        %v1454 = vmul.f32 %v1444, %v1453
        %v1455 = vrcp.pop %v1452
        %v1456 = vmul.f32 %v1446, %v1455
        %v1457 = vpack.c.bf16 %v1456, %v1454
        %1459 = vrot.lane.b32.xlu0 %v739, 120
        %v1460 = vpop.permute.xlu0 %1459
        %v1463 = vsel %vm795, %v1457, 0
        %1465 = vmatprep.subr.bf16.mxu0 0
        %1466 = vmatpush1.bf16.msra.mxu0 0
        %1467 = vmatprep.subr.bf16.mxu0 0
        %1468 = vmatpush1.bf16.msra.mxu0 0
        %1469 = vmatprep.subr.bf16.mxu0 0
        %1470 = vmatpush1.bf16.msra.mxu0 0
        %1471 = vmatprep.subr.bf16.mxu0 0
        %1472 = vmatpush1.bf16.msra.mxu0 0
        %1473 = vmatprep.subr.bf16.mxu0 0
        %1474 = vmatpush1.bf16.msra.mxu0 0
        %1475 = vmatprep.subr.bf16.mxu0 0
        %1476 = vmatpush1.bf16.msra.mxu0 0
        %1477 = vmatprep.subr.bf16.mxu0 0
        %1478 = vmatpush1.bf16.msra.mxu0 0
        %1479 = vmatprep.subr.bf16.mxu0 0
        %1480 = vmatpush1.bf16.msra.mxu0 %v1460
        %1481 = vmatprep.subr.bf16.mxu0 0
        %1482 = vmatpush2.bf16.msra.mxu0 0
        %1483 = vmatprep.subr.bf16.mxu0 0
        %1484 = vmatpush2.bf16.msra.mxu0 0
        %1485 = vmatprep.subr.bf16.mxu0 0
        %1486 = vmatpush2.bf16.msra.mxu0 0
        %1487 = vmatprep.subr.bf16.mxu0 0
        %1488 = vmatpush2.bf16.msra.mxu0 0
        %1489 = vmatprep.subr.bf16.mxu0 0
        %1490 = vmatpush2.bf16.msra.mxu0 0
        %1491 = vmatprep.subr.bf16.mxu0 0
        %1492 = vmatpush2.bf16.msra.mxu0 0
        %1493 = vmatprep.subr.bf16.mxu0 0
        %1494 = vmatpush2.bf16.msra.mxu0 0
        %1495 = vmatprep.subr.bf16.mxu0 0
        %1496 = vmatpush2.bf16.msra.mxu0 0
        %1497 = vmatprep.mubr.bf16.mxu0 0
        %1498 = vmatmul.mubr.bf16.gmra.mxu0 %v1463
        %v1499 = vpop.f32.mrf.mxu0
        %v1500 = vadd.f32 0.0, %v1499
        %v1501 = vpop.f32.mrf.mxu0
        %v1502 = vpop.f32.mrf.mxu0
        %v1503 = vadd.f32 0.0, %v1502
        %v1504 = vpop.f32.mrf.mxu0
        %1505 = vdwg.mxu0
        %1506 = vrot.lane.b32.xlu0 %v735, 112
        %v1507 = vpop.permute.xlu0 %1506
        %1508 = vrot.lane.b32.xlu0 %v737, 112
        %v1509 = vpop.permute.xlu0 %1508
        %v1511 = vsel %vm747, %v1507, 0
        %v1514 = vsel %vm747, %v1509, 0
        %1516 = vmatprep.subr.bf16.mxu0 0
        %1517 = vmatpush1.bf16.xpose.msra.mxu0 0
        %1518 = vmatprep.subr.bf16.mxu0 0
        %1519 = vmatpush1.bf16.xpose.msra.mxu0 0
        %1520 = vmatprep.subr.bf16.mxu0 0
        %1521 = vmatpush1.bf16.xpose.msra.mxu0 0
        %1522 = vmatprep.subr.bf16.mxu0 0
        %1523 = vmatpush1.bf16.xpose.msra.mxu0 0
        %1524 = vmatprep.subr.bf16.mxu0 0
        %1525 = vmatpush1.bf16.xpose.msra.mxu0 0
        %1526 = vmatprep.subr.bf16.mxu0 0
        %1527 = vmatpush1.bf16.xpose.msra.mxu0 0
        %1528 = vmatprep.subr.bf16.mxu0 0
        %1529 = vmatpush1.bf16.xpose.msra.mxu0 0
        %1530 = vmatprep.subr.bf16.mxu0 0
        %1531 = vmatpush1.bf16.xpose.msra.mxu0 %v1514
        %1532 = vmatprep.subr.bf16.mxu0 0
        %1533 = vmatpush2.bf16.xpose.msra.mxu0 0
        %1534 = vmatprep.subr.bf16.mxu0 0
        %1535 = vmatpush2.bf16.xpose.msra.mxu0 0
        %1536 = vmatprep.subr.bf16.mxu0 0
        %1537 = vmatpush2.bf16.xpose.msra.mxu0 0
        %1538 = vmatprep.subr.bf16.mxu0 0
        %1539 = vmatpush2.bf16.xpose.msra.mxu0 0
        %1540 = vmatprep.subr.bf16.mxu0 0
        %1541 = vmatpush2.bf16.xpose.msra.mxu0 0
        %1542 = vmatprep.subr.bf16.mxu0 0
        %1543 = vmatpush2.bf16.xpose.msra.mxu0 0
        %1544 = vmatprep.subr.bf16.mxu0 0
        %1545 = vmatpush2.bf16.xpose.msra.mxu0 0
        %1546 = vmatprep.subr.bf16.mxu0 0
        %1547 = vmatpush2.bf16.xpose.msra.mxu0 0
        %1548 = vmatprep.mubr.bf16.mxu0 0
        %1549 = vmatmul.mubr.bf16.gmra.mxu0 %v1511
        %v1550 = vpop.f32.mrf.mxu0
        %v1551 = vadd.f32 %v1266, %v1550
        %v1552 = vpop.f32.mrf.mxu0
        %v1553 = vpop.f32.mrf.mxu0
        %v1554 = vadd.f32 %v1266, %v1553
        %v1555 = vpop.f32.mrf.mxu0
        %1556 = vdwg.mxu0
        %v1557 = vsel %vm795, %v1551, -inf
        %1558 = vmax.xlane.f32.xlu0 %v1557
        %v1559 = vpop.xlane.xlu0 %1558
        %v1560 = vsel %vm795, %v1554, -inf
        %1561 = vmax.xlane.f32.xlu0 %v1560
        %v1562 = vpop.xlane.xlu0 %1561
        %v1563 = vsub.f32 %v1551, %v1559
        %v1564 = vsub.f32 %v1554, %v1562
        %v1565 = vmul.f32 %v1563, 1.442695
        %v1566 = vpow.pop %v1565
        %v1567 = vmul.f32 %v1564, 1.442695
        %v1568 = vpow.pop %v1567
        %v1569 = vsel %vm795, %v1566, 0.0
        %1570 = vadd.xlane.f32.xlu0 %v1569
        %v1571 = vpop.xlane.xlu0 %1570
        %v1572 = vsel %vm795, %v1568, 0.0
        %1573 = vadd.xlane.f32.xlu0 %v1572
        %v1574 = vpop.xlane.xlu0 %1573
        %v1575 = vrcp.pop %v1571
        %v1576 = vmul.f32 %v1566, %v1575
        %v1577 = vrcp.pop %v1574
        %v1578 = vmul.f32 %v1568, %v1577
        %v1579 = vpack.c.bf16 %v1578, %v1576
        %1580 = vrot.lane.b32.xlu0 %v739, 112
        %v1581 = vpop.permute.xlu0 %1580
        %v1584 = vsel %vm795, %v1579, 0
        %1586 = vmatprep.subr.bf16.mxu0 0
        %1587 = vmatpush1.bf16.msra.mxu0 0
        %1588 = vmatprep.subr.bf16.mxu0 0
        %1589 = vmatpush1.bf16.msra.mxu0 0
        %1590 = vmatprep.subr.bf16.mxu0 0
        %1591 = vmatpush1.bf16.msra.mxu0 0
        %1592 = vmatprep.subr.bf16.mxu0 0
        %1593 = vmatpush1.bf16.msra.mxu0 0
        %1594 = vmatprep.subr.bf16.mxu0 0
        %1595 = vmatpush1.bf16.msra.mxu0 0
        %1596 = vmatprep.subr.bf16.mxu0 0
        %1597 = vmatpush1.bf16.msra.mxu0 0
        %1598 = vmatprep.subr.bf16.mxu0 0
        %1599 = vmatpush1.bf16.msra.mxu0 0
        %1600 = vmatprep.subr.bf16.mxu0 0
        %1601 = vmatpush1.bf16.msra.mxu0 %v1581
        %1602 = vmatprep.subr.bf16.mxu0 0
        %1603 = vmatpush2.bf16.msra.mxu0 0
        %1604 = vmatprep.subr.bf16.mxu0 0
        %1605 = vmatpush2.bf16.msra.mxu0 0
        %1606 = vmatprep.subr.bf16.mxu0 0
        %1607 = vmatpush2.bf16.msra.mxu0 0
        %1608 = vmatprep.subr.bf16.mxu0 0
        %1609 = vmatpush2.bf16.msra.mxu0 0
        %1610 = vmatprep.subr.bf16.mxu0 0
        %1611 = vmatpush2.bf16.msra.mxu0 0
        %1612 = vmatprep.subr.bf16.mxu0 0
        %1613 = vmatpush2.bf16.msra.mxu0 0
        %1614 = vmatprep.subr.bf16.mxu0 0
        %1615 = vmatpush2.bf16.msra.mxu0 0
        %1616 = vmatprep.subr.bf16.mxu0 0
        %1617 = vmatpush2.bf16.msra.mxu0 0
        %1618 = vmatprep.mubr.bf16.mxu0 0
        %1619 = vmatmul.mubr.bf16.gmra.mxu0 %v1584
        %v1620 = vpop.f32.mrf.mxu0
        %v1621 = vadd.f32 0.0, %v1620
        %v1622 = vpop.f32.mrf.mxu0
        %v1623 = vpop.f32.mrf.mxu0
        %v1624 = vadd.f32 0.0, %v1623
        %v1625 = vpop.f32.mrf.mxu0
        %1626 = vdwg.mxu0
        %1627 = vrot.lane.b32.xlu0 %v735, 104
        %v1628 = vpop.permute.xlu0 %1627
        %1629 = vrot.lane.b32.xlu0 %v737, 104
        %v1630 = vpop.permute.xlu0 %1629
        %v1632 = vsel %vm747, %v1628, 0
        %v1635 = vsel %vm747, %v1630, 0
        %1637 = vmatprep.subr.bf16.mxu0 0
        %1638 = vmatpush1.bf16.xpose.msra.mxu0 0
        %1639 = vmatprep.subr.bf16.mxu0 0
        %1640 = vmatpush1.bf16.xpose.msra.mxu0 0
        %1641 = vmatprep.subr.bf16.mxu0 0
        %1642 = vmatpush1.bf16.xpose.msra.mxu0 0
        %1643 = vmatprep.subr.bf16.mxu0 0
        %1644 = vmatpush1.bf16.xpose.msra.mxu0 0
        %1645 = vmatprep.subr.bf16.mxu0 0
        %1646 = vmatpush1.bf16.xpose.msra.mxu0 0
        %1647 = vmatprep.subr.bf16.mxu0 0
        %1648 = vmatpush1.bf16.xpose.msra.mxu0 0
        %1649 = vmatprep.subr.bf16.mxu0 0
        %1650 = vmatpush1.bf16.xpose.msra.mxu0 0
        %1651 = vmatprep.subr.bf16.mxu0 0
        %1652 = vmatpush1.bf16.xpose.msra.mxu0 %v1635
        %1653 = vmatprep.subr.bf16.mxu0 0
        %1654 = vmatpush2.bf16.xpose.msra.mxu0 0
        %1655 = vmatprep.subr.bf16.mxu0 0
        %1656 = vmatpush2.bf16.xpose.msra.mxu0 0
        %1657 = vmatprep.subr.bf16.mxu0 0
        %1658 = vmatpush2.bf16.xpose.msra.mxu0 0
        %1659 = vmatprep.subr.bf16.mxu0 0
        %1660 = vmatpush2.bf16.xpose.msra.mxu0 0
        %1661 = vmatprep.subr.bf16.mxu0 0
        %1662 = vmatpush2.bf16.xpose.msra.mxu0 0
        %1663 = vmatprep.subr.bf16.mxu0 0
        %1664 = vmatpush2.bf16.xpose.msra.mxu0 0
        %1665 = vmatprep.subr.bf16.mxu0 0
        %1666 = vmatpush2.bf16.xpose.msra.mxu0 0
        %1667 = vmatprep.subr.bf16.mxu0 0
        %1668 = vmatpush2.bf16.xpose.msra.mxu0 0
        %1669 = vmatprep.mubr.bf16.mxu0 0
        %1670 = vmatmul.mubr.bf16.gmra.mxu0 %v1632
        %v1671 = vpop.f32.mrf.mxu0
        %v1672 = vadd.f32 %v1266, %v1671
        %v1673 = vpop.f32.mrf.mxu0
        %v1674 = vpop.f32.mrf.mxu0
        %v1675 = vadd.f32 %v1266, %v1674
        %v1676 = vpop.f32.mrf.mxu0
        %1677 = vdwg.mxu0
        %v1678 = vsel %vm795, %v1672, -inf
        %1679 = vmax.xlane.f32.xlu0 %v1678
        %v1680 = vpop.xlane.xlu0 %1679
        %v1681 = vsel %vm795, %v1675, -inf
        %1682 = vmax.xlane.f32.xlu0 %v1681
        %v1683 = vpop.xlane.xlu0 %1682
        %v1684 = vsub.f32 %v1672, %v1680
        %v1685 = vsub.f32 %v1675, %v1683
        %v1686 = vmul.f32 %v1684, 1.442695
        %v1687 = vpow.pop %v1686
        %v1688 = vmul.f32 %v1685, 1.442695
        %v1689 = vpow.pop %v1688
        %v1690 = vsel %vm795, %v1687, 0.0
        %1691 = vadd.xlane.f32.xlu0 %v1690
        %v1692 = vpop.xlane.xlu0 %1691
        %v1693 = vsel %vm795, %v1689, 0.0
        %1694 = vadd.xlane.f32.xlu0 %v1693
        %v1695 = vpop.xlane.xlu0 %1694
        %v1696 = vrcp.pop %v1692
        %v1697 = vmul.f32 %v1687, %v1696
        %v1698 = vrcp.pop %v1695
        %v1699 = vmul.f32 %v1689, %v1698
        %v1700 = vpack.c.bf16 %v1699, %v1697
        %1701 = vrot.lane.b32.xlu0 %v739, 104
        %v1702 = vpop.permute.xlu0 %1701
        %v1705 = vsel %vm795, %v1700, 0
        %1707 = vmatprep.subr.bf16.mxu0 0
        %1708 = vmatpush1.bf16.msra.mxu0 0
        %1709 = vmatprep.subr.bf16.mxu0 0
        %1710 = vmatpush1.bf16.msra.mxu0 0
        %1711 = vmatprep.subr.bf16.mxu0 0
        %1712 = vmatpush1.bf16.msra.mxu0 0
        %1713 = vmatprep.subr.bf16.mxu0 0
        %1714 = vmatpush1.bf16.msra.mxu0 0
        %1715 = vmatprep.subr.bf16.mxu0 0
        %1716 = vmatpush1.bf16.msra.mxu0 0
        %1717 = vmatprep.subr.bf16.mxu0 0
        %1718 = vmatpush1.bf16.msra.mxu0 0
        %1719 = vmatprep.subr.bf16.mxu0 0
        %1720 = vmatpush1.bf16.msra.mxu0 0
        %1721 = vmatprep.subr.bf16.mxu0 0
        %1722 = vmatpush1.bf16.msra.mxu0 %v1702
        %1723 = vmatprep.subr.bf16.mxu0 0
        %1724 = vmatpush2.bf16.msra.mxu0 0
        %1725 = vmatprep.subr.bf16.mxu0 0
        %1726 = vmatpush2.bf16.msra.mxu0 0
        %1727 = vmatprep.subr.bf16.mxu0 0
        %1728 = vmatpush2.bf16.msra.mxu0 0
        %1729 = vmatprep.subr.bf16.mxu0 0
        %1730 = vmatpush2.bf16.msra.mxu0 0
        %1731 = vmatprep.subr.bf16.mxu0 0
        %1732 = vmatpush2.bf16.msra.mxu0 0
        %1733 = vmatprep.subr.bf16.mxu0 0
        %1734 = vmatpush2.bf16.msra.mxu0 0
        %1735 = vmatprep.subr.bf16.mxu0 0
        %1736 = vmatpush2.bf16.msra.mxu0 0
        %1737 = vmatprep.subr.bf16.mxu0 0
        %1738 = vmatpush2.bf16.msra.mxu0 0
        %1739 = vmatprep.mubr.bf16.mxu0 0
        %1740 = vmatmul.mubr.bf16.gmra.mxu0 %v1705
        %v1741 = vpop.f32.mrf.mxu0
        %v1742 = vadd.f32 0.0, %v1741
        %v1743 = vpop.f32.mrf.mxu0
        %v1744 = vpop.f32.mrf.mxu0
        %v1745 = vadd.f32 0.0, %v1744
        %v1746 = vpop.f32.mrf.mxu0
        %1747 = vdwg.mxu0
        %1750 = vrot.lane.b32.xlu0 %v1500, 8
        %v1751 = vpop.permute.xlu0 %1750
        %1752 = vrot.lane.b32.xlu0 %v1503, 8
        %v1753 = vpop.permute.xlu0 %1752
        %1758 = vrot.lane.b32.xlu0 %v1621, 16
        %v1759 = vpop.permute.xlu0 %1758
        %1760 = vrot.lane.b32.xlu0 %v1624, 16
        %v1761 = vpop.permute.xlu0 %1760
        %1766 = vrot.lane.b32.xlu0 %v1742, 24
        %v1767 = vpop.permute.xlu0 %1766
        %1768 = vrot.lane.b32.xlu0 %v1745, 24
        %v1769 = vpop.permute.xlu0 %1768
        %v1772 = vsel %vm747, %v1376, %v1751
        %v1773 = vsel %vm747, %v1379, %v1753
        %v1774 = vsel %vm795, %v1772, %v1759
        %v1775 = vsel %vm795, %v1773, %v1761
        %v1776 = vsel %vm1257, %v1774, %v1767
        %v1777 = vsel %vm1257, %v1775, %v1769
        %v1778 = vpack.c.bf16 %v1259, %v1258
        %v1779 = vpack.c.bf16 %v1777, %v1776
        %v1780 = vlaneseq
        %v1781 = vshrl.u32 %v1780, 7
        %v1782 = vsub.s32 3, %v1781
        %v1783 = vrot.slane %v493, %v1782
        %v1788 = vunpack.c.l.b16 %v514
        %v1789 = vunpack.c.l.b16 %v515
        %v1790 = vunpack.c.l.b16 %v516
        %v1791 = vunpack.c.l.b16 %v517
        %v1792 = vpack.c.b16 %v1789, %v1788
        %v1793 = vpack.c.b16 %v1791, %v1790
        %v1797 = vsel %vm536, %v1778, 0
        %v1800 = vsel %vm536, %v1779, 0
        %1802 = vmatprep.subr.bf16.mxu0 0
        %1803 = vmatpush1.bf16.msra.mxu0 0
        %1804 = vmatprep.subr.bf16.mxu0 0
        %1805 = vmatpush1.bf16.msra.mxu0 0
        %1806 = vmatprep.subr.bf16.mxu0 0
        %1807 = vmatpush1.bf16.msra.mxu0 0
        %1808 = vmatprep.subr.bf16.mxu0 0
        %1809 = vmatpush1.bf16.msra.mxu0 0
        %1810 = vmatprep.subr.bf16.mxu0 0
        %1811 = vmatpush1.bf16.msra.mxu0 0
        %1812 = vmatprep.subr.bf16.mxu0 0
        %1813 = vmatpush1.bf16.msra.mxu0 0
        %1814 = vmatprep.subr.bf16.mxu0 0
        %1815 = vmatpush1.bf16.msra.mxu0 %v1793
        %1816 = vmatprep.subr.bf16.mxu0 0
        %1817 = vmatpush1.bf16.msra.mxu0 %v1792
        %1818 = vmatprep.subr.bf16.mxu0 0
        %1819 = vmatpush2.bf16.msra.mxu0 0
        %1820 = vmatprep.subr.bf16.mxu0 0
        %1821 = vmatpush2.bf16.msra.mxu0 0
        %1822 = vmatprep.subr.bf16.mxu0 0
        %1823 = vmatpush2.bf16.msra.mxu0 0
        %1824 = vmatprep.subr.bf16.mxu0 0
        %1825 = vmatpush2.bf16.msra.mxu0 0
        %1826 = vmatprep.subr.bf16.mxu0 0
        %1827 = vmatpush2.bf16.msra.mxu0 0
        %1828 = vmatprep.subr.bf16.mxu0 0
        %1829 = vmatpush2.bf16.msra.mxu0 0
        %1830 = vmatprep.subr.bf16.mxu0 0
        %1831 = vmatpush2.bf16.msra.mxu0 0
        %1832 = vmatprep.subr.bf16.mxu0 0
        %1833 = vmatpush2.bf16.msra.mxu0 0
        %1834 = vmatprep.mubr.bf16.mxu0 0
        %1835 = vmatmul.mubr.bf16.gmra.mxu0 %v1797
        %v1836 = vpop.f32.mrf.mxu0
        %v1837 = vadd.f32 %v1783, %v1836
        %v1838 = vpop.f32.mrf.mxu0
        %v1839 = vpop.f32.mrf.mxu0
        %v1840 = vadd.f32 %v1783, %v1839
        %v1841 = vpop.f32.mrf.mxu0
        %1842 = vmatprep.mubr.bf16.mxu0 0
        %1843 = vmatmul.mubr.bf16.gmra.mxu0 %v1800
        %v1844 = vpop.f32.mrf.mxu0
        %v1845 = vadd.f32 %v1783, %v1844
        %v1846 = vpop.f32.mrf.mxu0
        %v1847 = vpop.f32.mrf.mxu0
        %v1848 = vadd.f32 %v1783, %v1847
        %v1849 = vpop.f32.mrf.mxu0
        %1850 = vdwg.mxu0
        %v1851 = vadd.f32 %v481, %v1837
        %v1852 = vadd.f32 %v482, %v1840
        %v1853 = vadd.f32 %v483, %v1845
        %v1854 = vadd.f32 %v484, %v1848
        %v1855 = vsel %vm536, %v1851, 0.0
        %1856 = vadd.xlane.f32.xlu0 %v1855
        %v1857 = vpop.xlane.xlu0 %1856
        %v1858 = vsel %vm536, %v1852, 0.0
        %1859 = vadd.xlane.f32.xlu0 %v1858
        %v1860 = vpop.xlane.xlu0 %1859
        %v1861 = vsel %vm536, %v1853, 0.0
        %1862 = vadd.xlane.f32.xlu0 %v1861
        %v1863 = vpop.xlane.xlu0 %1862
        %v1864 = vsel %vm536, %v1854, 0.0
        %1865 = vadd.xlane.f32.xlu0 %v1864
        %v1866 = vpop.xlane.xlu0 %1865
        %v1867 = vrcp.pop 32.0
        %v1868 = vmul.f32 %v1857, %v1867
        %v1869 = vmul.f32 %v1860, %v1867
        %v1870 = vmul.f32 %v1863, %v1867
        %v1871 = vmul.f32 %v1866, %v1867
        %v1872 = vsub.f32 %v1851, %v1868
        %v1873 = vsub.f32 %v1852, %v1869
        %v1874 = vsub.f32 %v1853, %v1870
        %v1875 = vsub.f32 %v1854, %v1871
        %v1876 = vmul.f32 %v1872, %v1872
        %v1877 = vmul.f32 %v1873, %v1873
        %v1878 = vmul.f32 %v1874, %v1874
        %v1879 = vmul.f32 %v1875, %v1875
        %v1880 = vsel %vm536, %v1876, 0.0
        %1881 = vadd.xlane.f32.xlu0 %v1880
        %v1882 = vpop.xlane.xlu0 %1881
        %v1883 = vsel %vm536, %v1877, 0.0
        %1884 = vadd.xlane.f32.xlu0 %v1883
        %v1885 = vpop.xlane.xlu0 %1884
        %v1886 = vsel %vm536, %v1878, 0.0
        %1887 = vadd.xlane.f32.xlu0 %v1886
        %v1888 = vpop.xlane.xlu0 %1887
        %v1889 = vsel %vm536, %v1879, 0.0
        %1890 = vadd.xlane.f32.xlu0 %v1889
        %v1891 = vpop.xlane.xlu0 %1890
        %v1892 = vmul.f32 %v1882, %v1867
        %v1893 = vmul.f32 %v1885, %v1867
        %v1894 = vmul.f32 %v1888, %v1867
        %v1895 = vmul.f32 %v1891, %v1867
        %v1896 = vadd.f32 %v1892, 1e-05
        %v1897 = vadd.f32 %v1893, 1e-05
        %v1898 = vadd.f32 %v1894, 1e-05
        %v1899 = vadd.f32 %v1895, 1e-05
        %v1900 = vrsqrt.pop %v1896
        %v1901 = vrsqrt.pop %v1897
        %v1902 = vrsqrt.pop %v1898
        %v1903 = vrsqrt.pop %v1899
        %v1904 = vmul.f32 %v1872, %v1900
        %v1905 = vmul.f32 %v1873, %v1901
        %v1906 = vmul.f32 %v1874, %v1902
        %v1907 = vmul.f32 %v1875, %v1903
        %v1908 = vlaneseq
        %v1909 = vshrl.u32 %v1908, 7
        %v1910 = vsub.s32 0, %v1909
        %v1911 = vrot.slane %v494, %v1910
        %v1912 = vmul.f32 %v1904, %v1911
        %v1913 = vmul.f32 %v1905, %v1911
        %v1914 = vmul.f32 %v1906, %v1911
        %v1915 = vmul.f32 %v1907, %v1911
        %v1916 = vlaneseq
        %v1917 = vshrl.u32 %v1916, 7
        %v1918 = vsub.s32 1, %v1917
        %v1919 = vrot.slane %v494, %v1918
        %v1920 = vadd.f32 %v1912, %v1919
        %v1921 = vadd.f32 %v1913, %v1919
        %v1922 = vadd.f32 %v1914, %v1919
        %v1923 = vadd.f32 %v1915, %v1919
        %v1924 = vadd.f32 %v1920, %v485
        %v1925 = vadd.f32 %v1921, %v486
        %v1926 = vadd.f32 %v1922, %v487
        %v1927 = vadd.f32 %v1923, %v488
        %v1928 = vadd.f32 %v489, %v491
        %v1929 = vadd.f32 %v490, %v492
        %s1930 = scalar_lea.vmem %s397, 64 [#allocation3]
        %v1931 = vld [vmem:[%s1930] sm:$0xf]
        %v1932 = vld [vmem:[%s1930 + $0x4] sm:$0xf]
        %v1933 = vld [vmem:[%s1930 + $0x8] sm:$0xf]
        %v1934 = vld [vmem:[%s1930 + $0xc] sm:$0xf]
        %s1935 = scalar_lea.vmem %s397, 80 [#allocation3]
        %v1936 = vld [vmem:[%s1935] sm:$0xf]
        %v1937 = vld [vmem:[%s1935 + $0x4] sm:$0xf]
        %v1938 = vld [vmem:[%s1935 + $0x8] sm:$0xf]
        %v1939 = vld [vmem:[%s1935 + $0xc] sm:$0xf]
        %s1940 = scalar_lea.vmem %s397, 96 [#allocation3]
        %v1941 = vld [vmem:[%s1940] sm:$0xf]
        %v1942 = vld [vmem:[%s1940 + $0x4] sm:$0xf]
        %v1943 = vld [vmem:[%s1940 + $0x8] sm:$0xf]
        %v1944 = vld [vmem:[%s1940 + $0xc] sm:$0xf]
        %s1945 = scalar_lea.vmem %s397, 112 [#allocation3]
        %v1946 = vld [vmem:[%s1945] sm:$0xf]
        %v1947 = vld [vmem:[%s1945 + $0x4] sm:$0xf]
        %v1948 = vld [vmem:[%s1945 + $0x8] sm:$0xf]
        %v1949 = vld [vmem:[%s1945 + $0xc] sm:$0xf]
        %v1950 = vpack.c.bf16 %v1925, %v1924
        %v1951 = vpack.c.bf16 %v1927, %v1926
        %v1952 = vlaneseq
        %v1953 = vshrl.u32 %v1952, 7
        %v1954 = vsub.s32 4, %v1953
        %v1955 = vrot.slane %v493, %v1954
        %v1960 = vunpack.c.l.b16 %v1931
        %v1961 = vunpack.c.l.b16 %v1932
        %v1962 = vunpack.c.l.b16 %v1933
        %v1963 = vunpack.c.l.b16 %v1934
        %v1964 = vpack.c.b16 %v1961, %v1960
        %v1965 = vpack.c.b16 %v1963, %v1962
        %v1969 = vsel %vm536, %v1950, 0
        %v1972 = vsel %vm536, %v1951, 0
        %1974 = vmatprep.subr.bf16.mxu0 0
        %1975 = vmatpush1.bf16.msra.mxu0 0
        %1976 = vmatprep.subr.bf16.mxu0 0
        %1977 = vmatpush1.bf16.msra.mxu0 0
        %1978 = vmatprep.subr.bf16.mxu0 0
        %1979 = vmatpush1.bf16.msra.mxu0 0
        %1980 = vmatprep.subr.bf16.mxu0 0
        %1981 = vmatpush1.bf16.msra.mxu0 0
        %1982 = vmatprep.subr.bf16.mxu0 0
        %1983 = vmatpush1.bf16.msra.mxu0 0
        %1984 = vmatprep.subr.bf16.mxu0 0
        %1985 = vmatpush1.bf16.msra.mxu0 0
        %1986 = vmatprep.subr.bf16.mxu0 0
        %1987 = vmatpush1.bf16.msra.mxu0 %v1965
        %1988 = vmatprep.subr.bf16.mxu0 0
        %1989 = vmatpush1.bf16.msra.mxu0 %v1964
        %1990 = vmatprep.subr.bf16.mxu0 0
        %1991 = vmatpush2.bf16.msra.mxu0 0
        %1992 = vmatprep.subr.bf16.mxu0 0
        %1993 = vmatpush2.bf16.msra.mxu0 0
        %1994 = vmatprep.subr.bf16.mxu0 0
        %1995 = vmatpush2.bf16.msra.mxu0 0
        %1996 = vmatprep.subr.bf16.mxu0 0
        %1997 = vmatpush2.bf16.msra.mxu0 0
        %1998 = vmatprep.subr.bf16.mxu0 0
        %1999 = vmatpush2.bf16.msra.mxu0 0
        %2000 = vmatprep.subr.bf16.mxu0 0
        %2001 = vmatpush2.bf16.msra.mxu0 0
        %2002 = vmatprep.subr.bf16.mxu0 0
        %2003 = vmatpush2.bf16.msra.mxu0 0
        %2004 = vmatprep.subr.bf16.mxu0 0
        %2005 = vmatpush2.bf16.msra.mxu0 0
        %2006 = vmatprep.mubr.bf16.mxu0 0
        %2007 = vmatmul.mubr.bf16.gmra.mxu0 %v1969
        %v2008 = vpop.f32.mrf.mxu0
        %v2009 = vadd.f32 %v1955, %v2008
        %v2010 = vpop.f32.mrf.mxu0
        %v2011 = vpop.f32.mrf.mxu0
        %v2012 = vadd.f32 %v1955, %v2011
        %v2013 = vpop.f32.mrf.mxu0
        %2014 = vmatprep.mubr.bf16.mxu0 0
        %2015 = vmatmul.mubr.bf16.gmra.mxu0 %v1972
        %v2016 = vpop.f32.mrf.mxu0
        %v2017 = vadd.f32 %v1955, %v2016
        %v2018 = vpop.f32.mrf.mxu0
        %v2019 = vpop.f32.mrf.mxu0
        %v2020 = vadd.f32 %v1955, %v2019
        %v2021 = vpop.f32.mrf.mxu0
        %2022 = vdwg.mxu0
        %v2023 = vpack.c.bf16 %v1929, %v1928
        %v2024 = vlaneseq
        %v2025 = vshrl.u32 %v2024, 7
        %v2026 = vsub.s32 5, %v2025
        %v2027 = vrot.slane %v493, %v2026
        %v2032 = vunpack.c.l.b16 %v1936
        %v2033 = vunpack.c.l.b16 %v1937
        %v2034 = vunpack.c.l.b16 %v1938
        %v2035 = vunpack.c.l.b16 %v1939
        %v2036 = vpack.c.b16 %v2033, %v2032
        %v2037 = vpack.c.b16 %v2035, %v2034
        %v2041 = vsel %vm536, %v2023, 0
        %2043 = vmatprep.subr.bf16.mxu0 0
        %2044 = vmatpush1.bf16.msra.mxu0 0
        %2045 = vmatprep.subr.bf16.mxu0 0
        %2046 = vmatpush1.bf16.msra.mxu0 0
        %2047 = vmatprep.subr.bf16.mxu0 0
        %2048 = vmatpush1.bf16.msra.mxu0 0
        %2049 = vmatprep.subr.bf16.mxu0 0
        %2050 = vmatpush1.bf16.msra.mxu0 0
        %2051 = vmatprep.subr.bf16.mxu0 0
        %2052 = vmatpush1.bf16.msra.mxu0 0
        %2053 = vmatprep.subr.bf16.mxu0 0
        %2054 = vmatpush1.bf16.msra.mxu0 0
        %2055 = vmatprep.subr.bf16.mxu0 0
        %2056 = vmatpush1.bf16.msra.mxu0 %v2037
        %2057 = vmatprep.subr.bf16.mxu0 0
        %2058 = vmatpush1.bf16.msra.mxu0 %v2036
        %2059 = vmatprep.subr.bf16.mxu0 0
        %2060 = vmatpush2.bf16.msra.mxu0 0
        %2061 = vmatprep.subr.bf16.mxu0 0
        %2062 = vmatpush2.bf16.msra.mxu0 0
        %2063 = vmatprep.subr.bf16.mxu0 0
        %2064 = vmatpush2.bf16.msra.mxu0 0
        %2065 = vmatprep.subr.bf16.mxu0 0
        %2066 = vmatpush2.bf16.msra.mxu0 0
        %2067 = vmatprep.subr.bf16.mxu0 0
        %2068 = vmatpush2.bf16.msra.mxu0 0
        %2069 = vmatprep.subr.bf16.mxu0 0
        %2070 = vmatpush2.bf16.msra.mxu0 0
        %2071 = vmatprep.subr.bf16.mxu0 0
        %2072 = vmatpush2.bf16.msra.mxu0 0
        %2073 = vmatprep.subr.bf16.mxu0 0
        %2074 = vmatpush2.bf16.msra.mxu0 0
        %2075 = vmatprep.mubr.bf16.mxu0 0
        %2076 = vmatmul.mubr.bf16.gmra.mxu0 %v2041
        %v2077 = vpop.f32.mrf.mxu0
        %v2078 = vadd.f32 %v2027, %v2077
        %v2079 = vpop.f32.mrf.mxu0
        %v2080 = vpop.f32.mrf.mxu0
        %v2081 = vadd.f32 %v2027, %v2080
        %v2082 = vpop.f32.mrf.mxu0
        %2083 = vdwg.mxu0
        %v2084 = vpack.c.bf16 %v490, %v489
        %v2085 = vlaneseq
        %v2086 = vshrl.u32 %v2085, 7
        %v2087 = vsub.s32 6, %v2086
        %v2088 = vrot.slane %v493, %v2087
        %v2093 = vunpack.c.l.b16 %v1941
        %v2094 = vunpack.c.l.b16 %v1942
        %v2095 = vunpack.c.l.b16 %v1943
        %v2096 = vunpack.c.l.b16 %v1944
        %v2097 = vpack.c.b16 %v2094, %v2093
        %v2098 = vpack.c.b16 %v2096, %v2095
        %v2102 = vsel %vm536, %v2084, 0
        %2104 = vmatprep.subr.bf16.mxu0 0
        %2105 = vmatpush1.bf16.msra.mxu0 0
        %2106 = vmatprep.subr.bf16.mxu0 0
        %2107 = vmatpush1.bf16.msra.mxu0 0
        %2108 = vmatprep.subr.bf16.mxu0 0
        %2109 = vmatpush1.bf16.msra.mxu0 0
        %2110 = vmatprep.subr.bf16.mxu0 0
        %2111 = vmatpush1.bf16.msra.mxu0 0
        %2112 = vmatprep.subr.bf16.mxu0 0
        %2113 = vmatpush1.bf16.msra.mxu0 0
        %2114 = vmatprep.subr.bf16.mxu0 0
        %2115 = vmatpush1.bf16.msra.mxu0 0
        %2116 = vmatprep.subr.bf16.mxu0 0
        %2117 = vmatpush1.bf16.msra.mxu0 %v2098
        %2118 = vmatprep.subr.bf16.mxu0 0
        %2119 = vmatpush1.bf16.msra.mxu0 %v2097
        %2120 = vmatprep.subr.bf16.mxu0 0
        %2121 = vmatpush2.bf16.msra.mxu0 0
        %2122 = vmatprep.subr.bf16.mxu0 0
        %2123 = vmatpush2.bf16.msra.mxu0 0
        %2124 = vmatprep.subr.bf16.mxu0 0
        %2125 = vmatpush2.bf16.msra.mxu0 0
        %2126 = vmatprep.subr.bf16.mxu0 0
        %2127 = vmatpush2.bf16.msra.mxu0 0
        %2128 = vmatprep.subr.bf16.mxu0 0
        %2129 = vmatpush2.bf16.msra.mxu0 0
        %2130 = vmatprep.subr.bf16.mxu0 0
        %2131 = vmatpush2.bf16.msra.mxu0 0
        %2132 = vmatprep.subr.bf16.mxu0 0
        %2133 = vmatpush2.bf16.msra.mxu0 0
        %2134 = vmatprep.subr.bf16.mxu0 0
        %2135 = vmatpush2.bf16.msra.mxu0 0
        %2136 = vmatprep.mubr.bf16.mxu0 0
        %2137 = vmatmul.mubr.bf16.gmra.mxu0 %v2102
        %v2138 = vpop.f32.mrf.mxu0
        %v2139 = vadd.f32 %v2088, %v2138
        %v2140 = vpop.f32.mrf.mxu0
        %v2141 = vpop.f32.mrf.mxu0
        %v2142 = vadd.f32 %v2088, %v2141
        %v2143 = vpop.f32.mrf.mxu0
        %2144 = vdwg.mxu0
        %v2145 = vmul.f32 %v2009, 0.35355338
        %v2146 = vmul.f32 %v2012, 0.35355338
        %v2147 = vmul.f32 %v2017, 0.35355338
        %v2148 = vmul.f32 %v2020, 0.35355338
        %v2149 = vpack.c.bf16 %v2146, %v2145
        %v2150 = vpack.c.bf16 %v2148, %v2147
        %v2151 = vpack.c.bf16 %v2081, %v2078
        %v2152 = vpack.c.bf16 %v2142, %v2139
        %v2153 = vld [vmem:[%s5] sm:$0x1]
        %v2155 = vlaneseq
        %v2156 = vshrl.u32 %v2155, 7
        %v2157 = vsub.s32 0, %v2156
        %v2158 = vrot.slane %v2153, %v2157
        %v2161 = vsel %vm747, %v2149, 0
        %v2164 = vsel %vm747, %v2151, 0
        %2166 = vmatprep.subr.bf16.mxu0 0
        %2167 = vmatpush1.bf16.xpose.msra.mxu0 0
        %2168 = vmatprep.subr.bf16.mxu0 0
        %2169 = vmatpush1.bf16.xpose.msra.mxu0 0
        %2170 = vmatprep.subr.bf16.mxu0 0
        %2171 = vmatpush1.bf16.xpose.msra.mxu0 0
        %2172 = vmatprep.subr.bf16.mxu0 0
        %2173 = vmatpush1.bf16.xpose.msra.mxu0 0
        %2174 = vmatprep.subr.bf16.mxu0 0
        %2175 = vmatpush1.bf16.xpose.msra.mxu0 0
        %2176 = vmatprep.subr.bf16.mxu0 0
        %2177 = vmatpush1.bf16.xpose.msra.mxu0 0
        %2178 = vmatprep.subr.bf16.mxu0 0
        %2179 = vmatpush1.bf16.xpose.msra.mxu0 0
        %2180 = vmatprep.subr.bf16.mxu0 0
        %2181 = vmatpush1.bf16.xpose.msra.mxu0 %v2164
        %2182 = vmatprep.subr.bf16.mxu0 0
        %2183 = vmatpush2.bf16.xpose.msra.mxu0 0
        %2184 = vmatprep.subr.bf16.mxu0 0
        %2185 = vmatpush2.bf16.xpose.msra.mxu0 0
        %2186 = vmatprep.subr.bf16.mxu0 0
        %2187 = vmatpush2.bf16.xpose.msra.mxu0 0
        %2188 = vmatprep.subr.bf16.mxu0 0
        %2189 = vmatpush2.bf16.xpose.msra.mxu0 0
        %2190 = vmatprep.subr.bf16.mxu0 0
        %2191 = vmatpush2.bf16.xpose.msra.mxu0 0
        %2192 = vmatprep.subr.bf16.mxu0 0
        %2193 = vmatpush2.bf16.xpose.msra.mxu0 0
        %2194 = vmatprep.subr.bf16.mxu0 0
        %2195 = vmatpush2.bf16.xpose.msra.mxu0 0
        %2196 = vmatprep.subr.bf16.mxu0 0
        %2197 = vmatpush2.bf16.xpose.msra.mxu0 0
        %2198 = vmatprep.mubr.bf16.mxu0 0
        %2199 = vmatmul.mubr.bf16.gmra.mxu0 %v2161
        %v2200 = vpop.f32.mrf.mxu0
        %v2201 = vadd.f32 %v2158, %v2200
        %v2202 = vpop.f32.mrf.mxu0
        %v2203 = vpop.f32.mrf.mxu0
        %v2204 = vadd.f32 %v2158, %v2203
        %v2205 = vpop.f32.mrf.mxu0
        %2206 = vdwg.mxu0
        %v2207 = vsel %vm747, %v2201, -inf
        %2208 = vmax.xlane.f32.xlu0 %v2207
        %v2209 = vpop.xlane.xlu0 %2208
        %v2210 = vsel %vm747, %v2204, -inf
        %2211 = vmax.xlane.f32.xlu0 %v2210
        %v2212 = vpop.xlane.xlu0 %2211
        %v2213 = vsub.f32 %v2201, %v2209
        %v2214 = vsub.f32 %v2204, %v2212
        %v2215 = vmul.f32 %v2213, 1.442695
        %v2216 = vpow.pop %v2215
        %v2217 = vmul.f32 %v2214, 1.442695
        %v2218 = vpow.pop %v2217
        %v2219 = vsel %vm747, %v2216, 0.0
        %2220 = vadd.xlane.f32.xlu0 %v2219
        %v2221 = vpop.xlane.xlu0 %2220
        %v2222 = vsel %vm747, %v2218, 0.0
        %2223 = vadd.xlane.f32.xlu0 %v2222
        %v2224 = vpop.xlane.xlu0 %2223
        %v2225 = vrcp.pop %v2221
        %v2226 = vmul.f32 %v2216, %v2225
        %v2227 = vrcp.pop %v2224
        %v2228 = vmul.f32 %v2218, %v2227
        %v2229 = vpack.c.bf16 %v2228, %v2226
        %v2231 = vsel %vm747, %v2229, 0
        %vm2233 = vcmask 1043456
        %v2235 = vsel %vm2233, %v2152, 0
        %2237 = vmatprep.subr.bf16.mxu0 0
        %2238 = vmatpush1.bf16.msra.mxu0 0
        %2239 = vmatprep.subr.bf16.mxu0 0
        %2240 = vmatpush1.bf16.msra.mxu0 0
        %2241 = vmatprep.subr.bf16.mxu0 0
        %2242 = vmatpush1.bf16.msra.mxu0 0
        %2243 = vmatprep.subr.bf16.mxu0 0
        %2244 = vmatpush1.bf16.msra.mxu0 0
        %2245 = vmatprep.subr.bf16.mxu0 0
        %2246 = vmatpush1.bf16.msra.mxu0 0
        %2247 = vmatprep.subr.bf16.mxu0 0
        %2248 = vmatpush1.bf16.msra.mxu0 0
        %2249 = vmatprep.subr.bf16.mxu0 0
        %2250 = vmatpush1.bf16.msra.mxu0 0
        %2251 = vmatprep.subr.bf16.mxu0 0
        %2252 = vmatpush1.bf16.msra.mxu0 %v2235
        %2253 = vmatprep.subr.bf16.mxu0 0
        %2254 = vmatpush2.bf16.msra.mxu0 0
        %2255 = vmatprep.subr.bf16.mxu0 0
        %2256 = vmatpush2.bf16.msra.mxu0 0
        %2257 = vmatprep.subr.bf16.mxu0 0
        %2258 = vmatpush2.bf16.msra.mxu0 0
        %2259 = vmatprep.subr.bf16.mxu0 0
        %2260 = vmatpush2.bf16.msra.mxu0 0
        %2261 = vmatprep.subr.bf16.mxu0 0
        %2262 = vmatpush2.bf16.msra.mxu0 0
        %2263 = vmatprep.subr.bf16.mxu0 0
        %2264 = vmatpush2.bf16.msra.mxu0 0
        %2265 = vmatprep.subr.bf16.mxu0 0
        %2266 = vmatpush2.bf16.msra.mxu0 0
        %2267 = vmatprep.subr.bf16.mxu0 0
        %2268 = vmatpush2.bf16.msra.mxu0 0
        %2269 = vmatprep.mubr.bf16.mxu0 0
        %2270 = vmatmul.mubr.bf16.gmra.mxu0 %v2231
        %v2271 = vpop.f32.mrf.mxu0
        %v2272 = vadd.f32 0.0, %v2271
        %v2273 = vpop.f32.mrf.mxu0
        %v2274 = vpop.f32.mrf.mxu0
        %v2275 = vadd.f32 0.0, %v2274
        %v2276 = vpop.f32.mrf.mxu0
        %2277 = vdwg.mxu0
        %2279 = vrot.lane.b32.xlu0 %v2149, 120
        %v2280 = vpop.permute.xlu0 %2279
        %2282 = vrot.lane.b32.xlu0 %v2151, 120
        %v2283 = vpop.permute.xlu0 %2282
        %v2285 = vsel %vm747, %v2280, 0
        %v2288 = vsel %vm747, %v2283, 0
        %2290 = vmatprep.subr.bf16.mxu0 0
        %2291 = vmatpush1.bf16.xpose.msra.mxu0 0
        %2292 = vmatprep.subr.bf16.mxu0 0
        %2293 = vmatpush1.bf16.xpose.msra.mxu0 0
        %2294 = vmatprep.subr.bf16.mxu0 0
        %2295 = vmatpush1.bf16.xpose.msra.mxu0 0
        %2296 = vmatprep.subr.bf16.mxu0 0
        %2297 = vmatpush1.bf16.xpose.msra.mxu0 0
        %2298 = vmatprep.subr.bf16.mxu0 0
        %2299 = vmatpush1.bf16.xpose.msra.mxu0 0
        %2300 = vmatprep.subr.bf16.mxu0 0
        %2301 = vmatpush1.bf16.xpose.msra.mxu0 0
        %2302 = vmatprep.subr.bf16.mxu0 0
        %2303 = vmatpush1.bf16.xpose.msra.mxu0 0
        %2304 = vmatprep.subr.bf16.mxu0 0
        %2305 = vmatpush1.bf16.xpose.msra.mxu0 %v2288
        %2306 = vmatprep.subr.bf16.mxu0 0
        %2307 = vmatpush2.bf16.xpose.msra.mxu0 0
        %2308 = vmatprep.subr.bf16.mxu0 0
        %2309 = vmatpush2.bf16.xpose.msra.mxu0 0
        %2310 = vmatprep.subr.bf16.mxu0 0
        %2311 = vmatpush2.bf16.xpose.msra.mxu0 0
        %2312 = vmatprep.subr.bf16.mxu0 0
        %2313 = vmatpush2.bf16.xpose.msra.mxu0 0
        %2314 = vmatprep.subr.bf16.mxu0 0
        %2315 = vmatpush2.bf16.xpose.msra.mxu0 0
        %2316 = vmatprep.subr.bf16.mxu0 0
        %2317 = vmatpush2.bf16.xpose.msra.mxu0 0
        %2318 = vmatprep.subr.bf16.mxu0 0
        %2319 = vmatpush2.bf16.xpose.msra.mxu0 0
        %2320 = vmatprep.subr.bf16.mxu0 0
        %2321 = vmatpush2.bf16.xpose.msra.mxu0 0
        %2322 = vmatprep.mubr.bf16.mxu0 0
        %2323 = vmatmul.mubr.bf16.gmra.mxu0 %v2285
        %v2324 = vpop.f32.mrf.mxu0
        %v2325 = vadd.f32 %v2158, %v2324
        %v2326 = vpop.f32.mrf.mxu0
        %v2327 = vpop.f32.mrf.mxu0
        %v2328 = vadd.f32 %v2158, %v2327
        %v2329 = vpop.f32.mrf.mxu0
        %2330 = vdwg.mxu0
        %v2331 = vsel %vm747, %v2325, -inf
        %2332 = vmax.xlane.f32.xlu0 %v2331
        %v2333 = vpop.xlane.xlu0 %2332
        %v2334 = vsel %vm747, %v2328, -inf
        %2335 = vmax.xlane.f32.xlu0 %v2334
        %v2336 = vpop.xlane.xlu0 %2335
        %v2337 = vsub.f32 %v2325, %v2333
        %v2338 = vsub.f32 %v2328, %v2336
        %v2339 = vmul.f32 %v2337, 1.442695
        %v2340 = vpow.pop %v2339
        %v2341 = vmul.f32 %v2338, 1.442695
        %v2342 = vpow.pop %v2341
        %v2343 = vsel %vm747, %v2340, 0.0
        %2344 = vadd.xlane.f32.xlu0 %v2343
        %v2345 = vpop.xlane.xlu0 %2344
        %v2346 = vsel %vm747, %v2342, 0.0
        %2347 = vadd.xlane.f32.xlu0 %v2346
        %v2348 = vpop.xlane.xlu0 %2347
        %v2349 = vrcp.pop %v2345
        %v2350 = vmul.f32 %v2340, %v2349
        %v2351 = vrcp.pop %v2348
        %v2352 = vmul.f32 %v2342, %v2351
        %v2353 = vpack.c.bf16 %v2352, %v2350
        %2355 = vrot.lane.b32.xlu0 %v2152, 120
        %v2356 = vpop.permute.xlu0 %2355
        %v2358 = vsel %vm747, %v2353, 0
        %v2361 = vsel %vm2233, %v2356, 0
        %2363 = vmatprep.subr.bf16.mxu0 0
        %2364 = vmatpush1.bf16.msra.mxu0 0
        %2365 = vmatprep.subr.bf16.mxu0 0
        %2366 = vmatpush1.bf16.msra.mxu0 0
        %2367 = vmatprep.subr.bf16.mxu0 0
        %2368 = vmatpush1.bf16.msra.mxu0 0
        %2369 = vmatprep.subr.bf16.mxu0 0
        %2370 = vmatpush1.bf16.msra.mxu0 0
        %2371 = vmatprep.subr.bf16.mxu0 0
        %2372 = vmatpush1.bf16.msra.mxu0 0
        %2373 = vmatprep.subr.bf16.mxu0 0
        %2374 = vmatpush1.bf16.msra.mxu0 0
        %2375 = vmatprep.subr.bf16.mxu0 0
        %2376 = vmatpush1.bf16.msra.mxu0 0
        %2377 = vmatprep.subr.bf16.mxu0 0
        %2378 = vmatpush1.bf16.msra.mxu0 %v2361
        %2379 = vmatprep.subr.bf16.mxu0 0
        %2380 = vmatpush2.bf16.msra.mxu0 0
        %2381 = vmatprep.subr.bf16.mxu0 0
        %2382 = vmatpush2.bf16.msra.mxu0 0
        %2383 = vmatprep.subr.bf16.mxu0 0
        %2384 = vmatpush2.bf16.msra.mxu0 0
        %2385 = vmatprep.subr.bf16.mxu0 0
        %2386 = vmatpush2.bf16.msra.mxu0 0
        %2387 = vmatprep.subr.bf16.mxu0 0
        %2388 = vmatpush2.bf16.msra.mxu0 0
        %2389 = vmatprep.subr.bf16.mxu0 0
        %2390 = vmatpush2.bf16.msra.mxu0 0
        %2391 = vmatprep.subr.bf16.mxu0 0
        %2392 = vmatpush2.bf16.msra.mxu0 0
        %2393 = vmatprep.subr.bf16.mxu0 0
        %2394 = vmatpush2.bf16.msra.mxu0 0
        %2395 = vmatprep.mubr.bf16.mxu0 0
        %2396 = vmatmul.mubr.bf16.gmra.mxu0 %v2358
        %v2397 = vpop.f32.mrf.mxu0
        %v2398 = vadd.f32 0.0, %v2397
        %v2399 = vpop.f32.mrf.mxu0
        %v2400 = vpop.f32.mrf.mxu0
        %v2401 = vadd.f32 0.0, %v2400
        %v2402 = vpop.f32.mrf.mxu0
        %2403 = vdwg.mxu0
        %2404 = vrot.lane.b32.xlu0 %v2149, 112
        %v2405 = vpop.permute.xlu0 %2404
        %2406 = vrot.lane.b32.xlu0 %v2151, 112
        %v2407 = vpop.permute.xlu0 %2406
        %v2409 = vsel %vm747, %v2405, 0
        %v2412 = vsel %vm747, %v2407, 0
        %2414 = vmatprep.subr.bf16.mxu0 0
        %2415 = vmatpush1.bf16.xpose.msra.mxu0 0
        %2416 = vmatprep.subr.bf16.mxu0 0
        %2417 = vmatpush1.bf16.xpose.msra.mxu0 0
        %2418 = vmatprep.subr.bf16.mxu0 0
        %2419 = vmatpush1.bf16.xpose.msra.mxu0 0
        %2420 = vmatprep.subr.bf16.mxu0 0
        %2421 = vmatpush1.bf16.xpose.msra.mxu0 0
        %2422 = vmatprep.subr.bf16.mxu0 0
        %2423 = vmatpush1.bf16.xpose.msra.mxu0 0
        %2424 = vmatprep.subr.bf16.mxu0 0
        %2425 = vmatpush1.bf16.xpose.msra.mxu0 0
        %2426 = vmatprep.subr.bf16.mxu0 0
        %2427 = vmatpush1.bf16.xpose.msra.mxu0 0
        %2428 = vmatprep.subr.bf16.mxu0 0
        %2429 = vmatpush1.bf16.xpose.msra.mxu0 %v2412
        %2430 = vmatprep.subr.bf16.mxu0 0
        %2431 = vmatpush2.bf16.xpose.msra.mxu0 0
        %2432 = vmatprep.subr.bf16.mxu0 0
        %2433 = vmatpush2.bf16.xpose.msra.mxu0 0
        %2434 = vmatprep.subr.bf16.mxu0 0
        %2435 = vmatpush2.bf16.xpose.msra.mxu0 0
        %2436 = vmatprep.subr.bf16.mxu0 0
        %2437 = vmatpush2.bf16.xpose.msra.mxu0 0
        %2438 = vmatprep.subr.bf16.mxu0 0
        %2439 = vmatpush2.bf16.xpose.msra.mxu0 0
        %2440 = vmatprep.subr.bf16.mxu0 0
        %2441 = vmatpush2.bf16.xpose.msra.mxu0 0
        %2442 = vmatprep.subr.bf16.mxu0 0
        %2443 = vmatpush2.bf16.xpose.msra.mxu0 0
        %2444 = vmatprep.subr.bf16.mxu0 0
        %2445 = vmatpush2.bf16.xpose.msra.mxu0 0
        %2446 = vmatprep.mubr.bf16.mxu0 0
        %2447 = vmatmul.mubr.bf16.gmra.mxu0 %v2409
        %v2448 = vpop.f32.mrf.mxu0
        %v2449 = vadd.f32 %v2158, %v2448
        %v2450 = vpop.f32.mrf.mxu0
        %v2451 = vpop.f32.mrf.mxu0
        %v2452 = vadd.f32 %v2158, %v2451
        %v2453 = vpop.f32.mrf.mxu0
        %2454 = vdwg.mxu0
        %v2455 = vsel %vm747, %v2449, -inf
        %2456 = vmax.xlane.f32.xlu0 %v2455
        %v2457 = vpop.xlane.xlu0 %2456
        %v2458 = vsel %vm747, %v2452, -inf
        %2459 = vmax.xlane.f32.xlu0 %v2458
        %v2460 = vpop.xlane.xlu0 %2459
        %v2461 = vsub.f32 %v2449, %v2457
        %v2462 = vsub.f32 %v2452, %v2460
        %v2463 = vmul.f32 %v2461, 1.442695
        %v2464 = vpow.pop %v2463
        %v2465 = vmul.f32 %v2462, 1.442695
        %v2466 = vpow.pop %v2465
        %v2467 = vsel %vm747, %v2464, 0.0
        %2468 = vadd.xlane.f32.xlu0 %v2467
        %v2469 = vpop.xlane.xlu0 %2468
        %v2470 = vsel %vm747, %v2466, 0.0
        %2471 = vadd.xlane.f32.xlu0 %v2470
        %v2472 = vpop.xlane.xlu0 %2471
        %v2473 = vrcp.pop %v2469
        %v2474 = vmul.f32 %v2464, %v2473
        %v2475 = vrcp.pop %v2472
        %v2476 = vmul.f32 %v2466, %v2475
        %v2477 = vpack.c.bf16 %v2476, %v2474
        %2478 = vrot.lane.b32.xlu0 %v2152, 112
        %v2479 = vpop.permute.xlu0 %2478
        %v2481 = vsel %vm747, %v2477, 0
        %v2484 = vsel %vm2233, %v2479, 0
        %2486 = vmatprep.subr.bf16.mxu0 0
        %2487 = vmatpush1.bf16.msra.mxu0 0
        %2488 = vmatprep.subr.bf16.mxu0 0
        %2489 = vmatpush1.bf16.msra.mxu0 0
        %2490 = vmatprep.subr.bf16.mxu0 0
        %2491 = vmatpush1.bf16.msra.mxu0 0
        %2492 = vmatprep.subr.bf16.mxu0 0
        %2493 = vmatpush1.bf16.msra.mxu0 0
        %2494 = vmatprep.subr.bf16.mxu0 0
        %2495 = vmatpush1.bf16.msra.mxu0 0
        %2496 = vmatprep.subr.bf16.mxu0 0
        %2497 = vmatpush1.bf16.msra.mxu0 0
        %2498 = vmatprep.subr.bf16.mxu0 0
        %2499 = vmatpush1.bf16.msra.mxu0 0
        %2500 = vmatprep.subr.bf16.mxu0 0
        %2501 = vmatpush1.bf16.msra.mxu0 %v2484
        %2502 = vmatprep.subr.bf16.mxu0 0
        %2503 = vmatpush2.bf16.msra.mxu0 0
        %2504 = vmatprep.subr.bf16.mxu0 0
        %2505 = vmatpush2.bf16.msra.mxu0 0
        %2506 = vmatprep.subr.bf16.mxu0 0
        %2507 = vmatpush2.bf16.msra.mxu0 0
        %2508 = vmatprep.subr.bf16.mxu0 0
        %2509 = vmatpush2.bf16.msra.mxu0 0
        %2510 = vmatprep.subr.bf16.mxu0 0
        %2511 = vmatpush2.bf16.msra.mxu0 0
        %2512 = vmatprep.subr.bf16.mxu0 0
        %2513 = vmatpush2.bf16.msra.mxu0 0
        %2514 = vmatprep.subr.bf16.mxu0 0
        %2515 = vmatpush2.bf16.msra.mxu0 0
        %2516 = vmatprep.subr.bf16.mxu0 0
        %2517 = vmatpush2.bf16.msra.mxu0 0
        %2518 = vmatprep.mubr.bf16.mxu0 0
        %2519 = vmatmul.mubr.bf16.gmra.mxu0 %v2481
        %v2520 = vpop.f32.mrf.mxu0
        %v2521 = vadd.f32 0.0, %v2520
        %v2522 = vpop.f32.mrf.mxu0
        %v2523 = vpop.f32.mrf.mxu0
        %v2524 = vadd.f32 0.0, %v2523
        %v2525 = vpop.f32.mrf.mxu0
        %2526 = vdwg.mxu0
        %2527 = vrot.lane.b32.xlu0 %v2149, 104
        %v2528 = vpop.permute.xlu0 %2527
        %2529 = vrot.lane.b32.xlu0 %v2151, 104
        %v2530 = vpop.permute.xlu0 %2529
        %v2532 = vsel %vm747, %v2528, 0
        %v2535 = vsel %vm747, %v2530, 0
        %2537 = vmatprep.subr.bf16.mxu0 0
        %2538 = vmatpush1.bf16.xpose.msra.mxu0 0
        %2539 = vmatprep.subr.bf16.mxu0 0
        %2540 = vmatpush1.bf16.xpose.msra.mxu0 0
        %2541 = vmatprep.subr.bf16.mxu0 0
        %2542 = vmatpush1.bf16.xpose.msra.mxu0 0
        %2543 = vmatprep.subr.bf16.mxu0 0
        %2544 = vmatpush1.bf16.xpose.msra.mxu0 0
        %2545 = vmatprep.subr.bf16.mxu0 0
        %2546 = vmatpush1.bf16.xpose.msra.mxu0 0
        %2547 = vmatprep.subr.bf16.mxu0 0
        %2548 = vmatpush1.bf16.xpose.msra.mxu0 0
        %2549 = vmatprep.subr.bf16.mxu0 0
        %2550 = vmatpush1.bf16.xpose.msra.mxu0 0
        %2551 = vmatprep.subr.bf16.mxu0 0
        %2552 = vmatpush1.bf16.xpose.msra.mxu0 %v2535
        %2553 = vmatprep.subr.bf16.mxu0 0
        %2554 = vmatpush2.bf16.xpose.msra.mxu0 0
        %2555 = vmatprep.subr.bf16.mxu0 0
        %2556 = vmatpush2.bf16.xpose.msra.mxu0 0
        %2557 = vmatprep.subr.bf16.mxu0 0
        %2558 = vmatpush2.bf16.xpose.msra.mxu0 0
        %2559 = vmatprep.subr.bf16.mxu0 0
        %2560 = vmatpush2.bf16.xpose.msra.mxu0 0
        %2561 = vmatprep.subr.bf16.mxu0 0
        %2562 = vmatpush2.bf16.xpose.msra.mxu0 0
        %2563 = vmatprep.subr.bf16.mxu0 0
        %2564 = vmatpush2.bf16.xpose.msra.mxu0 0
        %2565 = vmatprep.subr.bf16.mxu0 0
        %2566 = vmatpush2.bf16.xpose.msra.mxu0 0
        %2567 = vmatprep.subr.bf16.mxu0 0
        %2568 = vmatpush2.bf16.xpose.msra.mxu0 0
        %2569 = vmatprep.mubr.bf16.mxu0 0
        %2570 = vmatmul.mubr.bf16.gmra.mxu0 %v2532
        %v2571 = vpop.f32.mrf.mxu0
        %v2572 = vadd.f32 %v2158, %v2571
        %v2573 = vpop.f32.mrf.mxu0
        %v2574 = vpop.f32.mrf.mxu0
        %v2575 = vadd.f32 %v2158, %v2574
        %v2576 = vpop.f32.mrf.mxu0
        %2577 = vdwg.mxu0
        %v2578 = vsel %vm747, %v2572, -inf
        %2579 = vmax.xlane.f32.xlu0 %v2578
        %v2580 = vpop.xlane.xlu0 %2579
        %v2581 = vsel %vm747, %v2575, -inf
        %2582 = vmax.xlane.f32.xlu0 %v2581
        %v2583 = vpop.xlane.xlu0 %2582
        %v2584 = vsub.f32 %v2572, %v2580
        %v2585 = vsub.f32 %v2575, %v2583
        %v2586 = vmul.f32 %v2584, 1.442695
        %v2587 = vpow.pop %v2586
        %v2588 = vmul.f32 %v2585, 1.442695
        %v2589 = vpow.pop %v2588
        %v2590 = vsel %vm747, %v2587, 0.0
        %2591 = vadd.xlane.f32.xlu0 %v2590
        %v2592 = vpop.xlane.xlu0 %2591
        %v2593 = vsel %vm747, %v2589, 0.0
        %2594 = vadd.xlane.f32.xlu0 %v2593
        %v2595 = vpop.xlane.xlu0 %2594
        %v2596 = vrcp.pop %v2592
        %v2597 = vmul.f32 %v2587, %v2596
        %v2598 = vrcp.pop %v2595
        %v2599 = vmul.f32 %v2589, %v2598
        %v2600 = vpack.c.bf16 %v2599, %v2597
        %2601 = vrot.lane.b32.xlu0 %v2152, 104
        %v2602 = vpop.permute.xlu0 %2601
        %v2604 = vsel %vm747, %v2600, 0
        %v2607 = vsel %vm2233, %v2602, 0
        %2609 = vmatprep.subr.bf16.mxu0 0
        %2610 = vmatpush1.bf16.msra.mxu0 0
        %2611 = vmatprep.subr.bf16.mxu0 0
        %2612 = vmatpush1.bf16.msra.mxu0 0
        %2613 = vmatprep.subr.bf16.mxu0 0
        %2614 = vmatpush1.bf16.msra.mxu0 0
        %2615 = vmatprep.subr.bf16.mxu0 0
        %2616 = vmatpush1.bf16.msra.mxu0 0
        %2617 = vmatprep.subr.bf16.mxu0 0
        %2618 = vmatpush1.bf16.msra.mxu0 0
        %2619 = vmatprep.subr.bf16.mxu0 0
        %2620 = vmatpush1.bf16.msra.mxu0 0
        %2621 = vmatprep.subr.bf16.mxu0 0
        %2622 = vmatpush1.bf16.msra.mxu0 0
        %2623 = vmatprep.subr.bf16.mxu0 0
        %2624 = vmatpush1.bf16.msra.mxu0 %v2607
        %2625 = vmatprep.subr.bf16.mxu0 0
        %2626 = vmatpush2.bf16.msra.mxu0 0
        %2627 = vmatprep.subr.bf16.mxu0 0
        %2628 = vmatpush2.bf16.msra.mxu0 0
        %2629 = vmatprep.subr.bf16.mxu0 0
        %2630 = vmatpush2.bf16.msra.mxu0 0
        %2631 = vmatprep.subr.bf16.mxu0 0
        %2632 = vmatpush2.bf16.msra.mxu0 0
        %2633 = vmatprep.subr.bf16.mxu0 0
        %2634 = vmatpush2.bf16.msra.mxu0 0
        %2635 = vmatprep.subr.bf16.mxu0 0
        %2636 = vmatpush2.bf16.msra.mxu0 0
        %2637 = vmatprep.subr.bf16.mxu0 0
        %2638 = vmatpush2.bf16.msra.mxu0 0
        %2639 = vmatprep.subr.bf16.mxu0 0
        %2640 = vmatpush2.bf16.msra.mxu0 0
        %2641 = vmatprep.mubr.bf16.mxu0 0
        %2642 = vmatmul.mubr.bf16.gmra.mxu0 %v2604
        %v2643 = vpop.f32.mrf.mxu0
        %v2644 = vadd.f32 0.0, %v2643
        %v2645 = vpop.f32.mrf.mxu0
        %v2646 = vpop.f32.mrf.mxu0
        %v2647 = vadd.f32 0.0, %v2646
        %v2648 = vpop.f32.mrf.mxu0
        %2649 = vdwg.mxu0
        %2652 = vrot.lane.b32.xlu0 %v2398, 8
        %v2653 = vpop.permute.xlu0 %2652
        %2654 = vrot.lane.b32.xlu0 %v2401, 8
        %v2655 = vpop.permute.xlu0 %2654
        %2660 = vrot.lane.b32.xlu0 %v2521, 16
        %v2661 = vpop.permute.xlu0 %2660
        %2662 = vrot.lane.b32.xlu0 %v2524, 16
        %v2663 = vpop.permute.xlu0 %2662
        %2668 = vrot.lane.b32.xlu0 %v2644, 24
        %v2669 = vpop.permute.xlu0 %2668
        %2670 = vrot.lane.b32.xlu0 %v2647, 24
        %v2671 = vpop.permute.xlu0 %2670
        %v2674 = vsel %vm747, %v2272, %v2653
        %v2675 = vsel %vm747, %v2275, %v2655
        %v2676 = vsel %vm795, %v2674, %v2661
        %v2677 = vsel %vm795, %v2675, %v2663
        %v2678 = vsel %vm1257, %v2676, %v2669
        %v2679 = vsel %vm1257, %v2677, %v2671
        %s2680 = scalar_lea.vmem %s5, 1
        %v2681 = vld [vmem:[%s2680] sm:$0x1]
        %v2683 = vlaneseq
        %v2684 = vshrl.u32 %v2683, 7
        %v2685 = vsub.s32 0, %v2684
        %v2686 = vrot.slane %v2681, %v2685
        %v2688 = vrot.slane %v2151, 4
        %v2690 = vsel %vm747, %v2150, 0
        %v2693 = vsel %vm747, %v2688, 0
        %2695 = vmatprep.subr.bf16.mxu0 0
        %2696 = vmatpush1.bf16.xpose.msra.mxu0 0
        %2697 = vmatprep.subr.bf16.mxu0 0
        %2698 = vmatpush1.bf16.xpose.msra.mxu0 0
        %2699 = vmatprep.subr.bf16.mxu0 0
        %2700 = vmatpush1.bf16.xpose.msra.mxu0 0
        %2701 = vmatprep.subr.bf16.mxu0 0
        %2702 = vmatpush1.bf16.xpose.msra.mxu0 0
        %2703 = vmatprep.subr.bf16.mxu0 0
        %2704 = vmatpush1.bf16.xpose.msra.mxu0 0
        %2705 = vmatprep.subr.bf16.mxu0 0
        %2706 = vmatpush1.bf16.xpose.msra.mxu0 0
        %2707 = vmatprep.subr.bf16.mxu0 0
        %2708 = vmatpush1.bf16.xpose.msra.mxu0 0
        %2709 = vmatprep.subr.bf16.mxu0 0
        %2710 = vmatpush1.bf16.xpose.msra.mxu0 %v2693
        %2711 = vmatprep.subr.bf16.mxu0 0
        %2712 = vmatpush2.bf16.xpose.msra.mxu0 0
        %2713 = vmatprep.subr.bf16.mxu0 0
        %2714 = vmatpush2.bf16.xpose.msra.mxu0 0
        %2715 = vmatprep.subr.bf16.mxu0 0
        %2716 = vmatpush2.bf16.xpose.msra.mxu0 0
        %2717 = vmatprep.subr.bf16.mxu0 0
        %2718 = vmatpush2.bf16.xpose.msra.mxu0 0
        %2719 = vmatprep.subr.bf16.mxu0 0
        %2720 = vmatpush2.bf16.xpose.msra.mxu0 0
        %2721 = vmatprep.subr.bf16.mxu0 0
        %2722 = vmatpush2.bf16.xpose.msra.mxu0 0
        %2723 = vmatprep.subr.bf16.mxu0 0
        %2724 = vmatpush2.bf16.xpose.msra.mxu0 0
        %2725 = vmatprep.subr.bf16.mxu0 0
        %2726 = vmatpush2.bf16.xpose.msra.mxu0 0
        %2727 = vmatprep.mubr.bf16.mxu0 0
        %2728 = vmatmul.mubr.bf16.gmra.mxu0 %v2690
        %v2729 = vpop.f32.mrf.mxu0
        %v2730 = vadd.f32 %v2686, %v2729
        %v2731 = vpop.f32.mrf.mxu0
        %v2732 = vpop.f32.mrf.mxu0
        %v2733 = vadd.f32 %v2686, %v2732
        %v2734 = vpop.f32.mrf.mxu0
        %2735 = vdwg.mxu0
        %v2736 = vsel %vm747, %v2730, -inf
        %2737 = vmax.xlane.f32.xlu0 %v2736
        %v2738 = vpop.xlane.xlu0 %2737
        %v2739 = vsel %vm747, %v2733, -inf
        %2740 = vmax.xlane.f32.xlu0 %v2739
        %v2741 = vpop.xlane.xlu0 %2740
        %v2742 = vsub.f32 %v2730, %v2738
        %v2743 = vsub.f32 %v2733, %v2741
        %v2744 = vmul.f32 %v2742, 1.442695
        %v2745 = vpow.pop %v2744
        %v2746 = vmul.f32 %v2743, 1.442695
        %v2747 = vpow.pop %v2746
        %v2748 = vsel %vm747, %v2745, 0.0
        %2749 = vadd.xlane.f32.xlu0 %v2748
        %v2750 = vpop.xlane.xlu0 %2749
        %v2751 = vsel %vm747, %v2747, 0.0
        %2752 = vadd.xlane.f32.xlu0 %v2751
        %v2753 = vpop.xlane.xlu0 %2752
        %v2754 = vrcp.pop %v2750
        %v2755 = vmul.f32 %v2745, %v2754
        %v2756 = vrcp.pop %v2753
        %v2757 = vmul.f32 %v2747, %v2756
        %v2758 = vpack.c.bf16 %v2757, %v2755
        %v2759 = vrot.slane %v2152, 4
        %v2761 = vsel %vm747, %v2758, 0
        %v2764 = vsel %vm2233, %v2759, 0
        %2766 = vmatprep.subr.bf16.mxu0 0
        %2767 = vmatpush1.bf16.msra.mxu0 0
        %2768 = vmatprep.subr.bf16.mxu0 0
        %2769 = vmatpush1.bf16.msra.mxu0 0
        %2770 = vmatprep.subr.bf16.mxu0 0
        %2771 = vmatpush1.bf16.msra.mxu0 0
        %2772 = vmatprep.subr.bf16.mxu0 0
        %2773 = vmatpush1.bf16.msra.mxu0 0
        %2774 = vmatprep.subr.bf16.mxu0 0
        %2775 = vmatpush1.bf16.msra.mxu0 0
        %2776 = vmatprep.subr.bf16.mxu0 0
        %2777 = vmatpush1.bf16.msra.mxu0 0
        %2778 = vmatprep.subr.bf16.mxu0 0
        %2779 = vmatpush1.bf16.msra.mxu0 0
        %2780 = vmatprep.subr.bf16.mxu0 0
        %2781 = vmatpush1.bf16.msra.mxu0 %v2764
        %2782 = vmatprep.subr.bf16.mxu0 0
        %2783 = vmatpush2.bf16.msra.mxu0 0
        %2784 = vmatprep.subr.bf16.mxu0 0
        %2785 = vmatpush2.bf16.msra.mxu0 0
        %2786 = vmatprep.subr.bf16.mxu0 0
        %2787 = vmatpush2.bf16.msra.mxu0 0
        %2788 = vmatprep.subr.bf16.mxu0 0
        %2789 = vmatpush2.bf16.msra.mxu0 0
        %2790 = vmatprep.subr.bf16.mxu0 0
        %2791 = vmatpush2.bf16.msra.mxu0 0
        %2792 = vmatprep.subr.bf16.mxu0 0
        %2793 = vmatpush2.bf16.msra.mxu0 0
        %2794 = vmatprep.subr.bf16.mxu0 0
        %2795 = vmatpush2.bf16.msra.mxu0 0
        %2796 = vmatprep.subr.bf16.mxu0 0
        %2797 = vmatpush2.bf16.msra.mxu0 0
        %2798 = vmatprep.mubr.bf16.mxu0 0
        %2799 = vmatmul.mubr.bf16.gmra.mxu0 %v2761
        %v2800 = vpop.f32.mrf.mxu0
        %v2801 = vadd.f32 0.0, %v2800
        %v2802 = vpop.f32.mrf.mxu0
        %v2803 = vpop.f32.mrf.mxu0
        %v2804 = vadd.f32 0.0, %v2803
        %v2805 = vpop.f32.mrf.mxu0
        %2806 = vdwg.mxu0
        %2808 = vrot.lane.b32.xlu0 %v2150, 120
        %v2809 = vpop.permute.xlu0 %2808
        %2810 = vrot.lane.b32.xlu0 %v2688, 120
        %v2811 = vpop.permute.xlu0 %2810
        %v2813 = vsel %vm747, %v2809, 0
        %v2816 = vsel %vm747, %v2811, 0
        %2818 = vmatprep.subr.bf16.mxu0 0
        %2819 = vmatpush1.bf16.xpose.msra.mxu0 0
        %2820 = vmatprep.subr.bf16.mxu0 0
        %2821 = vmatpush1.bf16.xpose.msra.mxu0 0
        %2822 = vmatprep.subr.bf16.mxu0 0
        %2823 = vmatpush1.bf16.xpose.msra.mxu0 0
        %2824 = vmatprep.subr.bf16.mxu0 0
        %2825 = vmatpush1.bf16.xpose.msra.mxu0 0
        %2826 = vmatprep.subr.bf16.mxu0 0
        %2827 = vmatpush1.bf16.xpose.msra.mxu0 0
        %2828 = vmatprep.subr.bf16.mxu0 0
        %2829 = vmatpush1.bf16.xpose.msra.mxu0 0
        %2830 = vmatprep.subr.bf16.mxu0 0
        %2831 = vmatpush1.bf16.xpose.msra.mxu0 0
        %2832 = vmatprep.subr.bf16.mxu0 0
        %2833 = vmatpush1.bf16.xpose.msra.mxu0 %v2816
        %2834 = vmatprep.subr.bf16.mxu0 0
        %2835 = vmatpush2.bf16.xpose.msra.mxu0 0
        %2836 = vmatprep.subr.bf16.mxu0 0
        %2837 = vmatpush2.bf16.xpose.msra.mxu0 0
        %2838 = vmatprep.subr.bf16.mxu0 0
        %2839 = vmatpush2.bf16.xpose.msra.mxu0 0
        %2840 = vmatprep.subr.bf16.mxu0 0
        %2841 = vmatpush2.bf16.xpose.msra.mxu0 0
        %2842 = vmatprep.subr.bf16.mxu0 0
        %2843 = vmatpush2.bf16.xpose.msra.mxu0 0
        %2844 = vmatprep.subr.bf16.mxu0 0
        %2845 = vmatpush2.bf16.xpose.msra.mxu0 0
        %2846 = vmatprep.subr.bf16.mxu0 0
        %2847 = vmatpush2.bf16.xpose.msra.mxu0 0
        %2848 = vmatprep.subr.bf16.mxu0 0
        %2849 = vmatpush2.bf16.xpose.msra.mxu0 0
        %2850 = vmatprep.mubr.bf16.mxu0 0
        %2851 = vmatmul.mubr.bf16.gmra.mxu0 %v2813
        %v2852 = vpop.f32.mrf.mxu0
        %v2853 = vadd.f32 %v2686, %v2852
        %v2854 = vpop.f32.mrf.mxu0
        %v2855 = vpop.f32.mrf.mxu0
        %v2856 = vadd.f32 %v2686, %v2855
        %v2857 = vpop.f32.mrf.mxu0
        %2858 = vdwg.mxu0
        %v2859 = vsel %vm747, %v2853, -inf
        %2860 = vmax.xlane.f32.xlu0 %v2859
        %v2861 = vpop.xlane.xlu0 %2860
        %v2862 = vsel %vm747, %v2856, -inf
        %2863 = vmax.xlane.f32.xlu0 %v2862
        %v2864 = vpop.xlane.xlu0 %2863
        %v2865 = vsub.f32 %v2853, %v2861
        %v2866 = vsub.f32 %v2856, %v2864
        %v2867 = vmul.f32 %v2865, 1.442695
        %v2868 = vpow.pop %v2867
        %v2869 = vmul.f32 %v2866, 1.442695
        %v2870 = vpow.pop %v2869
        %v2871 = vsel %vm747, %v2868, 0.0
        %2872 = vadd.xlane.f32.xlu0 %v2871
        %v2873 = vpop.xlane.xlu0 %2872
        %v2874 = vsel %vm747, %v2870, 0.0
        %2875 = vadd.xlane.f32.xlu0 %v2874
        %v2876 = vpop.xlane.xlu0 %2875
        %v2877 = vrcp.pop %v2873
        %v2878 = vmul.f32 %v2868, %v2877
        %v2879 = vrcp.pop %v2876
        %v2880 = vmul.f32 %v2870, %v2879
        %v2881 = vpack.c.bf16 %v2880, %v2878
        %2882 = vrot.lane.b32.xlu0 %v2759, 120
        %v2883 = vpop.permute.xlu0 %2882
        %v2885 = vsel %vm747, %v2881, 0
        %v2888 = vsel %vm2233, %v2883, 0
        %2890 = vmatprep.subr.bf16.mxu0 0
        %2891 = vmatpush1.bf16.msra.mxu0 0
        %2892 = vmatprep.subr.bf16.mxu0 0
        %2893 = vmatpush1.bf16.msra.mxu0 0
        %2894 = vmatprep.subr.bf16.mxu0 0
        %2895 = vmatpush1.bf16.msra.mxu0 0
        %2896 = vmatprep.subr.bf16.mxu0 0
        %2897 = vmatpush1.bf16.msra.mxu0 0
        %2898 = vmatprep.subr.bf16.mxu0 0
        %2899 = vmatpush1.bf16.msra.mxu0 0
        %2900 = vmatprep.subr.bf16.mxu0 0
        %2901 = vmatpush1.bf16.msra.mxu0 0
        %2902 = vmatprep.subr.bf16.mxu0 0
        %2903 = vmatpush1.bf16.msra.mxu0 0
        %2904 = vmatprep.subr.bf16.mxu0 0
        %2905 = vmatpush1.bf16.msra.mxu0 %v2888
        %2906 = vmatprep.subr.bf16.mxu0 0
        %2907 = vmatpush2.bf16.msra.mxu0 0
        %2908 = vmatprep.subr.bf16.mxu0 0
        %2909 = vmatpush2.bf16.msra.mxu0 0
        %2910 = vmatprep.subr.bf16.mxu0 0
        %2911 = vmatpush2.bf16.msra.mxu0 0
        %2912 = vmatprep.subr.bf16.mxu0 0
        %2913 = vmatpush2.bf16.msra.mxu0 0
        %2914 = vmatprep.subr.bf16.mxu0 0
        %2915 = vmatpush2.bf16.msra.mxu0 0
        %2916 = vmatprep.subr.bf16.mxu0 0
        %2917 = vmatpush2.bf16.msra.mxu0 0
        %2918 = vmatprep.subr.bf16.mxu0 0
        %2919 = vmatpush2.bf16.msra.mxu0 0
        %2920 = vmatprep.subr.bf16.mxu0 0
        %2921 = vmatpush2.bf16.msra.mxu0 0
        %2922 = vmatprep.mubr.bf16.mxu0 0
        %2923 = vmatmul.mubr.bf16.gmra.mxu0 %v2885
        %v2924 = vpop.f32.mrf.mxu0
        %v2925 = vadd.f32 0.0, %v2924
        %v2926 = vpop.f32.mrf.mxu0
        %v2927 = vpop.f32.mrf.mxu0
        %v2928 = vadd.f32 0.0, %v2927
        %v2929 = vpop.f32.mrf.mxu0
        %2930 = vdwg.mxu0
        %2931 = vrot.lane.b32.xlu0 %v2150, 112
        %v2932 = vpop.permute.xlu0 %2931
        %2933 = vrot.lane.b32.xlu0 %v2688, 112
        %v2934 = vpop.permute.xlu0 %2933
        %v2936 = vsel %vm747, %v2932, 0
        %v2939 = vsel %vm747, %v2934, 0
        %2941 = vmatprep.subr.bf16.mxu0 0
        %2942 = vmatpush1.bf16.xpose.msra.mxu0 0
        %2943 = vmatprep.subr.bf16.mxu0 0
        %2944 = vmatpush1.bf16.xpose.msra.mxu0 0
        %2945 = vmatprep.subr.bf16.mxu0 0
        %2946 = vmatpush1.bf16.xpose.msra.mxu0 0
        %2947 = vmatprep.subr.bf16.mxu0 0
        %2948 = vmatpush1.bf16.xpose.msra.mxu0 0
        %2949 = vmatprep.subr.bf16.mxu0 0
        %2950 = vmatpush1.bf16.xpose.msra.mxu0 0
        %2951 = vmatprep.subr.bf16.mxu0 0
        %2952 = vmatpush1.bf16.xpose.msra.mxu0 0
        %2953 = vmatprep.subr.bf16.mxu0 0
        %2954 = vmatpush1.bf16.xpose.msra.mxu0 0
        %2955 = vmatprep.subr.bf16.mxu0 0
        %2956 = vmatpush1.bf16.xpose.msra.mxu0 %v2939
        %2957 = vmatprep.subr.bf16.mxu0 0
        %2958 = vmatpush2.bf16.xpose.msra.mxu0 0
        %2959 = vmatprep.subr.bf16.mxu0 0
        %2960 = vmatpush2.bf16.xpose.msra.mxu0 0
        %2961 = vmatprep.subr.bf16.mxu0 0
        %2962 = vmatpush2.bf16.xpose.msra.mxu0 0
        %2963 = vmatprep.subr.bf16.mxu0 0
        %2964 = vmatpush2.bf16.xpose.msra.mxu0 0
        %2965 = vmatprep.subr.bf16.mxu0 0
        %2966 = vmatpush2.bf16.xpose.msra.mxu0 0
        %2967 = vmatprep.subr.bf16.mxu0 0
        %2968 = vmatpush2.bf16.xpose.msra.mxu0 0
        %2969 = vmatprep.subr.bf16.mxu0 0
        %2970 = vmatpush2.bf16.xpose.msra.mxu0 0
        %2971 = vmatprep.subr.bf16.mxu0 0
        %2972 = vmatpush2.bf16.xpose.msra.mxu0 0
        %2973 = vmatprep.mubr.bf16.mxu0 0
        %2974 = vmatmul.mubr.bf16.gmra.mxu0 %v2936
        %v2975 = vpop.f32.mrf.mxu0
        %v2976 = vadd.f32 %v2686, %v2975
        %v2977 = vpop.f32.mrf.mxu0
        %v2978 = vpop.f32.mrf.mxu0
        %v2979 = vadd.f32 %v2686, %v2978
        %v2980 = vpop.f32.mrf.mxu0
        %2981 = vdwg.mxu0
        %v2982 = vsel %vm747, %v2976, -inf
        %2983 = vmax.xlane.f32.xlu0 %v2982
        %v2984 = vpop.xlane.xlu0 %2983
        %v2985 = vsel %vm747, %v2979, -inf
        %2986 = vmax.xlane.f32.xlu0 %v2985
        %v2987 = vpop.xlane.xlu0 %2986
        %v2988 = vsub.f32 %v2976, %v2984
        %v2989 = vsub.f32 %v2979, %v2987
        %v2990 = vmul.f32 %v2988, 1.442695
        %v2991 = vpow.pop %v2990
        %v2992 = vmul.f32 %v2989, 1.442695
        %v2993 = vpow.pop %v2992
        %v2994 = vsel %vm747, %v2991, 0.0
        %2995 = vadd.xlane.f32.xlu0 %v2994
        %v2996 = vpop.xlane.xlu0 %2995
        %v2997 = vsel %vm747, %v2993, 0.0
        %2998 = vadd.xlane.f32.xlu0 %v2997
        %v2999 = vpop.xlane.xlu0 %2998
        %v3000 = vrcp.pop %v2996
        %v3001 = vmul.f32 %v2991, %v3000
        %v3002 = vrcp.pop %v2999
        %v3003 = vmul.f32 %v2993, %v3002
        %v3004 = vpack.c.bf16 %v3003, %v3001
        %3005 = vrot.lane.b32.xlu0 %v2759, 112
        %v3006 = vpop.permute.xlu0 %3005
        %v3008 = vsel %vm747, %v3004, 0
        %v3011 = vsel %vm2233, %v3006, 0
        %3013 = vmatprep.subr.bf16.mxu0 0
        %3014 = vmatpush1.bf16.msra.mxu0 0
        %3015 = vmatprep.subr.bf16.mxu0 0
        %3016 = vmatpush1.bf16.msra.mxu0 0
        %3017 = vmatprep.subr.bf16.mxu0 0
        %3018 = vmatpush1.bf16.msra.mxu0 0
        %3019 = vmatprep.subr.bf16.mxu0 0
        %3020 = vmatpush1.bf16.msra.mxu0 0
        %3021 = vmatprep.subr.bf16.mxu0 0
        %3022 = vmatpush1.bf16.msra.mxu0 0
        %3023 = vmatprep.subr.bf16.mxu0 0
        %3024 = vmatpush1.bf16.msra.mxu0 0
        %3025 = vmatprep.subr.bf16.mxu0 0
        %3026 = vmatpush1.bf16.msra.mxu0 0
        %3027 = vmatprep.subr.bf16.mxu0 0
        %3028 = vmatpush1.bf16.msra.mxu0 %v3011
        %3029 = vmatprep.subr.bf16.mxu0 0
        %3030 = vmatpush2.bf16.msra.mxu0 0
        %3031 = vmatprep.subr.bf16.mxu0 0
        %3032 = vmatpush2.bf16.msra.mxu0 0
        %3033 = vmatprep.subr.bf16.mxu0 0
        %3034 = vmatpush2.bf16.msra.mxu0 0
        %3035 = vmatprep.subr.bf16.mxu0 0
        %3036 = vmatpush2.bf16.msra.mxu0 0
        %3037 = vmatprep.subr.bf16.mxu0 0
        %3038 = vmatpush2.bf16.msra.mxu0 0
        %3039 = vmatprep.subr.bf16.mxu0 0
        %3040 = vmatpush2.bf16.msra.mxu0 0
        %3041 = vmatprep.subr.bf16.mxu0 0
        %3042 = vmatpush2.bf16.msra.mxu0 0
        %3043 = vmatprep.subr.bf16.mxu0 0
        %3044 = vmatpush2.bf16.msra.mxu0 0
        %3045 = vmatprep.mubr.bf16.mxu0 0
        %3046 = vmatmul.mubr.bf16.gmra.mxu0 %v3008
        %v3047 = vpop.f32.mrf.mxu0
        %v3048 = vadd.f32 0.0, %v3047
        %v3049 = vpop.f32.mrf.mxu0
        %v3050 = vpop.f32.mrf.mxu0
        %v3051 = vadd.f32 0.0, %v3050
        %v3052 = vpop.f32.mrf.mxu0
        %3053 = vdwg.mxu0
        %3054 = vrot.lane.b32.xlu0 %v2150, 104
        %v3055 = vpop.permute.xlu0 %3054
        %3056 = vrot.lane.b32.xlu0 %v2688, 104
        %v3057 = vpop.permute.xlu0 %3056
        %v3059 = vsel %vm747, %v3055, 0
        %v3062 = vsel %vm747, %v3057, 0
        %3064 = vmatprep.subr.bf16.mxu0 0
        %3065 = vmatpush1.bf16.xpose.msra.mxu0 0
        %3066 = vmatprep.subr.bf16.mxu0 0
        %3067 = vmatpush1.bf16.xpose.msra.mxu0 0
        %3068 = vmatprep.subr.bf16.mxu0 0
        %3069 = vmatpush1.bf16.xpose.msra.mxu0 0
        %3070 = vmatprep.subr.bf16.mxu0 0
        %3071 = vmatpush1.bf16.xpose.msra.mxu0 0
        %3072 = vmatprep.subr.bf16.mxu0 0
        %3073 = vmatpush1.bf16.xpose.msra.mxu0 0
        %3074 = vmatprep.subr.bf16.mxu0 0
        %3075 = vmatpush1.bf16.xpose.msra.mxu0 0
        %3076 = vmatprep.subr.bf16.mxu0 0
        %3077 = vmatpush1.bf16.xpose.msra.mxu0 0
        %3078 = vmatprep.subr.bf16.mxu0 0
        %3079 = vmatpush1.bf16.xpose.msra.mxu0 %v3062
        %3080 = vmatprep.subr.bf16.mxu0 0
        %3081 = vmatpush2.bf16.xpose.msra.mxu0 0
        %3082 = vmatprep.subr.bf16.mxu0 0
        %3083 = vmatpush2.bf16.xpose.msra.mxu0 0
        %3084 = vmatprep.subr.bf16.mxu0 0
        %3085 = vmatpush2.bf16.xpose.msra.mxu0 0
        %3086 = vmatprep.subr.bf16.mxu0 0
        %3087 = vmatpush2.bf16.xpose.msra.mxu0 0
        %3088 = vmatprep.subr.bf16.mxu0 0
        %3089 = vmatpush2.bf16.xpose.msra.mxu0 0
        %3090 = vmatprep.subr.bf16.mxu0 0
        %3091 = vmatpush2.bf16.xpose.msra.mxu0 0
        %3092 = vmatprep.subr.bf16.mxu0 0
        %3093 = vmatpush2.bf16.xpose.msra.mxu0 0
        %3094 = vmatprep.subr.bf16.mxu0 0
        %3095 = vmatpush2.bf16.xpose.msra.mxu0 0
        %3096 = vmatprep.mubr.bf16.mxu0 0
        %3097 = vmatmul.mubr.bf16.gmra.mxu0 %v3059
        %v3098 = vpop.f32.mrf.mxu0
        %v3099 = vadd.f32 %v2686, %v3098
        %v3100 = vpop.f32.mrf.mxu0
        %v3101 = vpop.f32.mrf.mxu0
        %v3102 = vadd.f32 %v2686, %v3101
        %v3103 = vpop.f32.mrf.mxu0
        %3104 = vdwg.mxu0
        %v3105 = vsel %vm747, %v3099, -inf
        %3106 = vmax.xlane.f32.xlu0 %v3105
        %v3107 = vpop.xlane.xlu0 %3106
        %v3108 = vsel %vm747, %v3102, -inf
        %3109 = vmax.xlane.f32.xlu0 %v3108
        %v3110 = vpop.xlane.xlu0 %3109
        %v3111 = vsub.f32 %v3099, %v3107
        %v3112 = vsub.f32 %v3102, %v3110
        %v3113 = vmul.f32 %v3111, 1.442695
        %v3114 = vpow.pop %v3113
        %v3115 = vmul.f32 %v3112, 1.442695
        %v3116 = vpow.pop %v3115
        %v3117 = vsel %vm747, %v3114, 0.0
        %3118 = vadd.xlane.f32.xlu0 %v3117
        %v3119 = vpop.xlane.xlu0 %3118
        %v3120 = vsel %vm747, %v3116, 0.0
        %3121 = vadd.xlane.f32.xlu0 %v3120
        %v3122 = vpop.xlane.xlu0 %3121
        %v3123 = vrcp.pop %v3119
        %v3124 = vmul.f32 %v3114, %v3123
        %v3125 = vrcp.pop %v3122
        %v3126 = vmul.f32 %v3116, %v3125
        %v3127 = vpack.c.bf16 %v3126, %v3124
        %3128 = vrot.lane.b32.xlu0 %v2759, 104
        %v3129 = vpop.permute.xlu0 %3128
        %v3131 = vsel %vm747, %v3127, 0
        %v3134 = vsel %vm2233, %v3129, 0
        %3136 = vmatprep.subr.bf16.mxu0 0
        %3137 = vmatpush1.bf16.msra.mxu0 0
        %3138 = vmatprep.subr.bf16.mxu0 0
        %3139 = vmatpush1.bf16.msra.mxu0 0
        %3140 = vmatprep.subr.bf16.mxu0 0
        %3141 = vmatpush1.bf16.msra.mxu0 0
        %3142 = vmatprep.subr.bf16.mxu0 0
        %3143 = vmatpush1.bf16.msra.mxu0 0
        %3144 = vmatprep.subr.bf16.mxu0 0
        %3145 = vmatpush1.bf16.msra.mxu0 0
        %3146 = vmatprep.subr.bf16.mxu0 0
        %3147 = vmatpush1.bf16.msra.mxu0 0
        %3148 = vmatprep.subr.bf16.mxu0 0
        %3149 = vmatpush1.bf16.msra.mxu0 0
        %3150 = vmatprep.subr.bf16.mxu0 0
        %3151 = vmatpush1.bf16.msra.mxu0 %v3134
        %3152 = vmatprep.subr.bf16.mxu0 0
        %3153 = vmatpush2.bf16.msra.mxu0 0
        %3154 = vmatprep.subr.bf16.mxu0 0
        %3155 = vmatpush2.bf16.msra.mxu0 0
        %3156 = vmatprep.subr.bf16.mxu0 0
        %3157 = vmatpush2.bf16.msra.mxu0 0
        %3158 = vmatprep.subr.bf16.mxu0 0
        %3159 = vmatpush2.bf16.msra.mxu0 0
        %3160 = vmatprep.subr.bf16.mxu0 0
        %3161 = vmatpush2.bf16.msra.mxu0 0
        %3162 = vmatprep.subr.bf16.mxu0 0
        %3163 = vmatpush2.bf16.msra.mxu0 0
        %3164 = vmatprep.subr.bf16.mxu0 0
        %3165 = vmatpush2.bf16.msra.mxu0 0
        %3166 = vmatprep.subr.bf16.mxu0 0
        %3167 = vmatpush2.bf16.msra.mxu0 0
        %3168 = vmatprep.mubr.bf16.mxu0 0
        %3169 = vmatmul.mubr.bf16.gmra.mxu0 %v3131
        %v3170 = vpop.f32.mrf.mxu0
        %v3171 = vadd.f32 0.0, %v3170
        %v3172 = vpop.f32.mrf.mxu0
        %v3173 = vpop.f32.mrf.mxu0
        %v3174 = vadd.f32 0.0, %v3173
        %v3175 = vpop.f32.mrf.mxu0
        %3176 = vdwg.mxu0
        %3179 = vrot.lane.b32.xlu0 %v2925, 8
        %v3180 = vpop.permute.xlu0 %3179
        %3181 = vrot.lane.b32.xlu0 %v2928, 8
        %v3182 = vpop.permute.xlu0 %3181
        %3187 = vrot.lane.b32.xlu0 %v3048, 16
        %v3188 = vpop.permute.xlu0 %3187
        %3189 = vrot.lane.b32.xlu0 %v3051, 16
        %v3190 = vpop.permute.xlu0 %3189
        %3195 = vrot.lane.b32.xlu0 %v3171, 24
        %v3196 = vpop.permute.xlu0 %3195
        %3197 = vrot.lane.b32.xlu0 %v3174, 24
        %v3198 = vpop.permute.xlu0 %3197
        %v3201 = vsel %vm747, %v2801, %v3180
        %v3202 = vsel %vm747, %v2804, %v3182
        %v3203 = vsel %vm795, %v3201, %v3188
        %v3204 = vsel %vm795, %v3202, %v3190
        %v3205 = vsel %vm1257, %v3203, %v3196
        %v3206 = vsel %vm1257, %v3204, %v3198
        %v3207 = vpack.c.bf16 %v2679, %v2678
        %v3208 = vpack.c.bf16 %v3206, %v3205
        %v3209 = vlaneseq
        %v3210 = vshrl.u32 %v3209, 7
        %v3211 = vsub.s32 7, %v3210
        %v3212 = vrot.slane %v493, %v3211
        %v3217 = vunpack.c.l.b16 %v1946
        %v3218 = vunpack.c.l.b16 %v1947
        %v3219 = vunpack.c.l.b16 %v1948
        %v3220 = vunpack.c.l.b16 %v1949
        %v3221 = vpack.c.b16 %v3218, %v3217
        %v3222 = vpack.c.b16 %v3220, %v3219
        %v3226 = vsel %vm536, %v3207, 0
        %v3229 = vsel %vm536, %v3208, 0
        %3231 = vmatprep.subr.bf16.mxu0 0
        %3232 = vmatpush1.bf16.msra.mxu0 0
        %3233 = vmatprep.subr.bf16.mxu0 0
        %3234 = vmatpush1.bf16.msra.mxu0 0
        %3235 = vmatprep.subr.bf16.mxu0 0
        %3236 = vmatpush1.bf16.msra.mxu0 0
        %3237 = vmatprep.subr.bf16.mxu0 0
        %3238 = vmatpush1.bf16.msra.mxu0 0
        %3239 = vmatprep.subr.bf16.mxu0 0
        %3240 = vmatpush1.bf16.msra.mxu0 0
        %3241 = vmatprep.subr.bf16.mxu0 0
        %3242 = vmatpush1.bf16.msra.mxu0 0
        %3243 = vmatprep.subr.bf16.mxu0 0
        %3244 = vmatpush1.bf16.msra.mxu0 %v3222
        %3245 = vmatprep.subr.bf16.mxu0 0
        %3246 = vmatpush1.bf16.msra.mxu0 %v3221
        %3247 = vmatprep.subr.bf16.mxu0 0
        %3248 = vmatpush2.bf16.msra.mxu0 0
        %3249 = vmatprep.subr.bf16.mxu0 0
        %3250 = vmatpush2.bf16.msra.mxu0 0
        %3251 = vmatprep.subr.bf16.mxu0 0
        %3252 = vmatpush2.bf16.msra.mxu0 0
        %3253 = vmatprep.subr.bf16.mxu0 0
        %3254 = vmatpush2.bf16.msra.mxu0 0
        %3255 = vmatprep.subr.bf16.mxu0 0
        %3256 = vmatpush2.bf16.msra.mxu0 0
        %3257 = vmatprep.subr.bf16.mxu0 0
        %3258 = vmatpush2.bf16.msra.mxu0 0
        %3259 = vmatprep.subr.bf16.mxu0 0
        %3260 = vmatpush2.bf16.msra.mxu0 0
        %3261 = vmatprep.subr.bf16.mxu0 0
        %3262 = vmatpush2.bf16.msra.mxu0 0
        %3263 = vmatprep.mubr.bf16.mxu0 0
        %3264 = vmatmul.mubr.bf16.gmra.mxu0 %v3226
        %v3265 = vpop.f32.mrf.mxu0
        %v3266 = vadd.f32 %v3212, %v3265
        %v3267 = vpop.f32.mrf.mxu0
        %v3268 = vpop.f32.mrf.mxu0
        %v3269 = vadd.f32 %v3212, %v3268
        %v3270 = vpop.f32.mrf.mxu0
        %3271 = vmatprep.mubr.bf16.mxu0 0
        %3272 = vmatmul.mubr.bf16.gmra.mxu0 %v3229
        %v3273 = vpop.f32.mrf.mxu0
        %v3274 = vadd.f32 %v3212, %v3273
        %v3275 = vpop.f32.mrf.mxu0
        %v3276 = vpop.f32.mrf.mxu0
        %v3277 = vadd.f32 %v3212, %v3276
        %v3278 = vpop.f32.mrf.mxu0
        %3279 = vdwg.mxu0
        %v3280 = vadd.f32 %v1920, %v3266
        %v3281 = vadd.f32 %v1921, %v3269
        %v3282 = vadd.f32 %v1922, %v3274
        %v3283 = vadd.f32 %v1923, %v3277
        %v3284 = vsel %vm536, %v3280, 0.0
        %3285 = vadd.xlane.f32.xlu0 %v3284
        %v3286 = vpop.xlane.xlu0 %3285
        %v3287 = vsel %vm536, %v3281, 0.0
        %3288 = vadd.xlane.f32.xlu0 %v3287
        %v3289 = vpop.xlane.xlu0 %3288
        %v3290 = vsel %vm536, %v3282, 0.0
        %3291 = vadd.xlane.f32.xlu0 %v3290
        %v3292 = vpop.xlane.xlu0 %3291
        %v3293 = vsel %vm536, %v3283, 0.0
        %3294 = vadd.xlane.f32.xlu0 %v3293
        %v3295 = vpop.xlane.xlu0 %3294
        %v3296 = vmul.f32 %v3286, %v1867
        %v3297 = vmul.f32 %v3289, %v1867
        %v3298 = vmul.f32 %v3292, %v1867
        %v3299 = vmul.f32 %v3295, %v1867
        %v3300 = vsub.f32 %v3280, %v3296
        %v3301 = vsub.f32 %v3281, %v3297
        %v3302 = vsub.f32 %v3282, %v3298
        %v3303 = vsub.f32 %v3283, %v3299
        %v3304 = vmul.f32 %v3300, %v3300
        %v3305 = vmul.f32 %v3301, %v3301
        %v3306 = vmul.f32 %v3302, %v3302
        %v3307 = vmul.f32 %v3303, %v3303
        %v3308 = vsel %vm536, %v3304, 0.0
        %3309 = vadd.xlane.f32.xlu0 %v3308
        %v3310 = vpop.xlane.xlu0 %3309
        %v3311 = vsel %vm536, %v3305, 0.0
        %3312 = vadd.xlane.f32.xlu0 %v3311
        %v3313 = vpop.xlane.xlu0 %3312
        %v3314 = vsel %vm536, %v3306, 0.0
        %3315 = vadd.xlane.f32.xlu0 %v3314
        %v3316 = vpop.xlane.xlu0 %3315
        %v3317 = vsel %vm536, %v3307, 0.0
        %3318 = vadd.xlane.f32.xlu0 %v3317
        %v3319 = vpop.xlane.xlu0 %3318
        %v3320 = vmul.f32 %v3310, %v1867
        %v3321 = vmul.f32 %v3313, %v1867
        %v3322 = vmul.f32 %v3316, %v1867
        %v3323 = vmul.f32 %v3319, %v1867
        %v3324 = vadd.f32 %v3320, 1e-05
        %v3325 = vadd.f32 %v3321, 1e-05
        %v3326 = vadd.f32 %v3322, 1e-05
        %v3327 = vadd.f32 %v3323, 1e-05
        %v3328 = vrsqrt.pop %v3324
        %v3329 = vrsqrt.pop %v3325
        %v3330 = vrsqrt.pop %v3326
        %v3331 = vrsqrt.pop %v3327
        %v3332 = vmul.f32 %v3300, %v3328
        %v3333 = vmul.f32 %v3301, %v3329
        %v3334 = vmul.f32 %v3302, %v3330
        %v3335 = vmul.f32 %v3303, %v3331
        %v3336 = vlaneseq
        %v3337 = vshrl.u32 %v3336, 7
        %v3338 = vsub.s32 2, %v3337
        %v3339 = vrot.slane %v494, %v3338
        %v3340 = vmul.f32 %v3332, %v3339
        %v3341 = vmul.f32 %v3333, %v3339
        %v3342 = vmul.f32 %v3334, %v3339
        %v3343 = vmul.f32 %v3335, %v3339
        %v3344 = vlaneseq
        %v3345 = vshrl.u32 %v3344, 7
        %v3346 = vsub.s32 3, %v3345
        %v3347 = vrot.slane %v494, %v3346
        %v3348 = vadd.f32 %v3340, %v3347
        %v3349 = vadd.f32 %v3341, %v3347
        %v3350 = vadd.f32 %v3342, %v3347
        %v3351 = vadd.f32 %v3343, %v3347
        %v3352 = vpack.c.bf16 %v3349, %v3348
        %v3353 = vpack.c.bf16 %v3351, %v3350
        %v3354 = vld [vmem:[%s458] sm:$0xf]
        %v3355 = vld [vmem:[%s458 + $0x4] sm:$0xf]
        %v3356 = vld [vmem:[%s458 + $0x8] sm:$0xf]
        %v3357 = vld [vmem:[%s458 + $0xc] sm:$0xf]
        %v3358 = vld [vmem:[%s461] sm:$0x1]
        %v3360 = vlaneseq
        %v3361 = vshrl.u32 %v3360, 7
        %v3362 = vsub.s32 0, %v3361
        %v3363 = vrot.slane %v3358, %v3362
        %v3369 = vunpack.c.l.b16 %v3354
        %v3370 = vunpack.c.l.b16 %v3355
        %v3371 = vunpack.c.l.b16 %v3356
        %v3372 = vunpack.c.l.b16 %v3357
        %v3373 = vpack.c.b16 %v3370, %v3369
        %v3374 = vpack.c.b16 %v3372, %v3371
        %v3378 = vsel %vm536, %v3352, 0
        %v3381 = vsel %vm536, %v3353, 0
        %3383 = vmatprep.subr.bf16.mxu0 0
        %3384 = vmatpush1.bf16.msra.mxu0 0
        %3385 = vmatprep.subr.bf16.mxu0 0
        %3386 = vmatpush1.bf16.msra.mxu0 0
        %3387 = vmatprep.subr.bf16.mxu0 0
        %3388 = vmatpush1.bf16.msra.mxu0 0
        %3389 = vmatprep.subr.bf16.mxu0 0
        %3390 = vmatpush1.bf16.msra.mxu0 0
        %3391 = vmatprep.subr.bf16.mxu0 0
        %3392 = vmatpush1.bf16.msra.mxu0 0
        %3393 = vmatprep.subr.bf16.mxu0 0
        %3394 = vmatpush1.bf16.msra.mxu0 0
        %3395 = vmatprep.subr.bf16.mxu0 0
        %3396 = vmatpush1.bf16.msra.mxu0 %v3374
        %3397 = vmatprep.subr.bf16.mxu0 0
        %3398 = vmatpush1.bf16.msra.mxu0 %v3373
        %3399 = vmatprep.subr.bf16.mxu0 0
        %3400 = vmatpush2.bf16.msra.mxu0 0
        %3401 = vmatprep.subr.bf16.mxu0 0
        %3402 = vmatpush2.bf16.msra.mxu0 0
        %3403 = vmatprep.subr.bf16.mxu0 0
        %3404 = vmatpush2.bf16.msra.mxu0 0
        %3405 = vmatprep.subr.bf16.mxu0 0
        %3406 = vmatpush2.bf16.msra.mxu0 0
        %3407 = vmatprep.subr.bf16.mxu0 0
        %3408 = vmatpush2.bf16.msra.mxu0 0
        %3409 = vmatprep.subr.bf16.mxu0 0
        %3410 = vmatpush2.bf16.msra.mxu0 0
        %3411 = vmatprep.subr.bf16.mxu0 0
        %3412 = vmatpush2.bf16.msra.mxu0 0
        %3413 = vmatprep.subr.bf16.mxu0 0
        %3414 = vmatpush2.bf16.msra.mxu0 0
        %3415 = vmatprep.mubr.bf16.mxu0 0
        %3416 = vmatmul.mubr.bf16.gmra.mxu0 %v3378
        %v3417 = vpop.f32.mrf.mxu0
        %v3418 = vadd.f32 %v3363, %v3417
        %v3419 = vpop.f32.mrf.mxu0
        %v3420 = vpop.f32.mrf.mxu0
        %v3421 = vadd.f32 %v3363, %v3420
        %v3422 = vpop.f32.mrf.mxu0
        %3423 = vmatprep.mubr.bf16.mxu0 0
        %3424 = vmatmul.mubr.bf16.gmra.mxu0 %v3381
        %v3425 = vpop.f32.mrf.mxu0
        %v3426 = vadd.f32 %v3363, %v3425
        %v3427 = vpop.f32.mrf.mxu0
        %v3428 = vpop.f32.mrf.mxu0
        %v3429 = vadd.f32 %v3363, %v3428
        %v3430 = vpop.f32.mrf.mxu0
        %3431 = vdwg.mxu0
        %v3432 = vmax.f32 %v3418, 0.0
        %v3433 = vmax.f32 %v3421, 0.0
        %v3434 = vmax.f32 %v3426, 0.0
        %v3435 = vmax.f32 %v3429, 0.0
        %v3436 = vpack.c.bf16 %v3433, %v3432
        %v3437 = vpack.c.bf16 %v3435, %v3434
        %v3438 = vld [vmem:[%s466] sm:$0xf]
        %v3439 = vld [vmem:[%s466 + $0x4] sm:$0xf]
        %v3440 = vld [vmem:[%s466 + $0x8] sm:$0xf]
        %v3441 = vld [vmem:[%s466 + $0xc] sm:$0xf]
        %v3442 = vld [vmem:[%s466 + $0x10] sm:$0xf]
        %v3443 = vld [vmem:[%s466 + $0x14] sm:$0xf]
        %v3444 = vld [vmem:[%s466 + $0x18] sm:$0xf]
        %v3445 = vld [vmem:[%s466 + $0x1c] sm:$0xf]
        %v3446 = vlaneseq
        %v3447 = vshrl.u32 %v3446, 7
        %v3448 = vsub.s32 6, %v3447
        %v3449 = vrot.slane %v494, %v3448
        %v3458 = vunpack.c.l.b16 %v3438
        %v3459 = vunpack.c.l.b16 %v3439
        %v3460 = vunpack.c.l.b16 %v3440
        %v3461 = vunpack.c.l.b16 %v3441
        %v3462 = vunpack.c.l.b16 %v3442
        %v3463 = vunpack.c.l.b16 %v3443
        %v3464 = vunpack.c.l.b16 %v3444
        %v3465 = vunpack.c.l.b16 %v3445
        %v3466 = vpack.c.b16 %v3459, %v3458
        %v3467 = vpack.c.b16 %v3461, %v3460
        %v3468 = vpack.c.b16 %v3463, %v3462
        %v3469 = vpack.c.b16 %v3465, %v3464
        %vm3474 = vcmask 523264
        %v3476 = vsel %vm3474, %v3436, 0
        %v3479 = vsel %vm3474, %v3437, 0
        %3481 = vmatprep.subr.bf16.mxu0 0
        %3482 = vmatpush1.bf16.msra.mxu0 0
        %3483 = vmatprep.subr.bf16.mxu0 0
        %3484 = vmatpush1.bf16.msra.mxu0 0
        %3485 = vmatprep.subr.bf16.mxu0 0
        %3486 = vmatpush1.bf16.msra.mxu0 0
        %3487 = vmatprep.subr.bf16.mxu0 0
        %3488 = vmatpush1.bf16.msra.mxu0 0
        %3489 = vmatprep.subr.bf16.mxu0 0
        %3490 = vmatpush1.bf16.msra.mxu0 %v3469
        %3491 = vmatprep.subr.bf16.mxu0 0
        %3492 = vmatpush1.bf16.msra.mxu0 %v3468
        %3493 = vmatprep.subr.bf16.mxu0 0
        %3494 = vmatpush1.bf16.msra.mxu0 %v3467
        %3495 = vmatprep.subr.bf16.mxu0 0
        %3496 = vmatpush1.bf16.msra.mxu0 %v3466
        %3497 = vmatprep.subr.bf16.mxu0 0
        %3498 = vmatpush2.bf16.msra.mxu0 0
        %3499 = vmatprep.subr.bf16.mxu0 0
        %3500 = vmatpush2.bf16.msra.mxu0 0
        %3501 = vmatprep.subr.bf16.mxu0 0
        %3502 = vmatpush2.bf16.msra.mxu0 0
        %3503 = vmatprep.subr.bf16.mxu0 0
        %3504 = vmatpush2.bf16.msra.mxu0 0
        %3505 = vmatprep.subr.bf16.mxu0 0
        %3506 = vmatpush2.bf16.msra.mxu0 0
        %3507 = vmatprep.subr.bf16.mxu0 0
        %3508 = vmatpush2.bf16.msra.mxu0 0
        %3509 = vmatprep.subr.bf16.mxu0 0
        %3510 = vmatpush2.bf16.msra.mxu0 0
        %3511 = vmatprep.subr.bf16.mxu0 0
        %3512 = vmatpush2.bf16.msra.mxu0 0
        %3513 = vmatprep.mubr.bf16.mxu0 0
        %3514 = vmatmul.mubr.bf16.gmra.mxu0 %v3476
        %v3515 = vpop.f32.mrf.mxu0
        %v3516 = vadd.f32 %v3449, %v3515
        %v3517 = vpop.f32.mrf.mxu0
        %v3518 = vpop.f32.mrf.mxu0
        %v3519 = vadd.f32 %v3449, %v3518
        %v3520 = vpop.f32.mrf.mxu0
        %3521 = vmatprep.mubr.bf16.mxu0 0
        %3522 = vmatmul.mubr.bf16.gmra.mxu0 %v3479
        %v3523 = vpop.f32.mrf.mxu0
        %v3524 = vadd.f32 %v3449, %v3523
        %v3525 = vpop.f32.mrf.mxu0
        %v3526 = vpop.f32.mrf.mxu0
        %v3527 = vadd.f32 %v3449, %v3526
        %v3528 = vpop.f32.mrf.mxu0
        %3529 = vdwg.mxu0
        %v3530 = vadd.f32 %v3348, %v3516
        %v3531 = vadd.f32 %v3349, %v3519
        %v3532 = vadd.f32 %v3350, %v3524
        %v3533 = vadd.f32 %v3351, %v3527
        %v3534 = vsel %vm536, %v3530, 0.0
        %3535 = vadd.xlane.f32.xlu0 %v3534
        %v3536 = vpop.xlane.xlu0 %3535
        %v3537 = vsel %vm536, %v3531, 0.0
        %3538 = vadd.xlane.f32.xlu0 %v3537
        %v3539 = vpop.xlane.xlu0 %3538
        %v3540 = vsel %vm536, %v3532, 0.0
        %3541 = vadd.xlane.f32.xlu0 %v3540
        %v3542 = vpop.xlane.xlu0 %3541
        %v3543 = vsel %vm536, %v3533, 0.0
        %3544 = vadd.xlane.f32.xlu0 %v3543
        %v3545 = vpop.xlane.xlu0 %3544
        %v3546 = vmul.f32 %v3536, %v1867
        %v3547 = vmul.f32 %v3539, %v1867
        %v3548 = vmul.f32 %v3542, %v1867
        %v3549 = vmul.f32 %v3545, %v1867
        %v3550 = vsub.f32 %v3530, %v3546
        %v3551 = vsub.f32 %v3531, %v3547
        %v3552 = vsub.f32 %v3532, %v3548
        %v3553 = vsub.f32 %v3533, %v3549
        %v3554 = vmul.f32 %v3550, %v3550
        %v3555 = vmul.f32 %v3551, %v3551
        %v3556 = vmul.f32 %v3552, %v3552
        %v3557 = vmul.f32 %v3553, %v3553
        %v3558 = vsel %vm536, %v3554, 0.0
        %3559 = vadd.xlane.f32.xlu0 %v3558
        %v3560 = vpop.xlane.xlu0 %3559
        %v3561 = vsel %vm536, %v3555, 0.0
        %3562 = vadd.xlane.f32.xlu0 %v3561
        %v3563 = vpop.xlane.xlu0 %3562
        %v3564 = vsel %vm536, %v3556, 0.0
        %3565 = vadd.xlane.f32.xlu0 %v3564
        %v3566 = vpop.xlane.xlu0 %3565
        %v3567 = vsel %vm536, %v3557, 0.0
        %3568 = vadd.xlane.f32.xlu0 %v3567
        %v3569 = vpop.xlane.xlu0 %3568
        %v3570 = vmul.f32 %v3560, %v1867
        %v3571 = vmul.f32 %v3563, %v1867
        %v3572 = vmul.f32 %v3566, %v1867
        %v3573 = vmul.f32 %v3569, %v1867
        %v3574 = vadd.f32 %v3570, 1e-05
        %v3575 = vadd.f32 %v3571, 1e-05
        %v3576 = vadd.f32 %v3572, 1e-05
        %v3577 = vadd.f32 %v3573, 1e-05
        %v3578 = vrsqrt.pop %v3574
        %v3579 = vrsqrt.pop %v3575
        %v3580 = vrsqrt.pop %v3576
        %v3581 = vrsqrt.pop %v3577
        %v3582 = vmul.f32 %v3550, %v3578
        %v3583 = vmul.f32 %v3551, %v3579
        %v3584 = vmul.f32 %v3552, %v3580
        %v3585 = vmul.f32 %v3553, %v3581
        %v3586 = vlaneseq
        %v3587 = vshrl.u32 %v3586, 7
        %v3588 = vsub.s32 4, %v3587
        %v3589 = vrot.slane %v494, %v3588
        %v3590 = vmul.f32 %v3582, %v3589
        %v3591 = vmul.f32 %v3583, %v3589
        %v3592 = vmul.f32 %v3584, %v3589
        %v3593 = vmul.f32 %v3585, %v3589
        %v3594 = vlaneseq
        %v3595 = vshrl.u32 %v3594, 7
        %v3596 = vsub.s32 5, %v3595
        %v3597 = vrot.slane %v494, %v3596
        %v3598 = vadd.f32 %v3590, %v3597
        %v3599 = vadd.f32 %v3591, %v3597
        %v3600 = vadd.f32 %v3592, %v3597
        %v3601 = vadd.f32 %v3593, %v3597
        %3602 = vst.msk [vmem:[#allocation2] sm:$0xff] %vm536, %v3598
        %3603 = vst.msk [vmem:[#allocation2 + $0x8] sm:$0xff] %vm536, %v3599
        %3604 = vst.msk [vmem:[#allocation2 + $0x10] sm:$0xff] %vm536, %v3600
        %3605 = vst.msk [vmem:[#allocation2 + $0x18] sm:$0xff] %vm536, %v3601
        %3606 = vst.msk [vmem:[#allocation6] sm:$0xff] %vm536, %v3598
        %3607 = vst.msk [vmem:[#allocation6 + $0x8] sm:$0xff] %vm536, %v3599
        %3608 = vst.msk [vmem:[#allocation6 + $0x10] sm:$0xff] %vm536, %v3600
        %3609 = vst.msk [vmem:[#allocation6 + $0x18] sm:$0xff] %vm536, %v3601
        // Predicated region
        $region73: #{global_encoder_forward.1} parent=63 // pred_check
          %p3610 = pneg %p295
        $region74: #{global_encoder_forward.1} parent=63 // pred_check_branch
          %3612 = sbr.rel (%p3610) target = $region76
        $region75: #{global_encoder_forward.1} parent=63 // pred_region
          %s3614 = ssub.s32 512, 512
          %3615 = vsyncadd [#allocation5], %s3614
          %s3616 = sshll.u32 [#allocation6], 4
          %s3617 = int_to_ptr.vmem [resolvable:$true] %s3616
          %3622 = dma.vmem_to_hbm [thread:$0]  %s3617, 512, %s11, [#allocation5], 128, 128, 8
        $region76: #{global_encoder_forward.1} parent=63 // pred_fallthru
          _
        // Predicated region
        $region77: #{global_encoder_forward.1} parent=63 // pred_check
          %p3623 = pneg %p295
        $region78: #{global_encoder_forward.1} parent=63 // pred_check_branch
          %3625 = sbr.rel (%p3623) target = $region80
        $region79: #{global_encoder_forward.1} parent=63 // pred_region
          %3626 = dma.done [#allocation5], 512
        $region80: #{global_encoder_forward.1} parent=63 // pred_fallthru
          _
      $region64: #{global_encoder_forward.1} parent=5 // pred_fallthru
        _
      %p3627 = scmp.le.s32.totalorder 2, %s21
      // Predicated region
      $region81: #{global_encoder_forward.1} parent=5 // pred_check
        %p3628 = pneg %p3627
      $region82: #{global_encoder_forward.1} parent=5 // pred_check_branch
        %3630 = sbr.rel (%p3628) target = $region84
      $region83: #{global_encoder_forward.1} parent=5 // pred_region
        %s3631 = ssub.s32 %s21, 2
      $region84: #{global_encoder_forward.1} parent=5 // pred_fallthru
        _
    $region6: #{global_encoder_forward.1} parent=1 // loop_footer
      %s25 = sadd.s32 1, %s21
    $region7: #{global_encoder_forward.1} parent=1 // loop_footer_branch
      %20 = sbr.rel target = $region3
    $region8: #{global_encoder_forward.1} parent=1 // loop_exit
      _
    %3632 = vsyncpa [#allocation4], 1
    %s3633 = scalar_lea.sflag [#allocation4], 1
    %3634 = vsyncpa %s3633, 1
    %3635 = vsyncpa [#allocation5], 1
    %s3636 = scalar_lea.sflag [#allocation5], 1
    %3637 = vsyncpa %s3636, 1

</llo_original>
